<compile_context>
chip_gen: v5e
topology: v5e:2x2
jax: 0.10.0
libtpu: 0.0.40
codegen_flags: <defaults>
</compile_context>

<pallas_src>
import functools

import jax
import jax.numpy as jnp
from jax import lax
from jax.experimental import pallas as pl
from jax.experimental.pallas import tpu as pltpu


_VMEM_LIMIT = 32 * 1024 * 1024   # safe scoped limit on v5e/v6e/v7x
_SCAN_CHUNK = 8                  # timesteps per scan chunk (aligned (8,128) stores)


# ---------------------------------------------------------------------------
# small in-kernel helpers
# ---------------------------------------------------------------------------

def _softplus(y):
    # numerically stable softplus (matches F.softplus, beta=1)
    return jnp.maximum(y, 0.0) + jnp.log1p(jnp.exp(-jnp.abs(y)))


def _layernorm(x, g, b, eps=1e-5):
    mean = jnp.mean(x, axis=-1, keepdims=True)
    var = jnp.mean((x - mean) ** 2, axis=-1, keepdims=True)
    return (x - mean) * lax.rsqrt(var + eps) * g + b


# ---------------------------------------------------------------------------
# fused Mamba pair kernel (LN1 + in_proj + conv + ssm_proj + scan + out_proj)
# ---------------------------------------------------------------------------

def _mamba_pair_kernel(x_ref, g_ref, bta_ref, inw_ref, inb_ref,
                       convw_ref, convb_ref, dw_ref, db_ref, bwT_ref, bbT_ref,
                       A2_ref, Dv_ref, outw_ref, outb_ref, o_ref,
                       u_scr, dl_scr, y_scr, *, n_ssm):
    # TODO(synk): tile the L axis (state (2n,C) carried across an 'arbitrary'
    # grid dim, 1-row conv halo) for sequences too long for a single VMEM block.
    L = x_ref.shape[1]
    C = inw_ref.shape[1]            # 2 * d_inner, branch-concatenated, lane-dense
    n2 = 2 * n_ssm

    # ---- LayerNorm(norm1) + in_proj of both branches (one matmul) ----
    x = _layernorm(x_ref[0].astype(jnp.float32), g_ref[...], bta_ref[...])
    h = jnp.dot(x.astype(jnp.bfloat16), inw_ref[...],
                preferred_element_type=jnp.float32) + inb_ref[...]

    # ---- depthwise conv1d (k=3, symmetric pad=1) + SiLU ----
    w = convw_ref[...]
    row = lax.broadcasted_iota(jnp.int32, (L, C), 0)
    h_prev = jnp.where(row == 0, 0.0, pltpu.roll(h, 1, 0))          # x[t-1]
    h_next = jnp.where(row == L - 1, 0.0, pltpu.roll(h, L - 1, 0))  # x[t+1]
    u = h_prev * w[0:1] + h * w[1:2] + h_next * w[2:3] + convb_ref[...]
    u = u * jax.nn.sigmoid(u)
    u_scr[...] = u

    # ---- folded x_proj[:, :dt_rank] @ dt_proj (+softplus) -> delta ----
    dl_scr[...] = _softplus(
        jnp.dot(u.astype(jnp.bfloat16), dw_ref[...],
                preferred_element_type=jnp.float32) + db_ref[...])

    # ---- two-branch selective scan (state (2n, C), cross-branch blocks masked) ----
    A2 = A2_ref[...]                                                 # (2n, C)
    Dv = Dv_ref[...]                                                 # (1, C)
    bwT = bwT_ref[...]                                               # (2n, C) bf16
    bbT = bbT_ref[...]                                               # (2n, 1) f32
    srow = lax.broadcasted_iota(jnp.int32, (n2, C), 0)
    scol = lax.broadcasted_iota(jnp.int32, (n2, C), 1)
    same_branch = (srow < n_ssm) == (scol < C // 2)

    def chunk(ci, state):
        base = pl.multiple_of(ci * _SCAN_CHUNK, _SCAN_CHUNK)
        dl_c = dl_scr[pl.ds(base, _SCAN_CHUNK), :]                   # (8, C)
        u_c = u_scr[pl.ds(base, _SCAN_CHUNK), :]                     # (8, C)
        # B for the whole chunk, produced already transposed: (2n, 8).
        bmT_c = lax.dot_general(bwT, u_c.astype(jnp.bfloat16),
                                (((1,), (1,)), ((), ())),
                                preferred_element_type=jnp.float32) + bbT
        rows = []
        for j in range(_SCAN_CHUNK):                                 # static unroll
            dl_j = dl_c[j:j + 1, :]                                  # (1, C)
            du_j = dl_j * u_c[j:j + 1, :]                            # (1, C)
            bcol = bmT_c[:, j:j + 1]                                 # (2n, 1), static
            dA = jnp.exp(dl_j * A2)                                  # (2n, C), EUP
            state = dA * state + jnp.where(same_branch, du_j * bcol, 0.0)
            rows.append(jnp.sum(state, axis=0, keepdims=True))       # (1, C)
        # one unmasked (8, 128)-aligned VMEM store per chunk
        y_scr[pl.ds(base, _SCAN_CHUNK), :] = jnp.concatenate(rows, axis=0)
        return state

    lax.fori_loop(0, L // _SCAN_CHUNK, chunk, jnp.zeros((n2, C), jnp.float32))

    # ---- y = scan + u*D ; fused out_proj of both branches (x0.5 folded in) ----
    y = y_scr[...] + u_scr[...] * Dv
    out = jnp.dot(y.astype(jnp.bfloat16), outw_ref[...],
                  preferred_element_type=jnp.float32) + outb_ref[...]
    o_ref[0] = out.astype(o_ref.dtype)


def mamba_pair_pallas(x, mp, ln_g, ln_b, n_ssm):
    B, L, Dm = x.shape
    C = mp["in_w"].shape[1]
    # TODO(synk): pad / remainder chunk for L not divisible by the scan chunk.
    assert L % _SCAN_CHUNK == 0

    def rep(a):
        return pl.BlockSpec(a.shape, lambda i: (0, 0))

    return pl.pallas_call(
        functools.partial(_mamba_pair_kernel, n_ssm=n_ssm),
        grid=(B,),
        in_specs=[pl.BlockSpec((1, L, Dm), lambda i: (i, 0, 0)),
                  rep(ln_g), rep(ln_b),
                  rep(mp["in_w"]), rep(mp["in_b"]),
                  rep(mp["conv_w"]), rep(mp["conv_b"]),
                  rep(mp["dw"]), rep(mp["db"]),
                  rep(mp["bwT"]), rep(mp["bbT"]),
                  rep(mp["A2"]), rep(mp["Dvec"]),
                  rep(mp["out_w"]), rep(mp["out_b"])],
        out_specs=pl.BlockSpec((1, L, Dm), lambda i: (i, 0, 0)),
        out_shape=jax.ShapeDtypeStruct((B, L, Dm), jnp.bfloat16),
        scratch_shapes=[pltpu.VMEM((L, C), jnp.float32),   # u (conv+silu)
                        pltpu.VMEM((L, C), jnp.float32),   # delta
                        pltpu.VMEM((L, C), jnp.float32)],  # y
        compiler_params=pltpu.CompilerParams(
            dimension_semantics=("parallel",),
            vmem_limit_bytes=_VMEM_LIMIT),
    )(x, ln_g, ln_b, mp["in_w"], mp["in_b"], mp["conv_w"], mp["conv_b"],
      mp["dw"], mp["db"], mp["bwT"], mp["bbT"], mp["A2"], mp["Dvec"],
      mp["out_w"], mp["out_b"])


# ---------------------------------------------------------------------------
# fused attention kernel (LN2 + QKV + MHA + out_proj + residual)
# ---------------------------------------------------------------------------

def _attn_block_kernel(x_ref, g_ref, bta_ref, wqkv_ref, bqkv_ref,
                       wo_ref, bo_ref, o_ref, *, n_heads, d_k):
    # TODO(synk): flash-style L tiling of the query axis for long sequences.
    x_mid = x_ref[0].astype(jnp.float32)                             # (L, Dm)
    xn = _layernorm(x_mid, g_ref[...], bta_ref[...])
    qkv = jnp.dot(xn.astype(jnp.bfloat16), wqkv_ref[...],
                  preferred_element_type=jnp.float32) + bqkv_ref[...]
    D = x_mid.shape[1]
    q_all = qkv[:, :D]                                               # weights pre-permuted
    k_all = qkv[:, D:2 * D]                                          # to [Q | K | V]
    v_all = qkv[:, 2 * D:]
    scale = 1.0 / (d_k ** 0.5)
    heads = []
    for h in range(n_heads):                                         # static head loop
        sl = slice(h * d_k, (h + 1) * d_k)
        q = q_all[:, sl].astype(jnp.bfloat16)
        k = k_all[:, sl].astype(jnp.bfloat16)
        v = v_all[:, sl].astype(jnp.bfloat16)
        s = lax.dot_general(q, k, (((1,), (1,)), ((), ())),
                            preferred_element_type=jnp.float32) * scale
        s = s - jnp.max(s, axis=-1, keepdims=True)
        p = jnp.exp(s)
        p = p / jnp.sum(p, axis=-1, keepdims=True)                   # exact division
        heads.append(jnp.dot(p.astype(jnp.bfloat16), v,
                             preferred_element_type=jnp.float32))
    attn = jnp.concatenate(heads, axis=-1)                           # (L, Dm)
    y = jnp.dot(attn.astype(jnp.bfloat16), wo_ref[...],
                preferred_element_type=jnp.float32) + bo_ref[...]
    o_ref[0] = (y + x_mid).astype(o_ref.dtype)                       # fused residual


def attention_block_pallas(x_mid, lp, n_heads):
    B, L, Dm = x_mid.shape
    d_k = Dm // n_heads

    def rep(a):
        return pl.BlockSpec(a.shape, lambda i: (0, 0))

    return pl.pallas_call(
        functools.partial(_attn_block_kernel, n_heads=n_heads, d_k=d_k),
        grid=(B,),
        in_specs=[pl.BlockSpec((1, L, Dm), lambda i: (i, 0, 0)),
                  rep(lp["norm2_g"]), rep(lp["norm2_b"]),
                  rep(lp["qkv_w"]), rep(lp["qkv_b"]),
                  rep(lp["ao_w"]), rep(lp["ao_b"])],
        out_specs=pl.BlockSpec((1, L, Dm), lambda i: (i, 0, 0)),
        out_shape=jax.ShapeDtypeStruct((B, L, Dm), jnp.bfloat16),
        compiler_params=pltpu.CompilerParams(
            dimension_semantics=("parallel",),
            vmem_limit_bytes=_VMEM_LIMIT),
    )(x_mid, lp["norm2_g"], lp["norm2_b"], lp["qkv_w"], lp["qkv_b"],
      lp["ao_w"], lp["ao_b"])


# ---------------------------------------------------------------------------
# fused final LayerNorm -> mean over L -> output projection
# ---------------------------------------------------------------------------

def _final_kernel(x_ref, g_ref, bta_ref, w_ref, b_ref, o_ref):
    x = _layernorm(x_ref[...].astype(jnp.float32), g_ref[...], bta_ref[...])
    xm = jnp.mean(x, axis=1)                                         # (B, Dm)
    o_ref[...] = jnp.dot(xm.astype(jnp.bfloat16), w_ref[...],
                         preferred_element_type=jnp.float32) + b_ref[...]


def final_pool_proj_pallas(x, g, b, w, bias):
    B, _, _ = x.shape
    N = w.shape[1]
    return pl.pallas_call(
        _final_kernel,
        out_shape=jax.ShapeDtypeStruct((B, N), jnp.float32),
        compiler_params=pltpu.CompilerParams(vmem_limit_bytes=_VMEM_LIMIT),
    )(x, g, b, w, bias)


# ---------------------------------------------------------------------------
# module forward (thin JAX glue around the three kernels)
# ---------------------------------------------------------------------------

def residual_block_forward(lp, x, n_heads, n_ssm):
    x_mid = mamba_pair_pallas(x, lp["mamba"], lp["norm1_g"], lp["norm1_b"], n_ssm)
    return attention_block_pallas(x_mid, lp, n_heads)


def sequence_embedding_forward(fparams, input_ids, n_heads, n_ssm):
    # TODO(synk): embedding gather kept as an XLA take (no clean tiled Pallas gather).
    x = fparams["embedding"][input_ids]                              # (B, L, Dm) bf16
    for lp in fparams["layers"]:
        x = residual_block_forward(lp, x, n_heads, n_ssm)
    return final_pool_proj_pallas(x, fparams["normf_g"], fparams["normf_b"],
                                  fparams["out_w"], fparams["out_b"])


# ---------------------------------------------------------------------------
# deterministic raw init (PyTorch-like layout) + one-time fusion prep
# ---------------------------------------------------------------------------

def init_params(key, d_model, d_inner, n_ssm, dt_rank, vocab_size, n_layer,
                n_heads, output_dim):
    counter = [0]

    def nxt():
        counter[0] += 1
        return jax.random.fold_in(key, counter[0])

    def nrm(shape, scale=0.05):
        return jax.random.normal(nxt(), shape, jnp.float32) * scale

    def linear(in_f, out_f):
        # stored (in, out) so kernels compute x @ W + b
        return nrm((in_f, out_f)), nrm((out_f,))

    def init_mamba():
        in_w, in_b = linear(d_model, d_inner)
        xproj_w, xproj_b = linear(d_inner, dt_rank + n_ssm)
        dt_w, dt_b = linear(dt_rank, d_inner)
        out_w, out_b = linear(d_inner, d_model)
        return dict(in_w=in_w, in_b=in_b,
                    conv_w=nrm((3, d_inner)), conv_b=nrm((d_inner,)),
                    xproj_w=xproj_w, xproj_b=xproj_b,
                    dt_w=dt_w, dt_b=dt_b,
                    out_w=out_w, out_b=out_b,
                    A_log=nrm((d_inner, n_ssm), 0.5),
                    D=nrm((d_inner,), 0.5))

    def init_attn():
        qkv_w, qkv_b = linear(d_model, 3 * d_model)
        ao_w, ao_b = linear(d_model, d_model)
        return dict(qkv_w=qkv_w, qkv_b=qkv_b, ao_w=ao_w, ao_b=ao_b)

    layers = []
    for _ in range(n_layer):
        layers.append(dict(
            mamba0=init_mamba(), mamba1=init_mamba(), attn=init_attn(),
            norm1_g=jnp.ones((d_model,), jnp.float32),
            norm1_b=jnp.zeros((d_model,), jnp.float32),
            norm2_g=jnp.ones((d_model,), jnp.float32),
            norm2_b=jnp.zeros((d_model,), jnp.float32)))

    out_w, out_b = linear(d_model, output_dim)
    return dict(embedding=nrm((vocab_size, d_model), 0.1), layers=layers,
                normf_g=jnp.ones((d_model,), jnp.float32),
                normf_b=jnp.zeros((d_model,), jnp.float32),
                out_w=out_w, out_b=out_b)


def prepare_params(raw, n_ssm, dt_rank, n_heads):
    """One-time (outside jit) weight fusion:
       - concat the two Mamba branches along channels (lane-dense 2*d_inner),
       - fold dt_proj into x_proj (block-diagonal per branch),
       - store the B projection pre-transposed (2n, C) so the scan gets (2n, chunk)
         B tiles straight from the MXU (no per-step lane->sublane shuffles),
       - fold the /2 branch-average into out_proj,
       - column-permute the QKV weight to [Q | K | V] (matches torch's per-head view),
       - pre-cast matmul weights + embedding/activations to bf16."""

    def prep_mamba_pair(m0, m1):
        di = m0["in_w"].shape[1]
        n = n_ssm
        in_w = jnp.concatenate([m0["in_w"], m1["in_w"]], axis=1)
        in_b = jnp.concatenate([m0["in_b"], m1["in_b"]], axis=0)
        conv_w = jnp.concatenate([m0["conv_w"], m1["conv_w"]], axis=1)
        conv_b = jnp.concatenate([m0["conv_b"], m1["conv_b"]], axis=0)

        def dt_fold(m):
            wd = m["xproj_w"][:, :dt_rank] @ m["dt_w"]               # (di, di)
            bd = m["xproj_b"][:dt_rank] @ m["dt_w"] + m["dt_b"]      # (di,)
            return wd, bd

        wd0, bd0 = dt_fold(m0)
        wd1, bd1 = dt_fold(m1)
        dw = jnp.zeros((2 * di, 2 * di), jnp.float32)
        dw = dw.at[:di, :di].set(wd0).at[di:, di:].set(wd1)
        db = jnp.concatenate([bd0, bd1], axis=0)

        bwT = jnp.zeros((2 * n, 2 * di), jnp.float32)                # B proj, transposed
        bwT = bwT.at[:n, :di].set(m0["xproj_w"][:, dt_rank:].T)
        bwT = bwT.at[n:, di:].set(m1["xproj_w"][:, dt_rank:].T)
        bbT = jnp.concatenate([m0["xproj_b"][dt_rank:],
                               m1["xproj_b"][dt_rank:]], axis=0).reshape(2 * n, 1)

        a0 = -jnp.exp(m0["A_log"].astype(jnp.float32))               # (di, n)
        a1 = -jnp.exp(m1["A_log"].astype(jnp.float32))
        a_t = jnp.concatenate([a0.T, a1.T], axis=1)                  # (n, 2di)
        A2 = jnp.concatenate([a_t, a_t], axis=0)                     # (2n, 2di)
        Dvec = jnp.concatenate([m0["D"], m1["D"]], axis=0)

        out_w = jnp.concatenate([m0["out_w"], m1["out_w"]], axis=0) * 0.5
        out_b = (m0["out_b"] + m1["out_b"]) * 0.5
        return dict(in_w=in_w.astype(jnp.bfloat16), in_b=in_b.reshape(1, -1),
                    conv_w=conv_w, conv_b=conv_b.reshape(1, -1),
                    dw=dw.astype(jnp.bfloat16), db=db.reshape(1, -1),
                    bwT=bwT.astype(jnp.bfloat16), bbT=bbT,
                    A2=A2, Dvec=Dvec.reshape(1, -1),
                    out_w=out_w.astype(jnp.bfloat16), out_b=out_b.reshape(1, -1))

    def qkv_perm(d_model):
        d_k = d_model // n_heads
        perm = [h * 3 * d_k + part * d_k + f
                for part in range(3) for h in range(n_heads) for f in range(d_k)]
        return jnp.array(perm, jnp.int32)

    layers = []
    for lp in raw["layers"]:
        d_model = lp["attn"]["qkv_w"].shape[0]
        perm = qkv_perm(d_model)
        layers.append(dict(
            mamba=prep_mamba_pair(lp["mamba0"], lp["mamba1"]),
            qkv_w=lp["attn"]["qkv_w"][:, perm].astype(jnp.bfloat16),
            qkv_b=lp["attn"]["qkv_b"][perm].reshape(1, -1),
            ao_w=lp["attn"]["ao_w"].astype(jnp.bfloat16),
            ao_b=lp["attn"]["ao_b"].reshape(1, -1),
            norm1_g=lp["norm1_g"].reshape(1, -1), norm1_b=lp["norm1_b"].reshape(1, -1),
            norm2_g=lp["norm2_g"].reshape(1, -1), norm2_b=lp["norm2_b"].reshape(1, -1)))
    return dict(embedding=raw["embedding"].astype(jnp.bfloat16), layers=layers,
                normf_g=raw["normf_g"].reshape(1, -1),
                normf_b=raw["normf_b"].reshape(1, -1),
                out_w=raw["out_w"].astype(jnp.bfloat16),
                out_b=raw["out_b"].reshape(1, -1))


# ---------------------------------------------------------------------------
# main
# ---------------------------------------------------------------------------

if __name__ == "__main__":
    d_model, d_inner, n_ssm, dt_rank = 32, 64, 8, 4
    vocab_size, n_layer, n_heads, output_dim = 50, 2, 4, 32
    batch, seq_len = 2, 8

    key = jax.random.PRNGKey(0)
    pkey, dkey = jax.random.split(key)

    raw_params = init_params(pkey, d_model, d_inner, n_ssm, dt_rank,
                             vocab_size, n_layer, n_heads, output_dim)
    fparams = prepare_params(raw_params, n_ssm, dt_rank, n_heads)
    input_ids = jax.random.randint(dkey, (batch, seq_len), 0, vocab_size, jnp.int32)

    fwd = jax.jit(functools.partial(sequence_embedding_forward,
                                    n_heads=n_heads, n_ssm=n_ssm))
    out = fwd(fparams, input_ids)
    out = jax.block_until_ready(out)

    assert out.shape == (batch, output_dim), out.shape
    assert bool(jnp.all(jnp.isfinite(out)))
    print("KERNEL_OK")
</pallas_src>

<mosaic_0001>
module attributes {stable_mosaic.version = 11 : i64} {
  func.func @_attn_block_kernel(%arg0: i32, %arg1: memref<1x8x32xbf16, #tpu.memory_space<vmem>>, %arg2: memref<1x32xf32, #tpu.memory_space<vmem>>, %arg3: memref<1x32xf32, #tpu.memory_space<vmem>>, %arg4: memref<32x96xbf16, #tpu.memory_space<vmem>>, %arg5: memref<1x96xf32, #tpu.memory_space<vmem>>, %arg6: memref<32x32xbf16, #tpu.memory_space<vmem>>, %arg7: memref<1x32xf32, #tpu.memory_space<vmem>>, %arg8: memref<1x8x32xbf16, #tpu.memory_space<vmem>>) attributes {dimension_semantics = [#tpu.dimension_semantics<parallel>], iteration_bounds = array<i64: 2>, scalar_prefetch = 0 : i64, scratch_operands = 0 : i64, tpu.core_type = #tpu.core_type<tc>, window_params = [{transform_indices = @transform_0, window_bounds = array<i64: 1, 8, 32>}, {pipeline_mode = #tpu.pipeline_mode<synchronous>, transform_indices = @transform_1, window_bounds = array<i64: 1, 32>}, {pipeline_mode = #tpu.pipeline_mode<synchronous>, transform_indices = @transform_2, window_bounds = array<i64: 1, 32>}, {pipeline_mode = #tpu.pipeline_mode<synchronous>, transform_indices = @transform_3, window_bounds = array<i64: 32, 96>}, {pipeline_mode = #tpu.pipeline_mode<synchronous>, transform_indices = @transform_4, window_bounds = array<i64: 1, 96>}, {pipeline_mode = #tpu.pipeline_mode<synchronous>, transform_indices = @transform_5, window_bounds = array<i64: 32, 32>}, {pipeline_mode = #tpu.pipeline_mode<synchronous>, transform_indices = @transform_6, window_bounds = array<i64: 1, 32>}, {transform_indices = @transform_7, window_bounds = array<i64: 1, 8, 32>}]} {
    %c0 = arith.constant 0 : index
    %c0_0 = arith.constant 0 : index
    %c0_1 = arith.constant 0 : index
    %0 = vector.load %arg1[%c0, %c0_0, %c0_1] : memref<1x8x32xbf16, #tpu.memory_space<vmem>>, vector<1x8x32xbf16>
    %1 = vector.shape_cast %0 : vector<1x8x32xbf16> to vector<8x32xbf16>
    %2 = arith.extf %1 : vector<8x32xbf16> to vector<8x32xf32>
    %c0_2 = arith.constant 0 : index
    %c0_3 = arith.constant 0 : index
    %3 = vector.load %arg2[%c0_2, %c0_3] : memref<1x32xf32, #tpu.memory_space<vmem>>, vector<1x32xf32>
    %c0_4 = arith.constant 0 : index
    %c0_5 = arith.constant 0 : index
    %4 = vector.load %arg3[%c0_4, %c0_5] : memref<1x32xf32, #tpu.memory_space<vmem>>, vector<1x32xf32>
    %cst = arith.constant dense<0.000000e+00> : vector<8xf32>
    %5 = vector.multi_reduction <add>, %2, %cst [1] : vector<8x32xf32> to vector<8xf32>
    %6 = vector.shape_cast %5 : vector<8xf32> to vector<8x1xf32>
    %cst_6 = arith.constant 3.200000e+01 : f32
    %7 = vector.broadcast %cst_6 : f32 to vector<8x1xf32>
    %8 = arith.divf %6, %7 : vector<8x1xf32>
    %9 = vector.broadcast %8 : vector<8x1xf32> to vector<8x32xf32>
    %10 = arith.subf %2, %9 : vector<8x32xf32>
    %11 = arith.mulf %10, %10 : vector<8x32xf32>
    %cst_7 = arith.constant dense<0.000000e+00> : vector<8xf32>
    %12 = vector.multi_reduction <add>, %11, %cst_7 [1] : vector<8x32xf32> to vector<8xf32>
    %13 = vector.shape_cast %12 : vector<8xf32> to vector<8x1xf32>
    %cst_8 = arith.constant 3.200000e+01 : f32
    %14 = vector.broadcast %cst_8 : f32 to vector<8x1xf32>
    %15 = arith.divf %13, %14 : vector<8x1xf32>
    %16 = vector.broadcast %8 : vector<8x1xf32> to vector<8x32xf32>
    %17 = arith.subf %2, %16 : vector<8x32xf32>
    %cst_9 = arith.constant 9.99999974E-6 : f32
    %18 = vector.broadcast %cst_9 : f32 to vector<8x1xf32>
    %19 = arith.addf %15, %18 : vector<8x1xf32>
    %20 = math.rsqrt %19 : vector<8x1xf32>
    %21 = vector.broadcast %20 : vector<8x1xf32> to vector<8x32xf32>
    %22 = arith.mulf %17, %21 : vector<8x32xf32>
    %23 = vector.broadcast %3 : vector<1x32xf32> to vector<8x32xf32>
    %24 = arith.mulf %22, %23 : vector<8x32xf32>
    %25 = vector.broadcast %4 : vector<1x32xf32> to vector<8x32xf32>
    %26 = arith.addf %24, %25 : vector<8x32xf32>
    %27 = arith.truncf %26 : vector<8x32xf32> to vector<8x32xbf16>
    %c0_10 = arith.constant 0 : index
    %c0_11 = arith.constant 0 : index
    %28 = vector.load %arg4[%c0_10, %c0_11] : memref<32x96xbf16, #tpu.memory_space<vmem>>, vector<32x96xbf16>
    %cst_12 = arith.constant dense<0.000000e+00> : vector<8x96xf32>
    %29 = tpu.matmul %27, %28, %cst_12 {dimension_numbers = #tpu.dot_dimension_numbers<[1], [0], [0], [1], [0, 0, 1, 1], [], []>} : vector<8x32xbf16>, vector<32x96xbf16>, vector<8x96xf32> -> vector<8x96xf32>
    %c0_13 = arith.constant 0 : index
    %c0_14 = arith.constant 0 : index
    %30 = vector.load %arg5[%c0_13, %c0_14] : memref<1x96xf32, #tpu.memory_space<vmem>>, vector<1x96xf32>
    %31 = vector.broadcast %30 : vector<1x96xf32> to vector<8x96xf32>
    %32 = arith.addf %29, %31 : vector<8x96xf32>
    %33 = vector.extract_strided_slice %32 {offsets = [0, 0], sizes = [8, 32], strides = [1, 1]} : vector<8x96xf32> to vector<8x32xf32>
    %34 = vector.extract_strided_slice %32 {offsets = [0, 32], sizes = [8, 32], strides = [1, 1]} : vector<8x96xf32> to vector<8x32xf32>
    %35 = vector.extract_strided_slice %32 {offsets = [0, 64], sizes = [8, 32], strides = [1, 1]} : vector<8x96xf32> to vector<8x32xf32>
    %36 = vector.extract_strided_slice %33 {offsets = [0, 0], sizes = [8, 8], strides = [1, 1]} : vector<8x32xf32> to vector<8x8xf32>
    %37 = arith.truncf %36 : vector<8x8xf32> to vector<8x8xbf16>
    %38 = vector.extract_strided_slice %34 {offsets = [0, 0], sizes = [8, 8], strides = [1, 1]} : vector<8x32xf32> to vector<8x8xf32>
    %39 = arith.truncf %38 : vector<8x8xf32> to vector<8x8xbf16>
    %40 = vector.extract_strided_slice %35 {offsets = [0, 0], sizes = [8, 8], strides = [1, 1]} : vector<8x32xf32> to vector<8x8xf32>
    %41 = arith.truncf %40 : vector<8x8xf32> to vector<8x8xbf16>
    %cst_15 = arith.constant dense<0.000000e+00> : vector<8x8xf32>
    %42 = tpu.matmul %37, %39, %cst_15 {dimension_numbers = #tpu.dot_dimension_numbers<[1], [1], [0], [0], [0, 0, 1, 0], [], []>} : vector<8x8xbf16>, vector<8x8xbf16>, vector<8x8xf32> -> vector<8x8xf32>
    %cst_16 = arith.constant 0.353553385 : f32
    %43 = vector.broadcast %cst_16 : f32 to vector<8x8xf32>
    %44 = arith.mulf %42, %43 : vector<8x8xf32>
    %cst_17 = arith.constant dense<0xFF800000> : vector<8xf32>
    %45 = vector.multi_reduction <maximumf>, %44, %cst_17 [1] : vector<8x8xf32> to vector<8xf32>
    %46 = vector.shape_cast %45 : vector<8xf32> to vector<8x1xf32>
    %47 = vector.broadcast %46 : vector<8x1xf32> to vector<8x8xf32>
    %48 = arith.subf %44, %47 : vector<8x8xf32>
    %49 = math.exp %48 : vector<8x8xf32>
    %cst_18 = arith.constant dense<0.000000e+00> : vector<8xf32>
    %50 = vector.multi_reduction <add>, %49, %cst_18 [1] : vector<8x8xf32> to vector<8xf32>
    %51 = vector.shape_cast %50 : vector<8xf32> to vector<8x1xf32>
    %52 = vector.broadcast %51 : vector<8x1xf32> to vector<8x8xf32>
    %53 = arith.divf %49, %52 : vector<8x8xf32>
    %54 = arith.truncf %53 : vector<8x8xf32> to vector<8x8xbf16>
    %cst_19 = arith.constant dense<0.000000e+00> : vector<8x8xf32>
    %55 = tpu.matmul %54, %41, %cst_19 {dimension_numbers = #tpu.dot_dimension_numbers<[1], [0], [0], [1], [0, 0, 1, 1], [], []>} : vector<8x8xbf16>, vector<8x8xbf16>, vector<8x8xf32> -> vector<8x8xf32>
    %56 = vector.extract_strided_slice %33 {offsets = [0, 8], sizes = [8, 8], strides = [1, 1]} : vector<8x32xf32> to vector<8x8xf32>
    %57 = arith.truncf %56 : vector<8x8xf32> to vector<8x8xbf16>
    %58 = vector.extract_strided_slice %34 {offsets = [0, 8], sizes = [8, 8], strides = [1, 1]} : vector<8x32xf32> to vector<8x8xf32>
    %59 = arith.truncf %58 : vector<8x8xf32> to vector<8x8xbf16>
    %60 = vector.extract_strided_slice %35 {offsets = [0, 8], sizes = [8, 8], strides = [1, 1]} : vector<8x32xf32> to vector<8x8xf32>
    %61 = arith.truncf %60 : vector<8x8xf32> to vector<8x8xbf16>
    %cst_20 = arith.constant dense<0.000000e+00> : vector<8x8xf32>
    %62 = tpu.matmul %57, %59, %cst_20 {dimension_numbers = #tpu.dot_dimension_numbers<[1], [1], [0], [0], [0, 0, 1, 0], [], []>} : vector<8x8xbf16>, vector<8x8xbf16>, vector<8x8xf32> -> vector<8x8xf32>
    %cst_21 = arith.constant 0.353553385 : f32
    %63 = vector.broadcast %cst_21 : f32 to vector<8x8xf32>
    %64 = arith.mulf %62, %63 : vector<8x8xf32>
    %cst_22 = arith.constant dense<0xFF800000> : vector<8xf32>
    %65 = vector.multi_reduction <maximumf>, %64, %cst_22 [1] : vector<8x8xf32> to vector<8xf32>
    %66 = vector.shape_cast %65 : vector<8xf32> to vector<8x1xf32>
    %67 = vector.broadcast %66 : vector<8x1xf32> to vector<8x8xf32>
    %68 = arith.subf %64, %67 : vector<8x8xf32>
    %69 = math.exp %68 : vector<8x8xf32>
    %cst_23 = arith.constant dense<0.000000e+00> : vector<8xf32>
    %70 = vector.multi_reduction <add>, %69, %cst_23 [1] : vector<8x8xf32> to vector<8xf32>
    %71 = vector.shape_cast %70 : vector<8xf32> to vector<8x1xf32>
    %72 = vector.broadcast %71 : vector<8x1xf32> to vector<8x8xf32>
    %73 = arith.divf %69, %72 : vector<8x8xf32>
    %74 = arith.truncf %73 : vector<8x8xf32> to vector<8x8xbf16>
    %cst_24 = arith.constant dense<0.000000e+00> : vector<8x8xf32>
    %75 = tpu.matmul %74, %61, %cst_24 {dimension_numbers = #tpu.dot_dimension_numbers<[1], [0], [0], [1], [0, 0, 1, 1], [], []>} : vector<8x8xbf16>, vector<8x8xbf16>, vector<8x8xf32> -> vector<8x8xf32>
    %76 = vector.extract_strided_slice %33 {offsets = [0, 16], sizes = [8, 8], strides = [1, 1]} : vector<8x32xf32> to vector<8x8xf32>
    %77 = arith.truncf %76 : vector<8x8xf32> to vector<8x8xbf16>
    %78 = vector.extract_strided_slice %34 {offsets = [0, 16], sizes = [8, 8], strides = [1, 1]} : vector<8x32xf32> to vector<8x8xf32>
    %79 = arith.truncf %78 : vector<8x8xf32> to vector<8x8xbf16>
    %80 = vector.extract_strided_slice %35 {offsets = [0, 16], sizes = [8, 8], strides = [1, 1]} : vector<8x32xf32> to vector<8x8xf32>
    %81 = arith.truncf %80 : vector<8x8xf32> to vector<8x8xbf16>
    %cst_25 = arith.constant dense<0.000000e+00> : vector<8x8xf32>
    %82 = tpu.matmul %77, %79, %cst_25 {dimension_numbers = #tpu.dot_dimension_numbers<[1], [1], [0], [0], [0, 0, 1, 0], [], []>} : vector<8x8xbf16>, vector<8x8xbf16>, vector<8x8xf32> -> vector<8x8xf32>
    %cst_26 = arith.constant 0.353553385 : f32
    %83 = vector.broadcast %cst_26 : f32 to vector<8x8xf32>
    %84 = arith.mulf %82, %83 : vector<8x8xf32>
    %cst_27 = arith.constant dense<0xFF800000> : vector<8xf32>
    %85 = vector.multi_reduction <maximumf>, %84, %cst_27 [1] : vector<8x8xf32> to vector<8xf32>
    %86 = vector.shape_cast %85 : vector<8xf32> to vector<8x1xf32>
    %87 = vector.broadcast %86 : vector<8x1xf32> to vector<8x8xf32>
    %88 = arith.subf %84, %87 : vector<8x8xf32>
    %89 = math.exp %88 : vector<8x8xf32>
    %cst_28 = arith.constant dense<0.000000e+00> : vector<8xf32>
    %90 = vector.multi_reduction <add>, %89, %cst_28 [1] : vector<8x8xf32> to vector<8xf32>
    %91 = vector.shape_cast %90 : vector<8xf32> to vector<8x1xf32>
    %92 = vector.broadcast %91 : vector<8x1xf32> to vector<8x8xf32>
    %93 = arith.divf %89, %92 : vector<8x8xf32>
    %94 = arith.truncf %93 : vector<8x8xf32> to vector<8x8xbf16>
    %cst_29 = arith.constant dense<0.000000e+00> : vector<8x8xf32>
    %95 = tpu.matmul %94, %81, %cst_29 {dimension_numbers = #tpu.dot_dimension_numbers<[1], [0], [0], [1], [0, 0, 1, 1], [], []>} : vector<8x8xbf16>, vector<8x8xbf16>, vector<8x8xf32> -> vector<8x8xf32>
    %96 = vector.extract_strided_slice %33 {offsets = [0, 24], sizes = [8, 8], strides = [1, 1]} : vector<8x32xf32> to vector<8x8xf32>
    %97 = arith.truncf %96 : vector<8x8xf32> to vector<8x8xbf16>
    %98 = vector.extract_strided_slice %34 {offsets = [0, 24], sizes = [8, 8], strides = [1, 1]} : vector<8x32xf32> to vector<8x8xf32>
    %99 = arith.truncf %98 : vector<8x8xf32> to vector<8x8xbf16>
    %100 = vector.extract_strided_slice %35 {offsets = [0, 24], sizes = [8, 8], strides = [1, 1]} : vector<8x32xf32> to vector<8x8xf32>
    %101 = arith.truncf %100 : vector<8x8xf32> to vector<8x8xbf16>
    %cst_30 = arith.constant dense<0.000000e+00> : vector<8x8xf32>
    %102 = tpu.matmul %97, %99, %cst_30 {dimension_numbers = #tpu.dot_dimension_numbers<[1], [1], [0], [0], [0, 0, 1, 0], [], []>} : vector<8x8xbf16>, vector<8x8xbf16>, vector<8x8xf32> -> vector<8x8xf32>
    %cst_31 = arith.constant 0.353553385 : f32
    %103 = vector.broadcast %cst_31 : f32 to vector<8x8xf32>
    %104 = arith.mulf %102, %103 : vector<8x8xf32>
    %cst_32 = arith.constant dense<0xFF800000> : vector<8xf32>
    %105 = vector.multi_reduction <maximumf>, %104, %cst_32 [1] : vector<8x8xf32> to vector<8xf32>
    %106 = vector.shape_cast %105 : vector<8xf32> to vector<8x1xf32>
    %107 = vector.broadcast %106 : vector<8x1xf32> to vector<8x8xf32>
    %108 = arith.subf %104, %107 : vector<8x8xf32>
    %109 = math.exp %108 : vector<8x8xf32>
    %cst_33 = arith.constant dense<0.000000e+00> : vector<8xf32>
    %110 = vector.multi_reduction <add>, %109, %cst_33 [1] : vector<8x8xf32> to vector<8xf32>
    %111 = vector.shape_cast %110 : vector<8xf32> to vector<8x1xf32>
    %112 = vector.broadcast %111 : vector<8x1xf32> to vector<8x8xf32>
    %113 = arith.divf %109, %112 : vector<8x8xf32>
    %114 = arith.truncf %113 : vector<8x8xf32> to vector<8x8xbf16>
    %cst_34 = arith.constant dense<0.000000e+00> : vector<8x8xf32>
    %115 = tpu.matmul %114, %101, %cst_34 {dimension_numbers = #tpu.dot_dimension_numbers<[1], [0], [0], [1], [0, 0, 1, 1], [], []>} : vector<8x8xbf16>, vector<8x8xbf16>, vector<8x8xf32> -> vector<8x8xf32>
    %116 = tpu.concatenate %55, %75, %95, %115 in 1 : vector<8x8xf32>, vector<8x8xf32>, vector<8x8xf32>, vector<8x8xf32> -> vector<8x32xf32>
    %117 = arith.truncf %116 : vector<8x32xf32> to vector<8x32xbf16>
    %c0_35 = arith.constant 0 : index
    %c0_36 = arith.constant 0 : index
    %118 = vector.load %arg6[%c0_35, %c0_36] : memref<32x32xbf16, #tpu.memory_space<vmem>>, vector<32x32xbf16>
    %cst_37 = arith.constant dense<0.000000e+00> : vector<8x32xf32>
    %119 = tpu.matmul %117, %118, %cst_37 {dimension_numbers = #tpu.dot_dimension_numbers<[1], [0], [0], [1], [0, 0, 1, 1], [], []>} : vector<8x32xbf16>, vector<32x32xbf16>, vector<8x32xf32> -> vector<8x32xf32>
    %c0_38 = arith.constant 0 : index
    %c0_39 = arith.constant 0 : index
    %120 = vector.load %arg7[%c0_38, %c0_39] : memref<1x32xf32, #tpu.memory_space<vmem>>, vector<1x32xf32>
    %121 = vector.broadcast %120 : vector<1x32xf32> to vector<8x32xf32>
    %122 = arith.addf %119, %121 : vector<8x32xf32>
    %123 = arith.addf %122, %2 : vector<8x32xf32>
    %124 = arith.truncf %123 : vector<8x32xf32> to vector<8x32xbf16>
    %c0_40 = arith.constant 0 : index
    %c0_41 = arith.constant 0 : index
    %c0_42 = arith.constant 0 : index
    %125 = vector.load %arg8[%c0_40, %c0_41, %c0_42] : memref<1x8x32xbf16, #tpu.memory_space<vmem>>, vector<1x8x32xbf16>
    %126 = vector.shape_cast %125 : vector<1x8x32xbf16> to vector<8x32xbf16>
    %127 = vector.shape_cast %124 : vector<8x32xbf16> to vector<1x8x32xbf16>
    tpu.vector_store %arg8[%c0_40, %c0_41, %c0_42], %127 {strides = array<i32>} : memref<1x8x32xbf16, #tpu.memory_space<vmem>>, vector<1x8x32xbf16>,
    return
  }
  func.func @transform_0(%arg0: i32) -> (i32, i32, i32) {
    %c0_i32 = arith.constant 0 : i32
    %c0_i32_0 = arith.constant 0 : i32
    %c0_i32_1 = arith.constant 0 : i32
    return %arg0, %c0_i32, %c0_i32_0 : i32, i32, i32
  }
  func.func @transform_1(%arg0: i32) -> (i32, i32) {
    %c0_i32 = arith.constant 0 : i32
    %c0_i32_0 = arith.constant 0 : i32
    %c0_i32_1 = arith.constant 0 : i32
    return %c0_i32, %c0_i32_0 : i32, i32
  }
  func.func @transform_2(%arg0: i32) -> (i32, i32) {
    %c0_i32 = arith.constant 0 : i32
    %c0_i32_0 = arith.constant 0 : i32
    %c0_i32_1 = arith.constant 0 : i32
    return %c0_i32, %c0_i32_0 : i32, i32
  }
  func.func @transform_3(%arg0: i32) -> (i32, i32) {
    %c0_i32 = arith.constant 0 : i32
    %c0_i32_0 = arith.constant 0 : i32
    %c0_i32_1 = arith.constant 0 : i32
    return %c0_i32, %c0_i32_0 : i32, i32
  }
  func.func @transform_4(%arg0: i32) -> (i32, i32) {
    %c0_i32 = arith.constant 0 : i32
    %c0_i32_0 = arith.constant 0 : i32
    %c0_i32_1 = arith.constant 0 : i32
    return %c0_i32, %c0_i32_0 : i32, i32
  }
  func.func @transform_5(%arg0: i32) -> (i32, i32) {
    %c0_i32 = arith.constant 0 : i32
    %c0_i32_0 = arith.constant 0 : i32
    %c0_i32_1 = arith.constant 0 : i32
    return %c0_i32, %c0_i32_0 : i32, i32
  }
  func.func @transform_6(%arg0: i32) -> (i32, i32) {
    %c0_i32 = arith.constant 0 : i32
    %c0_i32_0 = arith.constant 0 : i32
    %c0_i32_1 = arith.constant 0 : i32
    return %c0_i32, %c0_i32_0 : i32, i32
  }
  func.func @transform_7(%arg0: i32) -> (i32, i32, i32) {
    %c0_i32 = arith.constant 0 : i32
    %c0_i32_0 = arith.constant 0 : i32
    %c0_i32_1 = arith.constant 0 : i32
    return %arg0, %c0_i32, %c0_i32_0 : i32, i32, i32
  }
}

module attributes {stable_mosaic.version = 11 : i64} {
  func.func @_attn_block_kernel(%arg0: i32, %arg1: memref<1x8x32xbf16, #tpu.memory_space<vmem>>, %arg2: memref<1x32xf32, #tpu.memory_space<vmem>>, %arg3: memref<1x32xf32, #tpu.memory_space<vmem>>, %arg4: memref<32x96xbf16, #tpu.memory_space<vmem>>, %arg5: memref<1x96xf32, #tpu.memory_space<vmem>>, %arg6: memref<32x32xbf16, #tpu.memory_space<vmem>>, %arg7: memref<1x32xf32, #tpu.memory_space<vmem>>, %arg8: memref<1x8x32xbf16, #tpu.memory_space<vmem>>) attributes {dimension_semantics = [#tpu.dimension_semantics<parallel>], iteration_bounds = array<i64: 2>, scalar_prefetch = 0 : i64, scratch_operands = 0 : i64, tpu.core_type = #tpu.core_type<tc>, window_params = [{transform_indices = @transform_0, window_bounds = array<i64: 1, 8, 32>}, {pipeline_mode = #tpu.pipeline_mode<synchronous>, transform_indices = @transform_1, window_bounds = array<i64: 1, 32>}, {pipeline_mode = #tpu.pipeline_mode<synchronous>, transform_indices = @transform_2, window_bounds = array<i64: 1, 32>}, {pipeline_mode = #tpu.pipeline_mode<synchronous>, transform_indices = @transform_3, window_bounds = array<i64: 32, 96>}, {pipeline_mode = #tpu.pipeline_mode<synchronous>, transform_indices = @transform_4, window_bounds = array<i64: 1, 96>}, {pipeline_mode = #tpu.pipeline_mode<synchronous>, transform_indices = @transform_5, window_bounds = array<i64: 32, 32>}, {pipeline_mode = #tpu.pipeline_mode<synchronous>, transform_indices = @transform_6, window_bounds = array<i64: 1, 32>}, {transform_indices = @transform_7, window_bounds = array<i64: 1, 8, 32>}]} {
    %c0 = arith.constant 0 : index
    %c0_0 = arith.constant 0 : index
    %c0_1 = arith.constant 0 : index
    %0 = vector.load %arg1[%c0, %c0_0, %c0_1] : memref<1x8x32xbf16, #tpu.memory_space<vmem>>, vector<1x8x32xbf16>
    %1 = vector.shape_cast %0 : vector<1x8x32xbf16> to vector<8x32xbf16>
    %2 = arith.extf %1 : vector<8x32xbf16> to vector<8x32xf32>
    %c0_2 = arith.constant 0 : index
    %c0_3 = arith.constant 0 : index
    %3 = vector.load %arg2[%c0_2, %c0_3] : memref<1x32xf32, #tpu.memory_space<vmem>>, vector<1x32xf32>
    %c0_4 = arith.constant 0 : index
    %c0_5 = arith.constant 0 : index
    %4 = vector.load %arg3[%c0_4, %c0_5] : memref<1x32xf32, #tpu.memory_space<vmem>>, vector<1x32xf32>
    %cst = arith.constant dense<0.000000e+00> : vector<8xf32>
    %5 = vector.multi_reduction <add>, %2, %cst [1] : vector<8x32xf32> to vector<8xf32>
    %6 = vector.shape_cast %5 : vector<8xf32> to vector<8x1xf32>
    %cst_6 = arith.constant 3.200000e+01 : f32
    %7 = vector.broadcast %cst_6 : f32 to vector<8x1xf32>
    %8 = arith.divf %6, %7 : vector<8x1xf32>
    %9 = vector.broadcast %8 : vector<8x1xf32> to vector<8x32xf32>
    %10 = arith.subf %2, %9 : vector<8x32xf32>
    %11 = arith.mulf %10, %10 : vector<8x32xf32>
    %cst_7 = arith.constant dense<0.000000e+00> : vector<8xf32>
    %12 = vector.multi_reduction <add>, %11, %cst_7 [1] : vector<8x32xf32> to vector<8xf32>
    %13 = vector.shape_cast %12 : vector<8xf32> to vector<8x1xf32>
    %cst_8 = arith.constant 3.200000e+01 : f32
    %14 = vector.broadcast %cst_8 : f32 to vector<8x1xf32>
    %15 = arith.divf %13, %14 : vector<8x1xf32>
    %16 = vector.broadcast %8 : vector<8x1xf32> to vector<8x32xf32>
    %17 = arith.subf %2, %16 : vector<8x32xf32>
    %cst_9 = arith.constant 9.99999974E-6 : f32
    %18 = vector.broadcast %cst_9 : f32 to vector<8x1xf32>
    %19 = arith.addf %15, %18 : vector<8x1xf32>
    %20 = math.rsqrt %19 : vector<8x1xf32>
    %21 = vector.broadcast %20 : vector<8x1xf32> to vector<8x32xf32>
    %22 = arith.mulf %17, %21 : vector<8x32xf32>
    %23 = vector.broadcast %3 : vector<1x32xf32> to vector<8x32xf32>
    %24 = arith.mulf %22, %23 : vector<8x32xf32>
    %25 = vector.broadcast %4 : vector<1x32xf32> to vector<8x32xf32>
    %26 = arith.addf %24, %25 : vector<8x32xf32>
    %27 = arith.truncf %26 : vector<8x32xf32> to vector<8x32xbf16>
    %c0_10 = arith.constant 0 : index
    %c0_11 = arith.constant 0 : index
    %28 = vector.load %arg4[%c0_10, %c0_11] : memref<32x96xbf16, #tpu.memory_space<vmem>>, vector<32x96xbf16>
    %cst_12 = arith.constant dense<0.000000e+00> : vector<8x96xf32>
    %29 = tpu.matmul %27, %28, %cst_12 {dimension_numbers = #tpu.dot_dimension_numbers<[1], [0], [0], [1], [0, 0, 1, 1], [], []>} : vector<8x32xbf16>, vector<32x96xbf16>, vector<8x96xf32> -> vector<8x96xf32>
    %c0_13 = arith.constant 0 : index
    %c0_14 = arith.constant 0 : index
    %30 = vector.load %arg5[%c0_13, %c0_14] : memref<1x96xf32, #tpu.memory_space<vmem>>, vector<1x96xf32>
    %31 = vector.broadcast %30 : vector<1x96xf32> to vector<8x96xf32>
    %32 = arith.addf %29, %31 : vector<8x96xf32>
    %33 = vector.extract_strided_slice %32 {offsets = [0, 0], sizes = [8, 32], strides = [1, 1]} : vector<8x96xf32> to vector<8x32xf32>
    %34 = vector.extract_strided_slice %32 {offsets = [0, 32], sizes = [8, 32], strides = [1, 1]} : vector<8x96xf32> to vector<8x32xf32>
    %35 = vector.extract_strided_slice %32 {offsets = [0, 64], sizes = [8, 32], strides = [1, 1]} : vector<8x96xf32> to vector<8x32xf32>
    %36 = vector.extract_strided_slice %33 {offsets = [0, 0], sizes = [8, 8], strides = [1, 1]} : vector<8x32xf32> to vector<8x8xf32>
    %37 = arith.truncf %36 : vector<8x8xf32> to vector<8x8xbf16>
    %38 = vector.extract_strided_slice %34 {offsets = [0, 0], sizes = [8, 8], strides = [1, 1]} : vector<8x32xf32> to vector<8x8xf32>
    %39 = arith.truncf %38 : vector<8x8xf32> to vector<8x8xbf16>
    %40 = vector.extract_strided_slice %35 {offsets = [0, 0], sizes = [8, 8], strides = [1, 1]} : vector<8x32xf32> to vector<8x8xf32>
    %41 = arith.truncf %40 : vector<8x8xf32> to vector<8x8xbf16>
    %cst_15 = arith.constant dense<0.000000e+00> : vector<8x8xf32>
    %42 = tpu.matmul %37, %39, %cst_15 {dimension_numbers = #tpu.dot_dimension_numbers<[1], [1], [0], [0], [0, 0, 1, 0], [], []>} : vector<8x8xbf16>, vector<8x8xbf16>, vector<8x8xf32> -> vector<8x8xf32>
    %cst_16 = arith.constant 0.353553385 : f32
    %43 = vector.broadcast %cst_16 : f32 to vector<8x8xf32>
    %44 = arith.mulf %42, %43 : vector<8x8xf32>
    %cst_17 = arith.constant dense<0xFF800000> : vector<8xf32>
    %45 = vector.multi_reduction <maximumf>, %44, %cst_17 [1] : vector<8x8xf32> to vector<8xf32>
    %46 = vector.shape_cast %45 : vector<8xf32> to vector<8x1xf32>
    %47 = vector.broadcast %46 : vector<8x1xf32> to vector<8x8xf32>
    %48 = arith.subf %44, %47 : vector<8x8xf32>
    %49 = math.exp %48 : vector<8x8xf32>
    %cst_18 = arith.constant dense<0.000000e+00> : vector<8xf32>
    %50 = vector.multi_reduction <add>, %49, %cst_18 [1] : vector<8x8xf32> to vector<8xf32>
    %51 = vector.shape_cast %50 : vector<8xf32> to vector<8x1xf32>
    %52 = vector.broadcast %51 : vector<8x1xf32> to vector<8x8xf32>
    %53 = arith.divf %49, %52 : vector<8x8xf32>
    %54 = arith.truncf %53 : vector<8x8xf32> to vector<8x8xbf16>
    %cst_19 = arith.constant dense<0.000000e+00> : vector<8x8xf32>
    %55 = tpu.matmul %54, %41, %cst_19 {dimension_numbers = #tpu.dot_dimension_numbers<[1], [0], [0], [1], [0, 0, 1, 1], [], []>} : vector<8x8xbf16>, vector<8x8xbf16>, vector<8x8xf32> -> vector<8x8xf32>
    %56 = vector.extract_strided_slice %33 {offsets = [0, 8], sizes = [8, 8], strides = [1, 1]} : vector<8x32xf32> to vector<8x8xf32>
    %57 = arith.truncf %56 : vector<8x8xf32> to vector<8x8xbf16>
    %58 = vector.extract_strided_slice %34 {offsets = [0, 8], sizes = [8, 8], strides = [1, 1]} : vector<8x32xf32> to vector<8x8xf32>
    %59 = arith.truncf %58 : vector<8x8xf32> to vector<8x8xbf16>
    %60 = vector.extract_strided_slice %35 {offsets = [0, 8], sizes = [8, 8], strides = [1, 1]} : vector<8x32xf32> to vector<8x8xf32>
    %61 = arith.truncf %60 : vector<8x8xf32> to vector<8x8xbf16>
    %cst_20 = arith.constant dense<0.000000e+00> : vector<8x8xf32>
    %62 = tpu.matmul %57, %59, %cst_20 {dimension_numbers = #tpu.dot_dimension_numbers<[1], [1], [0], [0], [0, 0, 1, 0], [], []>} : vector<8x8xbf16>, vector<8x8xbf16>, vector<8x8xf32> -> vector<8x8xf32>
    %cst_21 = arith.constant 0.353553385 : f32
    %63 = vector.broadcast %cst_21 : f32 to vector<8x8xf32>
    %64 = arith.mulf %62, %63 : vector<8x8xf32>
    %cst_22 = arith.constant dense<0xFF800000> : vector<8xf32>
    %65 = vector.multi_reduction <maximumf>, %64, %cst_22 [1] : vector<8x8xf32> to vector<8xf32>
    %66 = vector.shape_cast %65 : vector<8xf32> to vector<8x1xf32>
    %67 = vector.broadcast %66 : vector<8x1xf32> to vector<8x8xf32>
    %68 = arith.subf %64, %67 : vector<8x8xf32>
    %69 = math.exp %68 : vector<8x8xf32>
    %cst_23 = arith.constant dense<0.000000e+00> : vector<8xf32>
    %70 = vector.multi_reduction <add>, %69, %cst_23 [1] : vector<8x8xf32> to vector<8xf32>
    %71 = vector.shape_cast %70 : vector<8xf32> to vector<8x1xf32>
    %72 = vector.broadcast %71 : vector<8x1xf32> to vector<8x8xf32>
    %73 = arith.divf %69, %72 : vector<8x8xf32>
    %74 = arith.truncf %73 : vector<8x8xf32> to vector<8x8xbf16>
    %cst_24 = arith.constant dense<0.000000e+00> : vector<8x8xf32>
    %75 = tpu.matmul %74, %61, %cst_24 {dimension_numbers = #tpu.dot_dimension_numbers<[1], [0], [0], [1], [0, 0, 1, 1], [], []>} : vector<8x8xbf16>, vector<8x8xbf16>, vector<8x8xf32> -> vector<8x8xf32>
    %76 = vector.extract_strided_slice %33 {offsets = [0, 16], sizes = [8, 8], strides = [1, 1]} : vector<8x32xf32> to vector<8x8xf32>
    %77 = arith.truncf %76 : vector<8x8xf32> to vector<8x8xbf16>
    %78 = vector.extract_strided_slice %34 {offsets = [0, 16], sizes = [8, 8], strides = [1, 1]} : vector<8x32xf32> to vector<8x8xf32>
    %79 = arith.truncf %78 : vector<8x8xf32> to vector<8x8xbf16>
    %80 = vector.extract_strided_slice %35 {offsets = [0, 16], sizes = [8, 8], strides = [1, 1]} : vector<8x32xf32> to vector<8x8xf32>
    %81 = arith.truncf %80 : vector<8x8xf32> to vector<8x8xbf16>
    %cst_25 = arith.constant dense<0.000000e+00> : vector<8x8xf32>
    %82 = tpu.matmul %77, %79, %cst_25 {dimension_numbers = #tpu.dot_dimension_numbers<[1], [1], [0], [0], [0, 0, 1, 0], [], []>} : vector<8x8xbf16>, vector<8x8xbf16>, vector<8x8xf32> -> vector<8x8xf32>
    %cst_26 = arith.constant 0.353553385 : f32
    %83 = vector.broadcast %cst_26 : f32 to vector<8x8xf32>
    %84 = arith.mulf %82, %83 : vector<8x8xf32>
    %cst_27 = arith.constant dense<0xFF800000> : vector<8xf32>
    %85 = vector.multi_reduction <maximumf>, %84, %cst_27 [1] : vector<8x8xf32> to vector<8xf32>
    %86 = vector.shape_cast %85 : vector<8xf32> to vector<8x1xf32>
    %87 = vector.broadcast %86 : vector<8x1xf32> to vector<8x8xf32>
    %88 = arith.subf %84, %87 : vector<8x8xf32>
    %89 = math.exp %88 : vector<8x8xf32>
    %cst_28 = arith.constant dense<0.000000e+00> : vector<8xf32>
    %90 = vector.multi_reduction <add>, %89, %cst_28 [1] : vector<8x8xf32> to vector<8xf32>
    %91 = vector.shape_cast %90 : vector<8xf32> to vector<8x1xf32>
    %92 = vector.broadcast %91 : vector<8x1xf32> to vector<8x8xf32>
    %93 = arith.divf %89, %92 : vector<8x8xf32>
    %94 = arith.truncf %93 : vector<8x8xf32> to vector<8x8xbf16>
    %cst_29 = arith.constant dense<0.000000e+00> : vector<8x8xf32>
    %95 = tpu.matmul %94, %81, %cst_29 {dimension_numbers = #tpu.dot_dimension_numbers<[1], [0], [0], [1], [0, 0, 1, 1], [], []>} : vector<8x8xbf16>, vector<8x8xbf16>, vector<8x8xf32> -> vector<8x8xf32>
    %96 = vector.extract_strided_slice %33 {offsets = [0, 24], sizes = [8, 8], strides = [1, 1]} : vector<8x32xf32> to vector<8x8xf32>
    %97 = arith.truncf %96 : vector<8x8xf32> to vector<8x8xbf16>
    %98 = vector.extract_strided_slice %34 {offsets = [0, 24], sizes = [8, 8], strides = [1, 1]} : vector<8x32xf32> to vector<8x8xf32>
    %99 = arith.truncf %98 : vector<8x8xf32> to vector<8x8xbf16>
    %100 = vector.extract_strided_slice %35 {offsets = [0, 24], sizes = [8, 8], strides = [1, 1]} : vector<8x32xf32> to vector<8x8xf32>
    %101 = arith.truncf %100 : vector<8x8xf32> to vector<8x8xbf16>
    %cst_30 = arith.constant dense<0.000000e+00> : vector<8x8xf32>
    %102 = tpu.matmul %97, %99, %cst_30 {dimension_numbers = #tpu.dot_dimension_numbers<[1], [1], [0], [0], [0, 0, 1, 0], [], []>} : vector<8x8xbf16>, vector<8x8xbf16>, vector<8x8xf32> -> vector<8x8xf32>
    %cst_31 = arith.constant 0.353553385 : f32
    %103 = vector.broadcast %cst_31 : f32 to vector<8x8xf32>
    %104 = arith.mulf %102, %103 : vector<8x8xf32>
    %cst_32 = arith.constant dense<0xFF800000> : vector<8xf32>
    %105 = vector.multi_reduction <maximumf>, %104, %cst_32 [1] : vector<8x8xf32> to vector<8xf32>
    %106 = vector.shape_cast %105 : vector<8xf32> to vector<8x1xf32>
    %107 = vector.broadcast %106 : vector<8x1xf32> to vector<8x8xf32>
    %108 = arith.subf %104, %107 : vector<8x8xf32>
    %109 = math.exp %108 : vector<8x8xf32>
    %cst_33 = arith.constant dense<0.000000e+00> : vector<8xf32>
    %110 = vector.multi_reduction <add>, %109, %cst_33 [1] : vector<8x8xf32> to vector<8xf32>
    %111 = vector.shape_cast %110 : vector<8xf32> to vector<8x1xf32>
    %112 = vector.broadcast %111 : vector<8x1xf32> to vector<8x8xf32>
    %113 = arith.divf %109, %112 : vector<8x8xf32>
    %114 = arith.truncf %113 : vector<8x8xf32> to vector<8x8xbf16>
    %cst_34 = arith.constant dense<0.000000e+00> : vector<8x8xf32>
    %115 = tpu.matmul %114, %101, %cst_34 {dimension_numbers = #tpu.dot_dimension_numbers<[1], [0], [0], [1], [0, 0, 1, 1], [], []>} : vector<8x8xbf16>, vector<8x8xbf16>, vector<8x8xf32> -> vector<8x8xf32>
    %116 = tpu.concatenate %55, %75, %95, %115 in 1 : vector<8x8xf32>, vector<8x8xf32>, vector<8x8xf32>, vector<8x8xf32> -> vector<8x32xf32>
    %117 = arith.truncf %116 : vector<8x32xf32> to vector<8x32xbf16>
    %c0_35 = arith.constant 0 : index
    %c0_36 = arith.constant 0 : index
    %118 = vector.load %arg6[%c0_35, %c0_36] : memref<32x32xbf16, #tpu.memory_space<vmem>>, vector<32x32xbf16>
    %cst_37 = arith.constant dense<0.000000e+00> : vector<8x32xf32>
    %119 = tpu.matmul %117, %118, %cst_37 {dimension_numbers = #tpu.dot_dimension_numbers<[1], [0], [0], [1], [0, 0, 1, 1], [], []>} : vector<8x32xbf16>, vector<32x32xbf16>, vector<8x32xf32> -> vector<8x32xf32>
    %c0_38 = arith.constant 0 : index
    %c0_39 = arith.constant 0 : index
    %120 = vector.load %arg7[%c0_38, %c0_39] : memref<1x32xf32, #tpu.memory_space<vmem>>, vector<1x32xf32>
    %121 = vector.broadcast %120 : vector<1x32xf32> to vector<8x32xf32>
    %122 = arith.addf %119, %121 : vector<8x32xf32>
    %123 = arith.addf %122, %2 : vector<8x32xf32>
    %124 = arith.truncf %123 : vector<8x32xf32> to vector<8x32xbf16>
    %c0_40 = arith.constant 0 : index
    %c0_41 = arith.constant 0 : index
    %c0_42 = arith.constant 0 : index
    %125 = vector.load %arg8[%c0_40, %c0_41, %c0_42] : memref<1x8x32xbf16, #tpu.memory_space<vmem>>, vector<1x8x32xbf16>
    %126 = vector.shape_cast %125 : vector<1x8x32xbf16> to vector<8x32xbf16>
    %127 = vector.shape_cast %124 : vector<8x32xbf16> to vector<1x8x32xbf16>
    tpu.vector_store %arg8[%c0_40, %c0_41, %c0_42], %127 {strides = array<i32>} : memref<1x8x32xbf16, #tpu.memory_space<vmem>>, vector<1x8x32xbf16>,
    return
  }
  func.func @transform_0(%arg0: i32) -> (i32, i32, i32) {
    %c0_i32 = arith.constant 0 : i32
    %c0_i32_0 = arith.constant 0 : i32
    %c0_i32_1 = arith.constant 0 : i32
    return %arg0, %c0_i32, %c0_i32_0 : i32, i32, i32
  }
  func.func @transform_1(%arg0: i32) -> (i32, i32) {
    %c0_i32 = arith.constant 0 : i32
    %c0_i32_0 = arith.constant 0 : i32
    %c0_i32_1 = arith.constant 0 : i32
    return %c0_i32, %c0_i32_0 : i32, i32
  }
  func.func @transform_2(%arg0: i32) -> (i32, i32) {
    %c0_i32 = arith.constant 0 : i32
    %c0_i32_0 = arith.constant 0 : i32
    %c0_i32_1 = arith.constant 0 : i32
    return %c0_i32, %c0_i32_0 : i32, i32
  }
  func.func @transform_3(%arg0: i32) -> (i32, i32) {
    %c0_i32 = arith.constant 0 : i32
    %c0_i32_0 = arith.constant 0 : i32
    %c0_i32_1 = arith.constant 0 : i32
    return %c0_i32, %c0_i32_0 : i32, i32
  }
  func.func @transform_4(%arg0: i32) -> (i32, i32) {
    %c0_i32 = arith.constant 0 : i32
    %c0_i32_0 = arith.constant 0 : i32
    %c0_i32_1 = arith.constant 0 : i32
    return %c0_i32, %c0_i32_0 : i32, i32
  }
  func.func @transform_5(%arg0: i32) -> (i32, i32) {
    %c0_i32 = arith.constant 0 : i32
    %c0_i32_0 = arith.constant 0 : i32
    %c0_i32_1 = arith.constant 0 : i32
    return %c0_i32, %c0_i32_0 : i32, i32
  }
  func.func @transform_6(%arg0: i32) -> (i32, i32) {
    %c0_i32 = arith.constant 0 : i32
    %c0_i32_0 = arith.constant 0 : i32
    %c0_i32_1 = arith.constant 0 : i32
    return %c0_i32, %c0_i32_0 : i32, i32
  }
  func.func @transform_7(%arg0: i32) -> (i32, i32, i32) {
    %c0_i32 = arith.constant 0 : i32
    %c0_i32_0 = arith.constant 0 : i32
    %c0_i32_1 = arith.constant 0 : i32
    return %arg0, %c0_i32, %c0_i32_0 : i32, i32, i32
  }
}

module attributes {stable_mosaic.version = 11 : i64} {
  func.func @_mamba_pair_kernel(%arg0: i32, %arg1: memref<1x8x32xbf16, #tpu.memory_space<vmem>>, %arg2: memref<1x32xf32, #tpu.memory_space<vmem>>, %arg3: memref<1x32xf32, #tpu.memory_space<vmem>>, %arg4: memref<32x128xbf16, #tpu.memory_space<vmem>>, %arg5: memref<1x128xf32, #tpu.memory_space<vmem>>, %arg6: memref<3x128xf32, #tpu.memory_space<vmem>>, %arg7: memref<1x128xf32, #tpu.memory_space<vmem>>, %arg8: memref<128x128xbf16, #tpu.memory_space<vmem>>, %arg9: memref<1x128xf32, #tpu.memory_space<vmem>>, %arg10: memref<16x128xbf16, #tpu.memory_space<vmem>>, %arg11: memref<16x1xf32, #tpu.memory_space<vmem>>, %arg12: memref<16x128xf32, #tpu.memory_space<vmem>>, %arg13: memref<1x128xf32, #tpu.memory_space<vmem>>, %arg14: memref<128x32xbf16, #tpu.memory_space<vmem>>, %arg15: memref<1x32xf32, #tpu.memory_space<vmem>>, %arg16: memref<1x8x32xbf16, #tpu.memory_space<vmem>>, %arg17: memref<8x128xf32, #tpu.memory_space<vmem>>, %arg18: memref<8x128xf32, #tpu.memory_space<vmem>>, %arg19: memref<8x128xf32, #tpu.memory_space<vmem>>) attributes {dimension_semantics = [#tpu.dimension_semantics<parallel>], iteration_bounds = array<i64: 2>, scalar_prefetch = 0 : i64, scratch_operands = 3 : i64, tpu.core_type = #tpu.core_type<tc>, window_params = [{transform_indices = @transform_0, window_bounds = array<i64: 1, 8, 32>}, {pipeline_mode = #tpu.pipeline_mode<synchronous>, transform_indices = @transform_1, window_bounds = array<i64: 1, 32>}, {pipeline_mode = #tpu.pipeline_mode<synchronous>, transform_indices = @transform_2, window_bounds = array<i64: 1, 32>}, {pipeline_mode = #tpu.pipeline_mode<synchronous>, transform_indices = @transform_3, window_bounds = array<i64: 32, 128>}, {pipeline_mode = #tpu.pipeline_mode<synchronous>, transform_indices = @transform_4, window_bounds = array<i64: 1, 128>}, {pipeline_mode = #tpu.pipeline_mode<synchronous>, transform_indices = @transform_5, window_bounds = array<i64: 3, 128>}, {pipeline_mode = #tpu.pipeline_mode<synchronous>, transform_indices = @transform_6, window_bounds = array<i64: 1, 128>}, {pipeline_mode = #tpu.pipeline_mode<synchronous>, transform_indices = @transform_7, window_bounds = array<i64: 128, 128>}, {pipeline_mode = #tpu.pipeline_mode<synchronous>, transform_indices = @transform_8, window_bounds = array<i64: 1, 128>}, {pipeline_mode = #tpu.pipeline_mode<synchronous>, transform_indices = @transform_9, window_bounds = array<i64: 16, 128>}, {pipeline_mode = #tpu.pipeline_mode<synchronous>, transform_indices = @transform_10, window_bounds = array<i64: 16, 1>}, {pipeline_mode = #tpu.pipeline_mode<synchronous>, transform_indices = @transform_11, window_bounds = array<i64: 16, 128>}, {pipeline_mode = #tpu.pipeline_mode<synchronous>, transform_indices = @transform_12, window_bounds = array<i64: 1, 128>}, {pipeline_mode = #tpu.pipeline_mode<synchronous>, transform_indices = @transform_13, window_bounds = array<i64: 128, 32>}, {pipeline_mode = #tpu.pipeline_mode<synchronous>, transform_indices = @transform_14, window_bounds = array<i64: 1, 32>}, {transform_indices = @transform_15, window_bounds = array<i64: 1, 8, 32>}]} {
    %c0 = arith.constant 0 : index
    %c0_0 = arith.constant 0 : index
    %c0_1 = arith.constant 0 : index
    %0 = vector.load %arg1[%c0, %c0_0, %c0_1] : memref<1x8x32xbf16, #tpu.memory_space<vmem>>, vector<1x8x32xbf16>
    %1 = vector.shape_cast %0 : vector<1x8x32xbf16> to vector<8x32xbf16>
    %2 = arith.extf %1 : vector<8x32xbf16> to vector<8x32xf32>
    %c0_2 = arith.constant 0 : index
    %c0_3 = arith.constant 0 : index
    %3 = vector.load %arg2[%c0_2, %c0_3] : memref<1x32xf32, #tpu.memory_space<vmem>>, vector<1x32xf32>
    %c0_4 = arith.constant 0 : index
    %c0_5 = arith.constant 0 : index
    %4 = vector.load %arg3[%c0_4, %c0_5] : memref<1x32xf32, #tpu.memory_space<vmem>>, vector<1x32xf32>
    %cst = arith.constant dense<0.000000e+00> : vector<8xf32>
    %5 = vector.multi_reduction <add>, %2, %cst [1] : vector<8x32xf32> to vector<8xf32>
    %6 = vector.shape_cast %5 : vector<8xf32> to vector<8x1xf32>
    %cst_6 = arith.constant 3.200000e+01 : f32
    %7 = vector.broadcast %cst_6 : f32 to vector<8x1xf32>
    %8 = arith.divf %6, %7 : vector<8x1xf32>
    %9 = vector.broadcast %8 : vector<8x1xf32> to vector<8x32xf32>
    %10 = arith.subf %2, %9 : vector<8x32xf32>
    %11 = arith.mulf %10, %10 : vector<8x32xf32>
    %cst_7 = arith.constant dense<0.000000e+00> : vector<8xf32>
    %12 = vector.multi_reduction <add>, %11, %cst_7 [1] : vector<8x32xf32> to vector<8xf32>
    %13 = vector.shape_cast %12 : vector<8xf32> to vector<8x1xf32>
    %cst_8 = arith.constant 3.200000e+01 : f32
    %14 = vector.broadcast %cst_8 : f32 to vector<8x1xf32>
    %15 = arith.divf %13, %14 : vector<8x1xf32>
    %16 = vector.broadcast %8 : vector<8x1xf32> to vector<8x32xf32>
    %17 = arith.subf %2, %16 : vector<8x32xf32>
    %cst_9 = arith.constant 9.99999974E-6 : f32
    %18 = vector.broadcast %cst_9 : f32 to vector<8x1xf32>
    %19 = arith.addf %15, %18 : vector<8x1xf32>
    %20 = math.rsqrt %19 : vector<8x1xf32>
    %21 = vector.broadcast %20 : vector<8x1xf32> to vector<8x32xf32>
    %22 = arith.mulf %17, %21 : vector<8x32xf32>
    %23 = vector.broadcast %3 : vector<1x32xf32> to vector<8x32xf32>
    %24 = arith.mulf %22, %23 : vector<8x32xf32>
    %25 = vector.broadcast %4 : vector<1x32xf32> to vector<8x32xf32>
    %26 = arith.addf %24, %25 : vector<8x32xf32>
    %27 = arith.truncf %26 : vector<8x32xf32> to vector<8x32xbf16>
    %c0_10 = arith.constant 0 : index
    %c0_11 = arith.constant 0 : index
    %28 = vector.load %arg4[%c0_10, %c0_11] : memref<32x128xbf16, #tpu.memory_space<vmem>>, vector<32x128xbf16>
    %cst_12 = arith.constant dense<0.000000e+00> : vector<8x128xf32>
    %29 = tpu.matmul %27, %28, %cst_12 {dimension_numbers = #tpu.dot_dimension_numbers<[1], [0], [0], [1], [0, 0, 1, 1], [], []>} : vector<8x32xbf16>, vector<32x128xbf16>, vector<8x128xf32> -> vector<8x128xf32>
    %c0_13 = arith.constant 0 : index
    %c0_14 = arith.constant 0 : index
    %30 = vector.load %arg5[%c0_13, %c0_14] : memref<1x128xf32, #tpu.memory_space<vmem>>, vector<1x128xf32>
    %31 = vector.broadcast %30 : vector<1x128xf32> to vector<8x128xf32>
    %32 = arith.addf %29, %31 : vector<8x128xf32>
    %c0_15 = arith.constant 0 : index
    %c0_16 = arith.constant 0 : index
    %33 = vector.load %arg6[%c0_15, %c0_16] : memref<3x128xf32, #tpu.memory_space<vmem>>, vector<3x128xf32>
    %34 = tpu.iota {dimensions = array<i32: 0>} : vector<8x128xi32>
    %c0_i32 = arith.constant 0 : i32
    %35 = vector.broadcast %c0_i32 : i32 to vector<8x128xi32>
    %36 = arith.cmpi eq, %34, %35 : vector<8x128xi32>
    %c1_i32 = arith.constant 1 : i32
    %37 = tpu.dynamic_rotate %32 by %c1_i32 dim 0 : vector<8x128xf32>, i32 -> vector<8x128xf32>
    %cst_17 = arith.constant 0.000000e+00 : f32
    %38 = vector.broadcast %cst_17 : f32 to vector<8x128xf32>
    %39 = arith.select %36, %38, %37 : vector<8x128xi1>, vector<8x128xf32>
    %c7_i32 = arith.constant 7 : i32
    %40 = vector.broadcast %c7_i32 : i32 to vector<8x128xi32>
    %41 = arith.cmpi eq, %34, %40 : vector<8x128xi32>
    %c7_i32_18 = arith.constant 7 : i32
    %42 = tpu.dynamic_rotate %32 by %c7_i32_18 dim 0 : vector<8x128xf32>, i32 -> vector<8x128xf32>
    %cst_19 = arith.constant 0.000000e+00 : f32
    %43 = vector.broadcast %cst_19 : f32 to vector<8x128xf32>
    %44 = arith.select %41, %43, %42 : vector<8x128xi1>, vector<8x128xf32>
    %45 = vector.extract_strided_slice %33 {offsets = [0, 0], sizes = [1, 128], strides = [1, 1]} : vector<3x128xf32> to vector<1x128xf32>
    %46 = vector.broadcast %45 : vector<1x128xf32> to vector<8x128xf32>
    %47 = arith.mulf %39, %46 : vector<8x128xf32>
    %48 = vector.extract_strided_slice %33 {offsets = [1, 0], sizes = [1, 128], strides = [1, 1]} : vector<3x128xf32> to vector<1x128xf32>
    %49 = vector.broadcast %48 : vector<1x128xf32> to vector<8x128xf32>
    %50 = arith.mulf %32, %49 : vector<8x128xf32>
    %51 = arith.addf %47, %50 : vector<8x128xf32>
    %52 = vector.extract_strided_slice %33 {offsets = [2, 0], sizes = [1, 128], strides = [1, 1]} : vector<3x128xf32> to vector<1x128xf32>
    %53 = vector.broadcast %52 : vector<1x128xf32> to vector<8x128xf32>
    %54 = arith.mulf %44, %53 : vector<8x128xf32>
    %55 = arith.addf %51, %54 : vector<8x128xf32>
    %c0_20 = arith.constant 0 : index
    %c0_21 = arith.constant 0 : index
    %56 = vector.load %arg7[%c0_20, %c0_21] : memref<1x128xf32, #tpu.memory_space<vmem>>, vector<1x128xf32>
    %57 = vector.broadcast %56 : vector<1x128xf32> to vector<8x128xf32>
    %58 = arith.addf %55, %57 : vector<8x128xf32>
    %59 = arith.negf %58 : vector<8x128xf32>
    %60 = math.exp %59 : vector<8x128xf32>
    %cst_22 = arith.constant 1.000000e+00 : f32
    %61 = vector.broadcast %cst_22 : f32 to vector<8x128xf32>
    %62 = arith.addf %61, %60 : vector<8x128xf32>
    %63 = arith.divf %61, %62 : vector<8x128xf32>
    %64 = arith.mulf %58, %63 : vector<8x128xf32>
    %c0_23 = arith.constant 0 : index
    %c0_24 = arith.constant 0 : index
    %65 = vector.load %arg17[%c0_23, %c0_24] : memref<8x128xf32, #tpu.memory_space<vmem>>, vector<8x128xf32>
    tpu.vector_store %arg17[%c0_23, %c0_24], %64 {strides = array<i32>} : memref<8x128xf32, #tpu.memory_space<vmem>>, vector<8x128xf32>,
    %66 = arith.truncf %64 : vector<8x128xf32> to vector<8x128xbf16>
    %c0_25 = arith.constant 0 : index
    %c0_26 = arith.constant 0 : index
    %67 = vector.load %arg8[%c0_25, %c0_26] : memref<128x128xbf16, #tpu.memory_space<vmem>>, vector<128x128xbf16>
    %cst_27 = arith.constant dense<0.000000e+00> : vector<8x128xf32>
    %68 = tpu.matmul %66, %67, %cst_27 {dimension_numbers = #tpu.dot_dimension_numbers<[1], [0], [0], [1], [0, 0, 1, 1], [], []>} : vector<8x128xbf16>, vector<128x128xbf16>, vector<8x128xf32> -> vector<8x128xf32>
    %c0_28 = arith.constant 0 : index
    %c0_29 = arith.constant 0 : index
    %69 = vector.load %arg9[%c0_28, %c0_29] : memref<1x128xf32, #tpu.memory_space<vmem>>, vector<1x128xf32>
    %70 = vector.broadcast %69 : vector<1x128xf32> to vector<8x128xf32>
    %71 = arith.addf %68, %70 : vector<8x128xf32>
    %cst_30 = arith.constant 0.000000e+00 : f32
    %72 = vector.broadcast %cst_30 : f32 to vector<8x128xf32>
    %73 = arith.maximumf %71, %72 : vector<8x128xf32>
    %74 = math.absf %71 : vector<8x128xf32>
    %cst_31 = arith.constant 0.000000e+00 : f32
    %75 = vector.broadcast %cst_31 : f32 to vector<8x128xf32>
    %76 = arith.subf %75, %74 : vector<8x128xf32>
    %77 = math.exp %76 : vector<8x128xf32>
    %78 = math.log1p %77 : vector<8x128xf32>
    %79 = arith.addf %73, %78 : vector<8x128xf32>
    %c0_32 = arith.constant 0 : index
    %c0_33 = arith.constant 0 : index
    %80 = vector.load %arg18[%c0_32, %c0_33] : memref<8x128xf32, #tpu.memory_space<vmem>>, vector<8x128xf32>
    tpu.vector_store %arg18[%c0_32, %c0_33], %79 {strides = array<i32>} : memref<8x128xf32, #tpu.memory_space<vmem>>, vector<8x128xf32>,
    %c0_34 = arith.constant 0 : index
    %c0_35 = arith.constant 0 : index
    %81 = vector.load %arg12[%c0_34, %c0_35] : memref<16x128xf32, #tpu.memory_space<vmem>>, vector<16x128xf32>
    %c0_36 = arith.constant 0 : index
    %c0_37 = arith.constant 0 : index
    %82 = vector.load %arg13[%c0_36, %c0_37] : memref<1x128xf32, #tpu.memory_space<vmem>>, vector<1x128xf32>
    %c0_38 = arith.constant 0 : index
    %c0_39 = arith.constant 0 : index
    %83 = vector.load %arg10[%c0_38, %c0_39] : memref<16x128xbf16, #tpu.memory_space<vmem>>, vector<16x128xbf16>
    %c0_40 = arith.constant 0 : index
    %c0_41 = arith.constant 0 : index
    %84 = vector.load %arg11[%c0_40, %c0_41] : memref<16x1xf32, #tpu.memory_space<vmem>>, vector<16x1xf32>
    %85 = tpu.iota {dimensions = array<i32: 0>} : vector<16x128xi32>
    %86 = tpu.iota {dimensions = array<i32: 1>} : vector<16x128xi32>
    %c8_i32 = arith.constant 8 : i32
    %87 = vector.broadcast %c8_i32 : i32 to vector<16x128xi32>
    %88 = arith.cmpi slt, %85, %87 : vector<16x128xi32>
    %c64_i32 = arith.constant 64 : i32
    %89 = vector.broadcast %c64_i32 : i32 to vector<16x128xi32>
    %90 = arith.cmpi slt, %86, %89 : vector<16x128xi32>
    %91 = arith.xori %88, %90 : vector<16x128xi1>
    %cst_42 = arith.constant dense<true> : vector<16x128xi1>
    %92 = arith.xori %91, %cst_42 : vector<16x128xi1>
    %cst_43 = arith.constant 0.000000e+00 : f32
    %93 = vector.broadcast %cst_43 : f32 to vector<16x128xf32>
    %c0_i32_44 = arith.constant 0 : i32
    %c8_i32_45 = arith.constant 8 : i32
    %94 = arith.muli %c0_i32_44, %c8_i32_45 : i32
    %95 = tpu.assume_multiple %94, 8 : i32
    %96 = arith.index_cast %95 : i32 to index
    %c0_46 = arith.constant 0 : index
    %97 = vector.load %arg18[%96, %c0_46] : memref<8x128xf32, #tpu.memory_space<vmem>>, vector<8x128xf32>
    %98 = arith.index_cast %95 : i32 to index
    %c0_47 = arith.constant 0 : index
    %99 = vector.load %arg17[%98, %c0_47] : memref<8x128xf32, #tpu.memory_space<vmem>>, vector<8x128xf32>
    %100 = arith.truncf %99 : vector<8x128xf32> to vector<8x128xbf16>
    %cst_48 = arith.constant dense<0.000000e+00> : vector<16x8xf32>
    %101 = tpu.matmul %83, %100, %cst_48 {dimension_numbers = #tpu.dot_dimension_numbers<[1], [1], [0], [0], [0, 0, 1, 0], [], []>} : vector<16x128xbf16>, vector<8x128xbf16>, vector<16x8xf32> -> vector<16x8xf32>
    %102 = vector.broadcast %84 : vector<16x1xf32> to vector<16x8xf32>
    %103 = arith.addf %101, %102 : vector<16x8xf32>
    %104 = vector.extract_strided_slice %97 {offsets = [0, 0], sizes = [1, 128], strides = [1, 1]} : vector<8x128xf32> to vector<1x128xf32>
    %105 = vector.extract_strided_slice %99 {offsets = [0, 0], sizes = [1, 128], strides = [1, 1]} : vector<8x128xf32> to vector<1x128xf32>
    %106 = arith.mulf %104, %105 : vector<1x128xf32>
    %107 = vector.extract_strided_slice %103 {offsets = [0, 0], sizes = [16, 1], strides = [1, 1]} : vector<16x8xf32> to vector<16x1xf32>
    %108 = vector.broadcast %104 : vector<1x128xf32> to vector<16x128xf32>
    %109 = arith.mulf %108, %81 : vector<16x128xf32>
    %110 = math.exp %109 : vector<16x128xf32>
    %111 = arith.mulf %110, %93 : vector<16x128xf32>
    %112 = vector.broadcast %106 : vector<1x128xf32> to vector<16x128xf32>
    %113 = vector.broadcast %107 : vector<16x1xf32> to vector<16x128xf32>
    %114 = arith.mulf %112, %113 : vector<16x128xf32>
    %cst_49 = arith.constant 0.000000e+00 : f32
    %115 = vector.broadcast %cst_49 : f32 to vector<16x128xf32>
    %116 = arith.select %92, %114, %115 : vector<16x128xi1>, vector<16x128xf32>
    %117 = arith.addf %111, %116 : vector<16x128xf32>
    %cst_50 = arith.constant dense<0.000000e+00> : vector<128xf32>
    %118 = vector.multi_reduction <add>, %117, %cst_50 [0] : vector<16x128xf32> to vector<128xf32>
    %119 = vector.shape_cast %118 : vector<128xf32> to vector<1x128xf32>
    %120 = vector.extract_strided_slice %97 {offsets = [1, 0], sizes = [1, 128], strides = [1, 1]} : vector<8x128xf32> to vector<1x128xf32>
    %121 = vector.extract_strided_slice %99 {offsets = [1, 0], sizes = [1, 128], strides = [1, 1]} : vector<8x128xf32> to vector<1x128xf32>
    %122 = arith.mulf %120, %121 : vector<1x128xf32>
    %123 = vector.extract_strided_slice %103 {offsets = [0, 1], sizes = [16, 1], strides = [1, 1]} : vector<16x8xf32> to vector<16x1xf32>
    %124 = vector.broadcast %120 : vector<1x128xf32> to vector<16x128xf32>
    %125 = arith.mulf %124, %81 : vector<16x128xf32>
    %126 = math.exp %125 : vector<16x128xf32>
    %127 = arith.mulf %126, %117 : vector<16x128xf32>
    %128 = vector.broadcast %122 : vector<1x128xf32> to vector<16x128xf32>
    %129 = vector.broadcast %123 : vector<16x1xf32> to vector<16x128xf32>
    %130 = arith.mulf %128, %129 : vector<16x128xf32>
    %cst_51 = arith.constant 0.000000e+00 : f32
    %131 = vector.broadcast %cst_51 : f32 to vector<16x128xf32>
    %132 = arith.select %92, %130, %131 : vector<16x128xi1>, vector<16x128xf32>
    %133 = arith.addf %127, %132 : vector<16x128xf32>
    %cst_52 = arith.constant dense<0.000000e+00> : vector<128xf32>
    %134 = vector.multi_reduction <add>, %133, %cst_52 [0] : vector<16x128xf32> to vector<128xf32>
    %135 = vector.shape_cast %134 : vector<128xf32> to vector<1x128xf32>
    %136 = vector.extract_strided_slice %97 {offsets = [2, 0], sizes = [1, 128], strides = [1, 1]} : vector<8x128xf32> to vector<1x128xf32>
    %137 = vector.extract_strided_slice %99 {offsets = [2, 0], sizes = [1, 128], strides = [1, 1]} : vector<8x128xf32> to vector<1x128xf32>
    %138 = arith.mulf %136, %137 : vector<1x128xf32>
    %139 = vector.extract_strided_slice %103 {offsets = [0, 2], sizes = [16, 1], strides = [1, 1]} : vector<16x8xf32> to vector<16x1xf32>
    %140 = vector.broadcast %136 : vector<1x128xf32> to vector<16x128xf32>
    %141 = arith.mulf %140, %81 : vector<16x128xf32>
    %142 = math.exp %141 : vector<16x128xf32>
    %143 = arith.mulf %142, %133 : vector<16x128xf32>
    %144 = vector.broadcast %138 : vector<1x128xf32> to vector<16x128xf32>
    %145 = vector.broadcast %139 : vector<16x1xf32> to vector<16x128xf32>
    %146 = arith.mulf %144, %145 : vector<16x128xf32>
    %cst_53 = arith.constant 0.000000e+00 : f32
    %147 = vector.broadcast %cst_53 : f32 to vector<16x128xf32>
    %148 = arith.select %92, %146, %147 : vector<16x128xi1>, vector<16x128xf32>
    %149 = arith.addf %143, %148 : vector<16x128xf32>
    %cst_54 = arith.constant dense<0.000000e+00> : vector<128xf32>
    %150 = vector.multi_reduction <add>, %149, %cst_54 [0] : vector<16x128xf32> to vector<128xf32>
    %151 = vector.shape_cast %150 : vector<128xf32> to vector<1x128xf32>
    %152 = vector.extract_strided_slice %97 {offsets = [3, 0], sizes = [1, 128], strides = [1, 1]} : vector<8x128xf32> to vector<1x128xf32>
    %153 = vector.extract_strided_slice %99 {offsets = [3, 0], sizes = [1, 128], strides = [1, 1]} : vector<8x128xf32> to vector<1x128xf32>
    %154 = arith.mulf %152, %153 : vector<1x128xf32>
    %155 = vector.extract_strided_slice %103 {offsets = [0, 3], sizes = [16, 1], strides = [1, 1]} : vector<16x8xf32> to vector<16x1xf32>
    %156 = vector.broadcast %152 : vector<1x128xf32> to vector<16x128xf32>
    %157 = arith.mulf %156, %81 : vector<16x128xf32>
    %158 = math.exp %157 : vector<16x128xf32>
    %159 = arith.mulf %158, %149 : vector<16x128xf32>
    %160 = vector.broadcast %154 : vector<1x128xf32> to vector<16x128xf32>
    %161 = vector.broadcast %155 : vector<16x1xf32> to vector<16x128xf32>
    %162 = arith.mulf %160, %161 : vector<16x128xf32>
    %cst_55 = arith.constant 0.000000e+00 : f32
    %163 = vector.broadcast %cst_55 : f32 to vector<16x128xf32>
    %164 = arith.select %92, %162, %163 : vector<16x128xi1>, vector<16x128xf32>
    %165 = arith.addf %159, %164 : vector<16x128xf32>
    %cst_56 = arith.constant dense<0.000000e+00> : vector<128xf32>
    %166 = vector.multi_reduction <add>, %165, %cst_56 [0] : vector<16x128xf32> to vector<128xf32>
    %167 = vector.shape_cast %166 : vector<128xf32> to vector<1x128xf32>
    %168 = vector.extract_strided_slice %97 {offsets = [4, 0], sizes = [1, 128], strides = [1, 1]} : vector<8x128xf32> to vector<1x128xf32>
    %169 = vector.extract_strided_slice %99 {offsets = [4, 0], sizes = [1, 128], strides = [1, 1]} : vector<8x128xf32> to vector<1x128xf32>
    %170 = arith.mulf %168, %169 : vector<1x128xf32>
    %171 = vector.extract_strided_slice %103 {offsets = [0, 4], sizes = [16, 1], strides = [1, 1]} : vector<16x8xf32> to vector<16x1xf32>
    %172 = vector.broadcast %168 : vector<1x128xf32> to vector<16x128xf32>
    %173 = arith.mulf %172, %81 : vector<16x128xf32>
    %174 = math.exp %173 : vector<16x128xf32>
    %175 = arith.mulf %174, %165 : vector<16x128xf32>
    %176 = vector.broadcast %170 : vector<1x128xf32> to vector<16x128xf32>
    %177 = vector.broadcast %171 : vector<16x1xf32> to vector<16x128xf32>
    %178 = arith.mulf %176, %177 : vector<16x128xf32>
    %cst_57 = arith.constant 0.000000e+00 : f32
    %179 = vector.broadcast %cst_57 : f32 to vector<16x128xf32>
    %180 = arith.select %92, %178, %179 : vector<16x128xi1>, vector<16x128xf32>
    %181 = arith.addf %175, %180 : vector<16x128xf32>
    %cst_58 = arith.constant dense<0.000000e+00> : vector<128xf32>
    %182 = vector.multi_reduction <add>, %181, %cst_58 [0] : vector<16x128xf32> to vector<128xf32>
    %183 = vector.shape_cast %182 : vector<128xf32> to vector<1x128xf32>
    %184 = vector.extract_strided_slice %97 {offsets = [5, 0], sizes = [1, 128], strides = [1, 1]} : vector<8x128xf32> to vector<1x128xf32>
    %185 = vector.extract_strided_slice %99 {offsets = [5, 0], sizes = [1, 128], strides = [1, 1]} : vector<8x128xf32> to vector<1x128xf32>
    %186 = arith.mulf %184, %185 : vector<1x128xf32>
    %187 = vector.extract_strided_slice %103 {offsets = [0, 5], sizes = [16, 1], strides = [1, 1]} : vector<16x8xf32> to vector<16x1xf32>
    %188 = vector.broadcast %184 : vector<1x128xf32> to vector<16x128xf32>
    %189 = arith.mulf %188, %81 : vector<16x128xf32>
    %190 = math.exp %189 : vector<16x128xf32>
    %191 = arith.mulf %190, %181 : vector<16x128xf32>
    %192 = vector.broadcast %186 : vector<1x128xf32> to vector<16x128xf32>
    %193 = vector.broadcast %187 : vector<16x1xf32> to vector<16x128xf32>
    %194 = arith.mulf %192, %193 : vector<16x128xf32>
    %cst_59 = arith.constant 0.000000e+00 : f32
    %195 = vector.broadcast %cst_59 : f32 to vector<16x128xf32>
    %196 = arith.select %92, %194, %195 : vector<16x128xi1>, vector<16x128xf32>
    %197 = arith.addf %191, %196 : vector<16x128xf32>
    %cst_60 = arith.constant dense<0.000000e+00> : vector<128xf32>
    %198 = vector.multi_reduction <add>, %197, %cst_60 [0] : vector<16x128xf32> to vector<128xf32>
    %199 = vector.shape_cast %198 : vector<128xf32> to vector<1x128xf32>
    %200 = vector.extract_strided_slice %97 {offsets = [6, 0], sizes = [1, 128], strides = [1, 1]} : vector<8x128xf32> to vector<1x128xf32>
    %201 = vector.extract_strided_slice %99 {offsets = [6, 0], sizes = [1, 128], strides = [1, 1]} : vector<8x128xf32> to vector<1x128xf32>
    %202 = arith.mulf %200, %201 : vector<1x128xf32>
    %203 = vector.extract_strided_slice %103 {offsets = [0, 6], sizes = [16, 1], strides = [1, 1]} : vector<16x8xf32> to vector<16x1xf32>
    %204 = vector.broadcast %200 : vector<1x128xf32> to vector<16x128xf32>
    %205 = arith.mulf %204, %81 : vector<16x128xf32>
    %206 = math.exp %205 : vector<16x128xf32>
    %207 = arith.mulf %206, %197 : vector<16x128xf32>
    %208 = vector.broadcast %202 : vector<1x128xf32> to vector<16x128xf32>
    %209 = vector.broadcast %203 : vector<16x1xf32> to vector<16x128xf32>
    %210 = arith.mulf %208, %209 : vector<16x128xf32>
    %cst_61 = arith.constant 0.000000e+00 : f32
    %211 = vector.broadcast %cst_61 : f32 to vector<16x128xf32>
    %212 = arith.select %92, %210, %211 : vector<16x128xi1>, vector<16x128xf32>
    %213 = arith.addf %207, %212 : vector<16x128xf32>
    %cst_62 = arith.constant dense<0.000000e+00> : vector<128xf32>
    %214 = vector.multi_reduction <add>, %213, %cst_62 [0] : vector<16x128xf32> to vector<128xf32>
    %215 = vector.shape_cast %214 : vector<128xf32> to vector<1x128xf32>
    %216 = vector.extract_strided_slice %97 {offsets = [7, 0], sizes = [1, 128], strides = [1, 1]} : vector<8x128xf32> to vector<1x128xf32>
    %217 = vector.extract_strided_slice %99 {offsets = [7, 0], sizes = [1, 128], strides = [1, 1]} : vector<8x128xf32> to vector<1x128xf32>
    %218 = arith.mulf %216, %217 : vector<1x128xf32>
    %219 = vector.extract_strided_slice %103 {offsets = [0, 7], sizes = [16, 1], strides = [1, 1]} : vector<16x8xf32> to vector<16x1xf32>
    %220 = vector.broadcast %216 : vector<1x128xf32> to vector<16x128xf32>
    %221 = arith.mulf %220, %81 : vector<16x128xf32>
    %222 = math.exp %221 : vector<16x128xf32>
    %223 = arith.mulf %222, %213 : vector<16x128xf32>
    %224 = vector.broadcast %218 : vector<1x128xf32> to vector<16x128xf32>
    %225 = vector.broadcast %219 : vector<16x1xf32> to vector<16x128xf32>
    %226 = arith.mulf %224, %225 : vector<16x128xf32>
    %cst_63 = arith.constant 0.000000e+00 : f32
    %227 = vector.broadcast %cst_63 : f32 to vector<16x128xf32>
    %228 = arith.select %92, %226, %227 : vector<16x128xi1>, vector<16x128xf32>
    %229 = arith.addf %223, %228 : vector<16x128xf32>
    %cst_64 = arith.constant dense<0.000000e+00> : vector<128xf32>
    %230 = vector.multi_reduction <add>, %229, %cst_64 [0] : vector<16x128xf32> to vector<128xf32>
    %231 = vector.shape_cast %230 : vector<128xf32> to vector<1x128xf32>
    %232 = tpu.concatenate %119, %135, %151, %167, %183, %199, %215, %231 in 0 : vector<1x128xf32>, vector<1x128xf32>, vector<1x128xf32>, vector<1x128xf32>, vector<1x128xf32>, vector<1x128xf32>, vector<1x128xf32>, vector<1x128xf32> -> vector<8x128xf32>
    %233 = arith.index_cast %95 : i32 to index
    %c0_65 = arith.constant 0 : index
    %234 = vector.load %arg19[%233, %c0_65] : memref<8x128xf32, #tpu.memory_space<vmem>>, vector<8x128xf32>
    tpu.vector_store %arg19[%233, %c0_65], %232 {strides = array<i32>} : memref<8x128xf32, #tpu.memory_space<vmem>>, vector<8x128xf32>,
    %c1_i32_66 = arith.constant 1 : i32
    %c0_67 = arith.constant 0 : index
    %c0_68 = arith.constant 0 : index
    %235 = vector.load %arg19[%c0_67, %c0_68] : memref<8x128xf32, #tpu.memory_space<vmem>>, vector<8x128xf32>
    %c0_69 = arith.constant 0 : index
    %c0_70 = arith.constant 0 : index
    %236 = vector.load %arg17[%c0_69, %c0_70] : memref<8x128xf32, #tpu.memory_space<vmem>>, vector<8x128xf32>
    %237 = vector.broadcast %82 : vector<1x128xf32> to vector<8x128xf32>
    %238 = arith.mulf %236, %237 : vector<8x128xf32>
    %239 = arith.addf %235, %238 : vector<8x128xf32>
    %240 = arith.truncf %239 : vector<8x128xf32> to vector<8x128xbf16>
    %c0_71 = arith.constant 0 : index
    %c0_72 = arith.constant 0 : index
    %241 = vector.load %arg14[%c0_71, %c0_72] : memref<128x32xbf16, #tpu.memory_space<vmem>>, vector<128x32xbf16>
    %cst_73 = arith.constant dense<0.000000e+00> : vector<8x32xf32>
    %242 = tpu.matmul %240, %241, %cst_73 {dimension_numbers = #tpu.dot_dimension_numbers<[1], [0], [0], [1], [0, 0, 1, 1], [], []>} : vector<8x128xbf16>, vector<128x32xbf16>, vector<8x32xf32> -> vector<8x32xf32>
    %c0_74 = arith.constant 0 : index
    %c0_75 = arith.constant 0 : index
    %243 = vector.load %arg15[%c0_74, %c0_75] : memref<1x32xf32, #tpu.memory_space<vmem>>, vector<1x32xf32>
    %244 = vector.broadcast %243 : vector<1x32xf32> to vector<8x32xf32>
    %245 = arith.addf %242, %244 : vector<8x32xf32>
    %246 = arith.truncf %245 : vector<8x32xf32> to vector<8x32xbf16>
    %c0_76 = arith.constant 0 : index
    %c0_77 = arith.constant 0 : index
    %c0_78 = arith.constant 0 : index
    %247 = vector.load %arg16[%c0_76, %c0_77, %c0_78] : memref<1x8x32xbf16, #tpu.memory_space<vmem>>, vector<1x8x32xbf16>
    %248 = vector.shape_cast %247 : vector<1x8x32xbf16> to vector<8x32xbf16>
    %249 = vector.shape_cast %246 : vector<8x32xbf16> to vector<1x8x32xbf16>
    tpu.vector_store %arg16[%c0_76, %c0_77, %c0_78], %249 {strides = array<i32>} : memref<1x8x32xbf16, #tpu.memory_space<vmem>>, vector<1x8x32xbf16>,
    return
  }
  func.func @transform_0(%arg0: i32) -> (i32, i32, i32) {
    %c0_i32 = arith.constant 0 : i32
    %c0_i32_0 = arith.constant 0 : i32
    %c0_i32_1 = arith.constant 0 : i32
    return %arg0, %c0_i32, %c0_i32_0 : i32, i32, i32
  }
  func.func @transform_1(%arg0: i32) -> (i32, i32) {
    %c0_i32 = arith.constant 0 : i32
    %c0_i32_0 = arith.constant 0 : i32
    %c0_i32_1 = arith.constant 0 : i32
    return %c0_i32, %c0_i32_0 : i32, i32
  }
  func.func @transform_2(%arg0: i32) -> (i32, i32) {
    %c0_i32 = arith.constant 0 : i32
    %c0_i32_0 = arith.constant 0 : i32
    %c0_i32_1 = arith.constant 0 : i32
    return %c0_i32, %c0_i32_0 : i32, i32
  }
  func.func @transform_3(%arg0: i32) -> (i32, i32) {
    %c0_i32 = arith.constant 0 : i32
    %c0_i32_0 = arith.constant 0 : i32
    %c0_i32_1 = arith.constant 0 : i32
    return %c0_i32, %c0_i32_0 : i32, i32
  }
  func.func @transform_4(%arg0: i32) -> (i32, i32) {
    %c0_i32 = arith.constant 0 : i32
    %c0_i32_0 = arith.constant 0 : i32
    %c0_i32_1 = arith.constant 0 : i32
    return %c0_i32, %c0_i32_0 : i32, i32
  }
  func.func @transform_5(%arg0: i32) -> (i32, i32) {
    %c0_i32 = arith.constant 0 : i32
    %c0_i32_0 = arith.constant 0 : i32
    %c0_i32_1 = arith.constant 0 : i32
    return %c0_i32, %c0_i32_0 : i32, i32
  }
  func.func @transform_6(%arg0: i32) -> (i32, i32) {
    %c0_i32 = arith.constant 0 : i32
    %c0_i32_0 = arith.constant 0 : i32
    %c0_i32_1 = arith.constant 0 : i32
    return %c0_i32, %c0_i32_0 : i32, i32
  }
  func.func @transform_7(%arg0: i32) -> (i32, i32) {
    %c0_i32 = arith.constant 0 : i32
    %c0_i32_0 = arith.constant 0 : i32
    %c0_i32_1 = arith.constant 0 : i32
    return %c0_i32, %c0_i32_0 : i32, i32
  }
  func.func @transform_8(%arg0: i32) -> (i32, i32) {
    %c0_i32 = arith.constant 0 : i32
    %c0_i32_0 = arith.constant 0 : i32
    %c0_i32_1 = arith.constant 0 : i32
    return %c0_i32, %c0_i32_0 : i32, i32
  }
  func.func @transform_9(%arg0: i32) -> (i32, i32) {
    %c0_i32 = arith.constant 0 : i32
    %c0_i32_0 = arith.constant 0 : i32
    %c0_i32_1 = arith.constant 0 : i32
    return %c0_i32, %c0_i32_0 : i32, i32
  }
  func.func @transform_10(%arg0: i32) -> (i32, i32) {
    %c0_i32 = arith.constant 0 : i32
    %c0_i32_0 = arith.constant 0 : i32
    %c0_i32_1 = arith.constant 0 : i32
    return %c0_i32, %c0_i32_0 : i32, i32
  }
  func.func @transform_11(%arg0: i32) -> (i32, i32) {
    %c0_i32 = arith.constant 0 : i32
    %c0_i32_0 = arith.constant 0 : i32
    %c0_i32_1 = arith.constant 0 : i32
    return %c0_i32, %c0_i32_0 : i32, i32
  }
  func.func @transform_12(%arg0: i32) -> (i32, i32) {
    %c0_i32 = arith.constant 0 : i32
    %c0_i32_0 = arith.constant 0 : i32
    %c0_i32_1 = arith.constant 0 : i32
    return %c0_i32, %c0_i32_0 : i32, i32
  }
  func.func @transform_13(%arg0: i32) -> (i32, i32) {
    %c0_i32 = arith.constant 0 : i32
    %c0_i32_0 = arith.constant 0 : i32
    %c0_i32_1 = arith.constant 0 : i32
    return %c0_i32, %c0_i32_0 : i32, i32
  }
  func.func @transform_14(%arg0: i32) -> (i32, i32) {
    %c0_i32 = arith.constant 0 : i32
    %c0_i32_0 = arith.constant 0 : i32
    %c0_i32_1 = arith.constant 0 : i32
    return %c0_i32, %c0_i32_0 : i32, i32
  }
  func.func @transform_15(%arg0: i32) -> (i32, i32, i32) {
    %c0_i32 = arith.constant 0 : i32
    %c0_i32_0 = arith.constant 0 : i32
    %c0_i32_1 = arith.constant 0 : i32
    return %arg0, %c0_i32, %c0_i32_0 : i32, i32, i32
  }
}

module attributes {stable_mosaic.version = 11 : i64} {
  func.func @_mamba_pair_kernel(%arg0: i32, %arg1: memref<1x8x32xbf16, #tpu.memory_space<vmem>>, %arg2: memref<1x32xf32, #tpu.memory_space<vmem>>, %arg3: memref<1x32xf32, #tpu.memory_space<vmem>>, %arg4: memref<32x128xbf16, #tpu.memory_space<vmem>>, %arg5: memref<1x128xf32, #tpu.memory_space<vmem>>, %arg6: memref<3x128xf32, #tpu.memory_space<vmem>>, %arg7: memref<1x128xf32, #tpu.memory_space<vmem>>, %arg8: memref<128x128xbf16, #tpu.memory_space<vmem>>, %arg9: memref<1x128xf32, #tpu.memory_space<vmem>>, %arg10: memref<16x128xbf16, #tpu.memory_space<vmem>>, %arg11: memref<16x1xf32, #tpu.memory_space<vmem>>, %arg12: memref<16x128xf32, #tpu.memory_space<vmem>>, %arg13: memref<1x128xf32, #tpu.memory_space<vmem>>, %arg14: memref<128x32xbf16, #tpu.memory_space<vmem>>, %arg15: memref<1x32xf32, #tpu.memory_space<vmem>>, %arg16: memref<1x8x32xbf16, #tpu.memory_space<vmem>>, %arg17: memref<8x128xf32, #tpu.memory_space<vmem>>, %arg18: memref<8x128xf32, #tpu.memory_space<vmem>>, %arg19: memref<8x128xf32, #tpu.memory_space<vmem>>) attributes {dimension_semantics = [#tpu.dimension_semantics<parallel>], iteration_bounds = array<i64: 2>, scalar_prefetch = 0 : i64, scratch_operands = 3 : i64, tpu.core_type = #tpu.core_type<tc>, window_params = [{transform_indices = @transform_0, window_bounds = array<i64: 1, 8, 32>}, {pipeline_mode = #tpu.pipeline_mode<synchronous>, transform_indices = @transform_1, window_bounds = array<i64: 1, 32>}, {pipeline_mode = #tpu.pipeline_mode<synchronous>, transform_indices = @transform_2, window_bounds = array<i64: 1, 32>}, {pipeline_mode = #tpu.pipeline_mode<synchronous>, transform_indices = @transform_3, window_bounds = array<i64: 32, 128>}, {pipeline_mode = #tpu.pipeline_mode<synchronous>, transform_indices = @transform_4, window_bounds = array<i64: 1, 128>}, {pipeline_mode = #tpu.pipeline_mode<synchronous>, transform_indices = @transform_5, window_bounds = array<i64: 3, 128>}, {pipeline_mode = #tpu.pipeline_mode<synchronous>, transform_indices = @transform_6, window_bounds = array<i64: 1, 128>}, {pipeline_mode = #tpu.pipeline_mode<synchronous>, transform_indices = @transform_7, window_bounds = array<i64: 128, 128>}, {pipeline_mode = #tpu.pipeline_mode<synchronous>, transform_indices = @transform_8, window_bounds = array<i64: 1, 128>}, {pipeline_mode = #tpu.pipeline_mode<synchronous>, transform_indices = @transform_9, window_bounds = array<i64: 16, 128>}, {pipeline_mode = #tpu.pipeline_mode<synchronous>, transform_indices = @transform_10, window_bounds = array<i64: 16, 1>}, {pipeline_mode = #tpu.pipeline_mode<synchronous>, transform_indices = @transform_11, window_bounds = array<i64: 16, 128>}, {pipeline_mode = #tpu.pipeline_mode<synchronous>, transform_indices = @transform_12, window_bounds = array<i64: 1, 128>}, {pipeline_mode = #tpu.pipeline_mode<synchronous>, transform_indices = @transform_13, window_bounds = array<i64: 128, 32>}, {pipeline_mode = #tpu.pipeline_mode<synchronous>, transform_indices = @transform_14, window_bounds = array<i64: 1, 32>}, {transform_indices = @transform_15, window_bounds = array<i64: 1, 8, 32>}]} {
    %c0 = arith.constant 0 : index
    %c0_0 = arith.constant 0 : index
    %c0_1 = arith.constant 0 : index
    %0 = vector.load %arg1[%c0, %c0_0, %c0_1] : memref<1x8x32xbf16, #tpu.memory_space<vmem>>, vector<1x8x32xbf16>
    %1 = vector.shape_cast %0 : vector<1x8x32xbf16> to vector<8x32xbf16>
    %2 = arith.extf %1 : vector<8x32xbf16> to vector<8x32xf32>
    %c0_2 = arith.constant 0 : index
    %c0_3 = arith.constant 0 : index
    %3 = vector.load %arg2[%c0_2, %c0_3] : memref<1x32xf32, #tpu.memory_space<vmem>>, vector<1x32xf32>
    %c0_4 = arith.constant 0 : index
    %c0_5 = arith.constant 0 : index
    %4 = vector.load %arg3[%c0_4, %c0_5] : memref<1x32xf32, #tpu.memory_space<vmem>>, vector<1x32xf32>
    %cst = arith.constant dense<0.000000e+00> : vector<8xf32>
    %5 = vector.multi_reduction <add>, %2, %cst [1] : vector<8x32xf32> to vector<8xf32>
    %6 = vector.shape_cast %5 : vector<8xf32> to vector<8x1xf32>
    %cst_6 = arith.constant 3.200000e+01 : f32
    %7 = vector.broadcast %cst_6 : f32 to vector<8x1xf32>
    %8 = arith.divf %6, %7 : vector<8x1xf32>
    %9 = vector.broadcast %8 : vector<8x1xf32> to vector<8x32xf32>
    %10 = arith.subf %2, %9 : vector<8x32xf32>
    %11 = arith.mulf %10, %10 : vector<8x32xf32>
    %cst_7 = arith.constant dense<0.000000e+00> : vector<8xf32>
    %12 = vector.multi_reduction <add>, %11, %cst_7 [1] : vector<8x32xf32> to vector<8xf32>
    %13 = vector.shape_cast %12 : vector<8xf32> to vector<8x1xf32>
    %cst_8 = arith.constant 3.200000e+01 : f32
    %14 = vector.broadcast %cst_8 : f32 to vector<8x1xf32>
    %15 = arith.divf %13, %14 : vector<8x1xf32>
    %16 = vector.broadcast %8 : vector<8x1xf32> to vector<8x32xf32>
    %17 = arith.subf %2, %16 : vector<8x32xf32>
    %cst_9 = arith.constant 9.99999974E-6 : f32
    %18 = vector.broadcast %cst_9 : f32 to vector<8x1xf32>
    %19 = arith.addf %15, %18 : vector<8x1xf32>
    %20 = math.rsqrt %19 : vector<8x1xf32>
    %21 = vector.broadcast %20 : vector<8x1xf32> to vector<8x32xf32>
    %22 = arith.mulf %17, %21 : vector<8x32xf32>
    %23 = vector.broadcast %3 : vector<1x32xf32> to vector<8x32xf32>
    %24 = arith.mulf %22, %23 : vector<8x32xf32>
    %25 = vector.broadcast %4 : vector<1x32xf32> to vector<8x32xf32>
    %26 = arith.addf %24, %25 : vector<8x32xf32>
    %27 = arith.truncf %26 : vector<8x32xf32> to vector<8x32xbf16>
    %c0_10 = arith.constant 0 : index
    %c0_11 = arith.constant 0 : index
    %28 = vector.load %arg4[%c0_10, %c0_11] : memref<32x128xbf16, #tpu.memory_space<vmem>>, vector<32x128xbf16>
    %cst_12 = arith.constant dense<0.000000e+00> : vector<8x128xf32>
    %29 = tpu.matmul %27, %28, %cst_12 {dimension_numbers = #tpu.dot_dimension_numbers<[1], [0], [0], [1], [0, 0, 1, 1], [], []>} : vector<8x32xbf16>, vector<32x128xbf16>, vector<8x128xf32> -> vector<8x128xf32>
    %c0_13 = arith.constant 0 : index
    %c0_14 = arith.constant 0 : index
    %30 = vector.load %arg5[%c0_13, %c0_14] : memref<1x128xf32, #tpu.memory_space<vmem>>, vector<1x128xf32>
    %31 = vector.broadcast %30 : vector<1x128xf32> to vector<8x128xf32>
    %32 = arith.addf %29, %31 : vector<8x128xf32>
    %c0_15 = arith.constant 0 : index
    %c0_16 = arith.constant 0 : index
    %33 = vector.load %arg6[%c0_15, %c0_16] : memref<3x128xf32, #tpu.memory_space<vmem>>, vector<3x128xf32>
    %34 = tpu.iota {dimensions = array<i32: 0>} : vector<8x128xi32>
    %c0_i32 = arith.constant 0 : i32
    %35 = vector.broadcast %c0_i32 : i32 to vector<8x128xi32>
    %36 = arith.cmpi eq, %34, %35 : vector<8x128xi32>
    %c1_i32 = arith.constant 1 : i32
    %37 = tpu.dynamic_rotate %32 by %c1_i32 dim 0 : vector<8x128xf32>, i32 -> vector<8x128xf32>
    %cst_17 = arith.constant 0.000000e+00 : f32
    %38 = vector.broadcast %cst_17 : f32 to vector<8x128xf32>
    %39 = arith.select %36, %38, %37 : vector<8x128xi1>, vector<8x128xf32>
    %c7_i32 = arith.constant 7 : i32
    %40 = vector.broadcast %c7_i32 : i32 to vector<8x128xi32>
    %41 = arith.cmpi eq, %34, %40 : vector<8x128xi32>
    %c7_i32_18 = arith.constant 7 : i32
    %42 = tpu.dynamic_rotate %32 by %c7_i32_18 dim 0 : vector<8x128xf32>, i32 -> vector<8x128xf32>
    %cst_19 = arith.constant 0.000000e+00 : f32
    %43 = vector.broadcast %cst_19 : f32 to vector<8x128xf32>
    %44 = arith.select %41, %43, %42 : vector<8x128xi1>, vector<8x128xf32>
    %45 = vector.extract_strided_slice %33 {offsets = [0, 0], sizes = [1, 128], strides = [1, 1]} : vector<3x128xf32> to vector<1x128xf32>
    %46 = vector.broadcast %45 : vector<1x128xf32> to vector<8x128xf32>
    %47 = arith.mulf %39, %46 : vector<8x128xf32>
    %48 = vector.extract_strided_slice %33 {offsets = [1, 0], sizes = [1, 128], strides = [1, 1]} : vector<3x128xf32> to vector<1x128xf32>
    %49 = vector.broadcast %48 : vector<1x128xf32> to vector<8x128xf32>
    %50 = arith.mulf %32, %49 : vector<8x128xf32>
    %51 = arith.addf %47, %50 : vector<8x128xf32>
    %52 = vector.extract_strided_slice %33 {offsets = [2, 0], sizes = [1, 128], strides = [1, 1]} : vector<3x128xf32> to vector<1x128xf32>
    %53 = vector.broadcast %52 : vector<1x128xf32> to vector<8x128xf32>
    %54 = arith.mulf %44, %53 : vector<8x128xf32>
    %55 = arith.addf %51, %54 : vector<8x128xf32>
    %c0_20 = arith.constant 0 : index
    %c0_21 = arith.constant 0 : index
    %56 = vector.load %arg7[%c0_20, %c0_21] : memref<1x128xf32, #tpu.memory_space<vmem>>, vector<1x128xf32>
    %57 = vector.broadcast %56 : vector<1x128xf32> to vector<8x128xf32>
    %58 = arith.addf %55, %57 : vector<8x128xf32>
    %59 = arith.negf %58 : vector<8x128xf32>
    %60 = math.exp %59 : vector<8x128xf32>
    %cst_22 = arith.constant 1.000000e+00 : f32
    %61 = vector.broadcast %cst_22 : f32 to vector<8x128xf32>
    %62 = arith.addf %61, %60 : vector<8x128xf32>
    %63 = arith.divf %61, %62 : vector<8x128xf32>
    %64 = arith.mulf %58, %63 : vector<8x128xf32>
    %c0_23 = arith.constant 0 : index
    %c0_24 = arith.constant 0 : index
    %65 = vector.load %arg17[%c0_23, %c0_24] : memref<8x128xf32, #tpu.memory_space<vmem>>, vector<8x128xf32>
    tpu.vector_store %arg17[%c0_23, %c0_24], %64 {strides = array<i32>} : memref<8x128xf32, #tpu.memory_space<vmem>>, vector<8x128xf32>,
    %66 = arith.truncf %64 : vector<8x128xf32> to vector<8x128xbf16>
    %c0_25 = arith.constant 0 : index
    %c0_26 = arith.constant 0 : index
    %67 = vector.load %arg8[%c0_25, %c0_26] : memref<128x128xbf16, #tpu.memory_space<vmem>>, vector<128x128xbf16>
    %cst_27 = arith.constant dense<0.000000e+00> : vector<8x128xf32>
    %68 = tpu.matmul %66, %67, %cst_27 {dimension_numbers = #tpu.dot_dimension_numbers<[1], [0], [0], [1], [0, 0, 1, 1], [], []>} : vector<8x128xbf16>, vector<128x128xbf16>, vector<8x128xf32> -> vector<8x128xf32>
    %c0_28 = arith.constant 0 : index
    %c0_29 = arith.constant 0 : index
    %69 = vector.load %arg9[%c0_28, %c0_29] : memref<1x128xf32, #tpu.memory_space<vmem>>, vector<1x128xf32>
    %70 = vector.broadcast %69 : vector<1x128xf32> to vector<8x128xf32>
    %71 = arith.addf %68, %70 : vector<8x128xf32>
    %cst_30 = arith.constant 0.000000e+00 : f32
    %72 = vector.broadcast %cst_30 : f32 to vector<8x128xf32>
    %73 = arith.maximumf %71, %72 : vector<8x128xf32>
    %74 = math.absf %71 : vector<8x128xf32>
    %cst_31 = arith.constant 0.000000e+00 : f32
    %75 = vector.broadcast %cst_31 : f32 to vector<8x128xf32>
    %76 = arith.subf %75, %74 : vector<8x128xf32>
    %77 = math.exp %76 : vector<8x128xf32>
    %78 = math.log1p %77 : vector<8x128xf32>
    %79 = arith.addf %73, %78 : vector<8x128xf32>
    %c0_32 = arith.constant 0 : index
    %c0_33 = arith.constant 0 : index
    %80 = vector.load %arg18[%c0_32, %c0_33] : memref<8x128xf32, #tpu.memory_space<vmem>>, vector<8x128xf32>
    tpu.vector_store %arg18[%c0_32, %c0_33], %79 {strides = array<i32>} : memref<8x128xf32, #tpu.memory_space<vmem>>, vector<8x128xf32>,
    %c0_34 = arith.constant 0 : index
    %c0_35 = arith.constant 0 : index
    %81 = vector.load %arg12[%c0_34, %c0_35] : memref<16x128xf32, #tpu.memory_space<vmem>>, vector<16x128xf32>
    %c0_36 = arith.constant 0 : index
    %c0_37 = arith.constant 0 : index
    %82 = vector.load %arg13[%c0_36, %c0_37] : memref<1x128xf32, #tpu.memory_space<vmem>>, vector<1x128xf32>
    %c0_38 = arith.constant 0 : index
    %c0_39 = arith.constant 0 : index
    %83 = vector.load %arg10[%c0_38, %c0_39] : memref<16x128xbf16, #tpu.memory_space<vmem>>, vector<16x128xbf16>
    %c0_40 = arith.constant 0 : index
    %c0_41 = arith.constant 0 : index
    %84 = vector.load %arg11[%c0_40, %c0_41] : memref<16x1xf32, #tpu.memory_space<vmem>>, vector<16x1xf32>
    %85 = tpu.iota {dimensions = array<i32: 0>} : vector<16x128xi32>
    %86 = tpu.iota {dimensions = array<i32: 1>} : vector<16x128xi32>
    %c8_i32 = arith.constant 8 : i32
    %87 = vector.broadcast %c8_i32 : i32 to vector<16x128xi32>
    %88 = arith.cmpi slt, %85, %87 : vector<16x128xi32>
    %c64_i32 = arith.constant 64 : i32
    %89 = vector.broadcast %c64_i32 : i32 to vector<16x128xi32>
    %90 = arith.cmpi slt, %86, %89 : vector<16x128xi32>
    %91 = arith.xori %88, %90 : vector<16x128xi1>
    %cst_42 = arith.constant dense<true> : vector<16x128xi1>
    %92 = arith.xori %91, %cst_42 : vector<16x128xi1>
    %cst_43 = arith.constant 0.000000e+00 : f32
    %93 = vector.broadcast %cst_43 : f32 to vector<16x128xf32>
    %c0_i32_44 = arith.constant 0 : i32
    %c8_i32_45 = arith.constant 8 : i32
    %94 = arith.muli %c0_i32_44, %c8_i32_45 : i32
    %95 = tpu.assume_multiple %94, 8 : i32
    %96 = arith.index_cast %95 : i32 to index
    %c0_46 = arith.constant 0 : index
    %97 = vector.load %arg18[%96, %c0_46] : memref<8x128xf32, #tpu.memory_space<vmem>>, vector<8x128xf32>
    %98 = arith.index_cast %95 : i32 to index
    %c0_47 = arith.constant 0 : index
    %99 = vector.load %arg17[%98, %c0_47] : memref<8x128xf32, #tpu.memory_space<vmem>>, vector<8x128xf32>
    %100 = arith.truncf %99 : vector<8x128xf32> to vector<8x128xbf16>
    %cst_48 = arith.constant dense<0.000000e+00> : vector<16x8xf32>
    %101 = tpu.matmul %83, %100, %cst_48 {dimension_numbers = #tpu.dot_dimension_numbers<[1], [1], [0], [0], [0, 0, 1, 0], [], []>} : vector<16x128xbf16>, vector<8x128xbf16>, vector<16x8xf32> -> vector<16x8xf32>
    %102 = vector.broadcast %84 : vector<16x1xf32> to vector<16x8xf32>
    %103 = arith.addf %101, %102 : vector<16x8xf32>
    %104 = vector.extract_strided_slice %97 {offsets = [0, 0], sizes = [1, 128], strides = [1, 1]} : vector<8x128xf32> to vector<1x128xf32>
    %105 = vector.extract_strided_slice %99 {offsets = [0, 0], sizes = [1, 128], strides = [1, 1]} : vector<8x128xf32> to vector<1x128xf32>
    %106 = arith.mulf %104, %105 : vector<1x128xf32>
    %107 = vector.extract_strided_slice %103 {offsets = [0, 0], sizes = [16, 1], strides = [1, 1]} : vector<16x8xf32> to vector<16x1xf32>
    %108 = vector.broadcast %104 : vector<1x128xf32> to vector<16x128xf32>
    %109 = arith.mulf %108, %81 : vector<16x128xf32>
    %110 = math.exp %109 : vector<16x128xf32>
    %111 = arith.mulf %110, %93 : vector<16x128xf32>
    %112 = vector.broadcast %106 : vector<1x128xf32> to vector<16x128xf32>
    %113 = vector.broadcast %107 : vector<16x1xf32> to vector<16x128xf32>
    %114 = arith.mulf %112, %113 : vector<16x128xf32>
    %cst_49 = arith.constant 0.000000e+00 : f32
    %115 = vector.broadcast %cst_49 : f32 to vector<16x128xf32>
    %116 = arith.select %92, %114, %115 : vector<16x128xi1>, vector<16x128xf32>
    %117 = arith.addf %111, %116 : vector<16x128xf32>
    %cst_50 = arith.constant dense<0.000000e+00> : vector<128xf32>
    %118 = vector.multi_reduction <add>, %117, %cst_50 [0] : vector<16x128xf32> to vector<128xf32>
    %119 = vector.shape_cast %118 : vector<128xf32> to vector<1x128xf32>
    %120 = vector.extract_strided_slice %97 {offsets = [1, 0], sizes = [1, 128], strides = [1, 1]} : vector<8x128xf32> to vector<1x128xf32>
    %121 = vector.extract_strided_slice %99 {offsets = [1, 0], sizes = [1, 128], strides = [1, 1]} : vector<8x128xf32> to vector<1x128xf32>
    %122 = arith.mulf %120, %121 : vector<1x128xf32>
    %123 = vector.extract_strided_slice %103 {offsets = [0, 1], sizes = [16, 1], strides = [1, 1]} : vector<16x8xf32> to vector<16x1xf32>
    %124 = vector.broadcast %120 : vector<1x128xf32> to vector<16x128xf32>
    %125 = arith.mulf %124, %81 : vector<16x128xf32>
    %126 = math.exp %125 : vector<16x128xf32>
    %127 = arith.mulf %126, %117 : vector<16x128xf32>
    %128 = vector.broadcast %122 : vector<1x128xf32> to vector<16x128xf32>
    %129 = vector.broadcast %123 : vector<16x1xf32> to vector<16x128xf32>
    %130 = arith.mulf %128, %129 : vector<16x128xf32>
    %cst_51 = arith.constant 0.000000e+00 : f32
    %131 = vector.broadcast %cst_51 : f32 to vector<16x128xf32>
    %132 = arith.select %92, %130, %131 : vector<16x128xi1>, vector<16x128xf32>
    %133 = arith.addf %127, %132 : vector<16x128xf32>
    %cst_52 = arith.constant dense<0.000000e+00> : vector<128xf32>
    %134 = vector.multi_reduction <add>, %133, %cst_52 [0] : vector<16x128xf32> to vector<128xf32>
    %135 = vector.shape_cast %134 : vector<128xf32> to vector<1x128xf32>
    %136 = vector.extract_strided_slice %97 {offsets = [2, 0], sizes = [1, 128], strides = [1, 1]} : vector<8x128xf32> to vector<1x128xf32>
    %137 = vector.extract_strided_slice %99 {offsets = [2, 0], sizes = [1, 128], strides = [1, 1]} : vector<8x128xf32> to vector<1x128xf32>
    %138 = arith.mulf %136, %137 : vector<1x128xf32>
    %139 = vector.extract_strided_slice %103 {offsets = [0, 2], sizes = [16, 1], strides = [1, 1]} : vector<16x8xf32> to vector<16x1xf32>
    %140 = vector.broadcast %136 : vector<1x128xf32> to vector<16x128xf32>
    %141 = arith.mulf %140, %81 : vector<16x128xf32>
    %142 = math.exp %141 : vector<16x128xf32>
    %143 = arith.mulf %142, %133 : vector<16x128xf32>
    %144 = vector.broadcast %138 : vector<1x128xf32> to vector<16x128xf32>
    %145 = vector.broadcast %139 : vector<16x1xf32> to vector<16x128xf32>
    %146 = arith.mulf %144, %145 : vector<16x128xf32>
    %cst_53 = arith.constant 0.000000e+00 : f32
    %147 = vector.broadcast %cst_53 : f32 to vector<16x128xf32>
    %148 = arith.select %92, %146, %147 : vector<16x128xi1>, vector<16x128xf32>
    %149 = arith.addf %143, %148 : vector<16x128xf32>
    %cst_54 = arith.constant dense<0.000000e+00> : vector<128xf32>
    %150 = vector.multi_reduction <add>, %149, %cst_54 [0] : vector<16x128xf32> to vector<128xf32>
    %151 = vector.shape_cast %150 : vector<128xf32> to vector<1x128xf32>
    %152 = vector.extract_strided_slice %97 {offsets = [3, 0], sizes = [1, 128], strides = [1, 1]} : vector<8x128xf32> to vector<1x128xf32>
    %153 = vector.extract_strided_slice %99 {offsets = [3, 0], sizes = [1, 128], strides = [1, 1]} : vector<8x128xf32> to vector<1x128xf32>
    %154 = arith.mulf %152, %153 : vector<1x128xf32>
    %155 = vector.extract_strided_slice %103 {offsets = [0, 3], sizes = [16, 1], strides = [1, 1]} : vector<16x8xf32> to vector<16x1xf32>
    %156 = vector.broadcast %152 : vector<1x128xf32> to vector<16x128xf32>
    %157 = arith.mulf %156, %81 : vector<16x128xf32>
    %158 = math.exp %157 : vector<16x128xf32>
    %159 = arith.mulf %158, %149 : vector<16x128xf32>
    %160 = vector.broadcast %154 : vector<1x128xf32> to vector<16x128xf32>
    %161 = vector.broadcast %155 : vector<16x1xf32> to vector<16x128xf32>
    %162 = arith.mulf %160, %161 : vector<16x128xf32>
    %cst_55 = arith.constant 0.000000e+00 : f32
    %163 = vector.broadcast %cst_55 : f32 to vector<16x128xf32>
    %164 = arith.select %92, %162, %163 : vector<16x128xi1>, vector<16x128xf32>
    %165 = arith.addf %159, %164 : vector<16x128xf32>
    %cst_56 = arith.constant dense<0.000000e+00> : vector<128xf32>
    %166 = vector.multi_reduction <add>, %165, %cst_56 [0] : vector<16x128xf32> to vector<128xf32>
    %167 = vector.shape_cast %166 : vector<128xf32> to vector<1x128xf32>
    %168 = vector.extract_strided_slice %97 {offsets = [4, 0], sizes = [1, 128], strides = [1, 1]} : vector<8x128xf32> to vector<1x128xf32>
    %169 = vector.extract_strided_slice %99 {offsets = [4, 0], sizes = [1, 128], strides = [1, 1]} : vector<8x128xf32> to vector<1x128xf32>
    %170 = arith.mulf %168, %169 : vector<1x128xf32>
    %171 = vector.extract_strided_slice %103 {offsets = [0, 4], sizes = [16, 1], strides = [1, 1]} : vector<16x8xf32> to vector<16x1xf32>
    %172 = vector.broadcast %168 : vector<1x128xf32> to vector<16x128xf32>
    %173 = arith.mulf %172, %81 : vector<16x128xf32>
    %174 = math.exp %173 : vector<16x128xf32>
    %175 = arith.mulf %174, %165 : vector<16x128xf32>
    %176 = vector.broadcast %170 : vector<1x128xf32> to vector<16x128xf32>
    %177 = vector.broadcast %171 : vector<16x1xf32> to vector<16x128xf32>
    %178 = arith.mulf %176, %177 : vector<16x128xf32>
    %cst_57 = arith.constant 0.000000e+00 : f32
    %179 = vector.broadcast %cst_57 : f32 to vector<16x128xf32>
    %180 = arith.select %92, %178, %179 : vector<16x128xi1>, vector<16x128xf32>
    %181 = arith.addf %175, %180 : vector<16x128xf32>
    %cst_58 = arith.constant dense<0.000000e+00> : vector<128xf32>
    %182 = vector.multi_reduction <add>, %181, %cst_58 [0] : vector<16x128xf32> to vector<128xf32>
    %183 = vector.shape_cast %182 : vector<128xf32> to vector<1x128xf32>
    %184 = vector.extract_strided_slice %97 {offsets = [5, 0], sizes = [1, 128], strides = [1, 1]} : vector<8x128xf32> to vector<1x128xf32>
    %185 = vector.extract_strided_slice %99 {offsets = [5, 0], sizes = [1, 128], strides = [1, 1]} : vector<8x128xf32> to vector<1x128xf32>
    %186 = arith.mulf %184, %185 : vector<1x128xf32>
    %187 = vector.extract_strided_slice %103 {offsets = [0, 5], sizes = [16, 1], strides = [1, 1]} : vector<16x8xf32> to vector<16x1xf32>
    %188 = vector.broadcast %184 : vector<1x128xf32> to vector<16x128xf32>
    %189 = arith.mulf %188, %81 : vector<16x128xf32>
    %190 = math.exp %189 : vector<16x128xf32>
    %191 = arith.mulf %190, %181 : vector<16x128xf32>
    %192 = vector.broadcast %186 : vector<1x128xf32> to vector<16x128xf32>
    %193 = vector.broadcast %187 : vector<16x1xf32> to vector<16x128xf32>
    %194 = arith.mulf %192, %193 : vector<16x128xf32>
    %cst_59 = arith.constant 0.000000e+00 : f32
    %195 = vector.broadcast %cst_59 : f32 to vector<16x128xf32>
    %196 = arith.select %92, %194, %195 : vector<16x128xi1>, vector<16x128xf32>
    %197 = arith.addf %191, %196 : vector<16x128xf32>
    %cst_60 = arith.constant dense<0.000000e+00> : vector<128xf32>
    %198 = vector.multi_reduction <add>, %197, %cst_60 [0] : vector<16x128xf32> to vector<128xf32>
    %199 = vector.shape_cast %198 : vector<128xf32> to vector<1x128xf32>
    %200 = vector.extract_strided_slice %97 {offsets = [6, 0], sizes = [1, 128], strides = [1, 1]} : vector<8x128xf32> to vector<1x128xf32>
    %201 = vector.extract_strided_slice %99 {offsets = [6, 0], sizes = [1, 128], strides = [1, 1]} : vector<8x128xf32> to vector<1x128xf32>
    %202 = arith.mulf %200, %201 : vector<1x128xf32>
    %203 = vector.extract_strided_slice %103 {offsets = [0, 6], sizes = [16, 1], strides = [1, 1]} : vector<16x8xf32> to vector<16x1xf32>
    %204 = vector.broadcast %200 : vector<1x128xf32> to vector<16x128xf32>
    %205 = arith.mulf %204, %81 : vector<16x128xf32>
    %206 = math.exp %205 : vector<16x128xf32>
    %207 = arith.mulf %206, %197 : vector<16x128xf32>
    %208 = vector.broadcast %202 : vector<1x128xf32> to vector<16x128xf32>
    %209 = vector.broadcast %203 : vector<16x1xf32> to vector<16x128xf32>
    %210 = arith.mulf %208, %209 : vector<16x128xf32>
    %cst_61 = arith.constant 0.000000e+00 : f32
    %211 = vector.broadcast %cst_61 : f32 to vector<16x128xf32>
    %212 = arith.select %92, %210, %211 : vector<16x128xi1>, vector<16x128xf32>
    %213 = arith.addf %207, %212 : vector<16x128xf32>
    %cst_62 = arith.constant dense<0.000000e+00> : vector<128xf32>
    %214 = vector.multi_reduction <add>, %213, %cst_62 [0] : vector<16x128xf32> to vector<128xf32>
    %215 = vector.shape_cast %214 : vector<128xf32> to vector<1x128xf32>
    %216 = vector.extract_strided_slice %97 {offsets = [7, 0], sizes = [1, 128], strides = [1, 1]} : vector<8x128xf32> to vector<1x128xf32>
    %217 = vector.extract_strided_slice %99 {offsets = [7, 0], sizes = [1, 128], strides = [1, 1]} : vector<8x128xf32> to vector<1x128xf32>
    %218 = arith.mulf %216, %217 : vector<1x128xf32>
    %219 = vector.extract_strided_slice %103 {offsets = [0, 7], sizes = [16, 1], strides = [1, 1]} : vector<16x8xf32> to vector<16x1xf32>
    %220 = vector.broadcast %216 : vector<1x128xf32> to vector<16x128xf32>
    %221 = arith.mulf %220, %81 : vector<16x128xf32>
    %222 = math.exp %221 : vector<16x128xf32>
    %223 = arith.mulf %222, %213 : vector<16x128xf32>
    %224 = vector.broadcast %218 : vector<1x128xf32> to vector<16x128xf32>
    %225 = vector.broadcast %219 : vector<16x1xf32> to vector<16x128xf32>
    %226 = arith.mulf %224, %225 : vector<16x128xf32>
    %cst_63 = arith.constant 0.000000e+00 : f32
    %227 = vector.broadcast %cst_63 : f32 to vector<16x128xf32>
    %228 = arith.select %92, %226, %227 : vector<16x128xi1>, vector<16x128xf32>
    %229 = arith.addf %223, %228 : vector<16x128xf32>
    %cst_64 = arith.constant dense<0.000000e+00> : vector<128xf32>
    %230 = vector.multi_reduction <add>, %229, %cst_64 [0] : vector<16x128xf32> to vector<128xf32>
    %231 = vector.shape_cast %230 : vector<128xf32> to vector<1x128xf32>
    %232 = tpu.concatenate %119, %135, %151, %167, %183, %199, %215, %231 in 0 : vector<1x128xf32>, vector<1x128xf32>, vector<1x128xf32>, vector<1x128xf32>, vector<1x128xf32>, vector<1x128xf32>, vector<1x128xf32>, vector<1x128xf32> -> vector<8x128xf32>
    %233 = arith.index_cast %95 : i32 to index
    %c0_65 = arith.constant 0 : index
    %234 = vector.load %arg19[%233, %c0_65] : memref<8x128xf32, #tpu.memory_space<vmem>>, vector<8x128xf32>
    tpu.vector_store %arg19[%233, %c0_65], %232 {strides = array<i32>} : memref<8x128xf32, #tpu.memory_space<vmem>>, vector<8x128xf32>,
    %c1_i32_66 = arith.constant 1 : i32
    %c0_67 = arith.constant 0 : index
    %c0_68 = arith.constant 0 : index
    %235 = vector.load %arg19[%c0_67, %c0_68] : memref<8x128xf32, #tpu.memory_space<vmem>>, vector<8x128xf32>
    %c0_69 = arith.constant 0 : index
    %c0_70 = arith.constant 0 : index
    %236 = vector.load %arg17[%c0_69, %c0_70] : memref<8x128xf32, #tpu.memory_space<vmem>>, vector<8x128xf32>
    %237 = vector.broadcast %82 : vector<1x128xf32> to vector<8x128xf32>
    %238 = arith.mulf %236, %237 : vector<8x128xf32>
    %239 = arith.addf %235, %238 : vector<8x128xf32>
    %240 = arith.truncf %239 : vector<8x128xf32> to vector<8x128xbf16>
    %c0_71 = arith.constant 0 : index
    %c0_72 = arith.constant 0 : index
    %241 = vector.load %arg14[%c0_71, %c0_72] : memref<128x32xbf16, #tpu.memory_space<vmem>>, vector<128x32xbf16>
    %cst_73 = arith.constant dense<0.000000e+00> : vector<8x32xf32>
    %242 = tpu.matmul %240, %241, %cst_73 {dimension_numbers = #tpu.dot_dimension_numbers<[1], [0], [0], [1], [0, 0, 1, 1], [], []>} : vector<8x128xbf16>, vector<128x32xbf16>, vector<8x32xf32> -> vector<8x32xf32>
    %c0_74 = arith.constant 0 : index
    %c0_75 = arith.constant 0 : index
    %243 = vector.load %arg15[%c0_74, %c0_75] : memref<1x32xf32, #tpu.memory_space<vmem>>, vector<1x32xf32>
    %244 = vector.broadcast %243 : vector<1x32xf32> to vector<8x32xf32>
    %245 = arith.addf %242, %244 : vector<8x32xf32>
    %246 = arith.truncf %245 : vector<8x32xf32> to vector<8x32xbf16>
    %c0_76 = arith.constant 0 : index
    %c0_77 = arith.constant 0 : index
    %c0_78 = arith.constant 0 : index
    %247 = vector.load %arg16[%c0_76, %c0_77, %c0_78] : memref<1x8x32xbf16, #tpu.memory_space<vmem>>, vector<1x8x32xbf16>
    %248 = vector.shape_cast %247 : vector<1x8x32xbf16> to vector<8x32xbf16>
    %249 = vector.shape_cast %246 : vector<8x32xbf16> to vector<1x8x32xbf16>
    tpu.vector_store %arg16[%c0_76, %c0_77, %c0_78], %249 {strides = array<i32>} : memref<1x8x32xbf16, #tpu.memory_space<vmem>>, vector<1x8x32xbf16>,
    return
  }
  func.func @transform_0(%arg0: i32) -> (i32, i32, i32) {
    %c0_i32 = arith.constant 0 : i32
    %c0_i32_0 = arith.constant 0 : i32
    %c0_i32_1 = arith.constant 0 : i32
    return %arg0, %c0_i32, %c0_i32_0 : i32, i32, i32
  }
  func.func @transform_1(%arg0: i32) -> (i32, i32) {
    %c0_i32 = arith.constant 0 : i32
    %c0_i32_0 = arith.constant 0 : i32
    %c0_i32_1 = arith.constant 0 : i32
    return %c0_i32, %c0_i32_0 : i32, i32
  }
  func.func @transform_2(%arg0: i32) -> (i32, i32) {
    %c0_i32 = arith.constant 0 : i32
    %c0_i32_0 = arith.constant 0 : i32
    %c0_i32_1 = arith.constant 0 : i32
    return %c0_i32, %c0_i32_0 : i32, i32
  }
  func.func @transform_3(%arg0: i32) -> (i32, i32) {
    %c0_i32 = arith.constant 0 : i32
    %c0_i32_0 = arith.constant 0 : i32
    %c0_i32_1 = arith.constant 0 : i32
    return %c0_i32, %c0_i32_0 : i32, i32
  }
  func.func @transform_4(%arg0: i32) -> (i32, i32) {
    %c0_i32 = arith.constant 0 : i32
    %c0_i32_0 = arith.constant 0 : i32
    %c0_i32_1 = arith.constant 0 : i32
    return %c0_i32, %c0_i32_0 : i32, i32
  }
  func.func @transform_5(%arg0: i32) -> (i32, i32) {
    %c0_i32 = arith.constant 0 : i32
    %c0_i32_0 = arith.constant 0 : i32
    %c0_i32_1 = arith.constant 0 : i32
    return %c0_i32, %c0_i32_0 : i32, i32
  }
  func.func @transform_6(%arg0: i32) -> (i32, i32) {
    %c0_i32 = arith.constant 0 : i32
    %c0_i32_0 = arith.constant 0 : i32
    %c0_i32_1 = arith.constant 0 : i32
    return %c0_i32, %c0_i32_0 : i32, i32
  }
  func.func @transform_7(%arg0: i32) -> (i32, i32) {
    %c0_i32 = arith.constant 0 : i32
    %c0_i32_0 = arith.constant 0 : i32
    %c0_i32_1 = arith.constant 0 : i32
    return %c0_i32, %c0_i32_0 : i32, i32
  }
  func.func @transform_8(%arg0: i32) -> (i32, i32) {
    %c0_i32 = arith.constant 0 : i32
    %c0_i32_0 = arith.constant 0 : i32
    %c0_i32_1 = arith.constant 0 : i32
    return %c0_i32, %c0_i32_0 : i32, i32
  }
  func.func @transform_9(%arg0: i32) -> (i32, i32) {
    %c0_i32 = arith.constant 0 : i32
    %c0_i32_0 = arith.constant 0 : i32
    %c0_i32_1 = arith.constant 0 : i32
    return %c0_i32, %c0_i32_0 : i32, i32
  }
  func.func @transform_10(%arg0: i32) -> (i32, i32) {
    %c0_i32 = arith.constant 0 : i32
    %c0_i32_0 = arith.constant 0 : i32
    %c0_i32_1 = arith.constant 0 : i32
    return %c0_i32, %c0_i32_0 : i32, i32
  }
  func.func @transform_11(%arg0: i32) -> (i32, i32) {
    %c0_i32 = arith.constant 0 : i32
    %c0_i32_0 = arith.constant 0 : i32
    %c0_i32_1 = arith.constant 0 : i32
    return %c0_i32, %c0_i32_0 : i32, i32
  }
  func.func @transform_12(%arg0: i32) -> (i32, i32) {
    %c0_i32 = arith.constant 0 : i32
    %c0_i32_0 = arith.constant 0 : i32
    %c0_i32_1 = arith.constant 0 : i32
    return %c0_i32, %c0_i32_0 : i32, i32
  }
  func.func @transform_13(%arg0: i32) -> (i32, i32) {
    %c0_i32 = arith.constant 0 : i32
    %c0_i32_0 = arith.constant 0 : i32
    %c0_i32_1 = arith.constant 0 : i32
    return %c0_i32, %c0_i32_0 : i32, i32
  }
  func.func @transform_14(%arg0: i32) -> (i32, i32) {
    %c0_i32 = arith.constant 0 : i32
    %c0_i32_0 = arith.constant 0 : i32
    %c0_i32_1 = arith.constant 0 : i32
    return %c0_i32, %c0_i32_0 : i32, i32
  }
  func.func @transform_15(%arg0: i32) -> (i32, i32, i32) {
    %c0_i32 = arith.constant 0 : i32
    %c0_i32_0 = arith.constant 0 : i32
    %c0_i32_1 = arith.constant 0 : i32
    return %arg0, %c0_i32, %c0_i32_0 : i32, i32, i32
  }
}

module attributes {stable_mosaic.version = 11 : i64} {
  func.func @_final_kernel(%arg0: memref<2x8x32xbf16, #tpu.memory_space<vmem>>, %arg1: memref<1x32xf32, #tpu.memory_space<vmem>>, %arg2: memref<1x32xf32, #tpu.memory_space<vmem>>, %arg3: memref<32x32xbf16, #tpu.memory_space<vmem>>, %arg4: memref<1x32xf32, #tpu.memory_space<vmem>>, %arg5: memref<2x32xf32, #tpu.memory_space<vmem>>) attributes {dimension_semantics = [], scalar_prefetch = 0 : i64, scratch_operands = 0 : i64, tpu.core_type = #tpu.core_type<tc>} {
    %c0 = arith.constant 0 : index
    %c0_0 = arith.constant 0 : index
    %c0_1 = arith.constant 0 : index
    %0 = vector.load %arg0[%c0, %c0_0, %c0_1] : memref<2x8x32xbf16, #tpu.memory_space<vmem>>, vector<2x8x32xbf16>
    %1 = arith.extf %0 : vector<2x8x32xbf16> to vector<2x8x32xf32>
    %c0_2 = arith.constant 0 : index
    %c0_3 = arith.constant 0 : index
    %2 = vector.load %arg1[%c0_2, %c0_3] : memref<1x32xf32, #tpu.memory_space<vmem>>, vector<1x32xf32>
    %c0_4 = arith.constant 0 : index
    %c0_5 = arith.constant 0 : index
    %3 = vector.load %arg2[%c0_4, %c0_5] : memref<1x32xf32, #tpu.memory_space<vmem>>, vector<1x32xf32>
    %cst = arith.constant dense<0.000000e+00> : vector<2x8xf32>
    %4 = vector.multi_reduction <add>, %1, %cst [2] : vector<2x8x32xf32> to vector<2x8xf32>
    %5 = vector.shape_cast %4 : vector<2x8xf32> to vector<2x8x1xf32>
    %cst_6 = arith.constant 3.200000e+01 : f32
    %6 = vector.broadcast %cst_6 : f32 to vector<2x8x1xf32>
    %7 = arith.divf %5, %6 : vector<2x8x1xf32>
    %8 = vector.broadcast %7 : vector<2x8x1xf32> to vector<2x8x32xf32>
    %9 = arith.subf %1, %8 : vector<2x8x32xf32>
    %10 = arith.mulf %9, %9 : vector<2x8x32xf32>
    %cst_7 = arith.constant dense<0.000000e+00> : vector<2x8xf32>
    %11 = vector.multi_reduction <add>, %10, %cst_7 [2] : vector<2x8x32xf32> to vector<2x8xf32>
    %12 = vector.shape_cast %11 : vector<2x8xf32> to vector<2x8x1xf32>
    %cst_8 = arith.constant 3.200000e+01 : f32
    %13 = vector.broadcast %cst_8 : f32 to vector<2x8x1xf32>
    %14 = arith.divf %12, %13 : vector<2x8x1xf32>
    %15 = vector.broadcast %7 : vector<2x8x1xf32> to vector<2x8x32xf32>
    %16 = arith.subf %1, %15 : vector<2x8x32xf32>
    %cst_9 = arith.constant 9.99999974E-6 : f32
    %17 = vector.broadcast %cst_9 : f32 to vector<2x8x1xf32>
    %18 = arith.addf %14, %17 : vector<2x8x1xf32>
    %19 = math.rsqrt %18 : vector<2x8x1xf32>
    %20 = vector.broadcast %19 : vector<2x8x1xf32> to vector<2x8x32xf32>
    %21 = arith.mulf %16, %20 : vector<2x8x32xf32>
    %22 = vector.shape_cast %2 : vector<1x32xf32> to vector<1x1x32xf32>
    %23 = vector.broadcast %22 : vector<1x1x32xf32> to vector<2x8x32xf32>
    %24 = arith.mulf %21, %23 : vector<2x8x32xf32>
    %25 = vector.shape_cast %3 : vector<1x32xf32> to vector<1x1x32xf32>
    %26 = vector.broadcast %25 : vector<1x1x32xf32> to vector<2x8x32xf32>
    %27 = arith.addf %24, %26 : vector<2x8x32xf32>
    %cst_10 = arith.constant dense<0.000000e+00> : vector<2x32xf32>
    %28 = vector.multi_reduction <add>, %27, %cst_10 [1] : vector<2x8x32xf32> to vector<2x32xf32>
    %cst_11 = arith.constant 8.000000e+00 : f32
    %29 = vector.broadcast %cst_11 : f32 to vector<2x32xf32>
    %30 = arith.divf %28, %29 : vector<2x32xf32>
    %31 = arith.truncf %30 : vector<2x32xf32> to vector<2x32xbf16>
    %c0_12 = arith.constant 0 : index
    %c0_13 = arith.constant 0 : index
    %32 = vector.load %arg3[%c0_12, %c0_13] : memref<32x32xbf16, #tpu.memory_space<vmem>>, vector<32x32xbf16>
    %cst_14 = arith.constant dense<0.000000e+00> : vector<2x32xf32>
    %33 = tpu.matmul %31, %32, %cst_14 {dimension_numbers = #tpu.dot_dimension_numbers<[1], [0], [0], [1], [0, 0, 1, 1], [], []>} : vector<2x32xbf16>, vector<32x32xbf16>, vector<2x32xf32> -> vector<2x32xf32>
    %c0_15 = arith.constant 0 : index
    %c0_16 = arith.constant 0 : index
    %34 = vector.load %arg4[%c0_15, %c0_16] : memref<1x32xf32, #tpu.memory_space<vmem>>, vector<1x32xf32>
    %35 = vector.broadcast %34 : vector<1x32xf32> to vector<2x32xf32>
    %36 = arith.addf %33, %35 : vector<2x32xf32>
    %c0_17 = arith.constant 0 : index
    %c0_18 = arith.constant 0 : index
    %37 = vector.load %arg5[%c0_17, %c0_18] : memref<2x32xf32, #tpu.memory_space<vmem>>, vector<2x32xf32>
    tpu.vector_store %arg5[%c0_17, %c0_18], %36 {strides = array<i32>} : memref<2x32xf32, #tpu.memory_space<vmem>>, vector<2x32xf32>,
    return
  }
}

</mosaic_0001>

<llo_original>
// kernel: sequence_embedding_forward.8
$region0: #{sequence_embedding_forward.8}
  #allocation0 [shape = 'u32[]', space=smem, size = 0x4, offset = 0x4, fixed_abs, tag = 'smem constant byte address 0x4 - core index']
  #allocation1 [shape = 'u32[72,128]{1,0:T(1,128)}', space=vmem, size = 0x9000, scoped, tag = 'internal scratch']
  %s0 = inlined_call_operand.vmem [shape: bf16[2,8,32], index: 0, kind: input, shape index: {}]
  %s1 = inlined_call_operand.vmem [shape: f32[1,32], index: 1, kind: input, shape index: {}]
  %s2 = inlined_call_operand.hbm [shape: f32[1,32], index: 2, kind: input, shape index: {}]
  %s3 = inlined_call_operand.vmem [shape: bf16[32,96], index: 3, kind: input, shape index: {}]
  %s4 = inlined_call_operand.hbm [shape: f32[1,96], index: 4, kind: input, shape index: {}]
  %s5 = inlined_call_operand.vmem [shape: bf16[32,32], index: 5, kind: input, shape index: {}]
  %s6 = inlined_call_operand.hbm [shape: f32[1,32], index: 6, kind: input, shape index: {}]
  %s7 = inlined_call_operand.vmem [shape: bf16[2,8,32], index: 7, kind: output, shape index: {}]
  %s8 = sld [smem:[#allocation0]]
  $region73: #{sequence_embedding_forward.8} parent=0
    _
  %s10 = ssub.s32 1, %s8
  %s11 = scalar_select 0, %s10, %s8
  $region1: #{sequence_embedding_forward.8} parent=0
    #allocation2 [shape = 'u8[512]{0}', space=vmem, size = 0x400, scoped, tag = 'input window, operand 2, single buffered']
    #allocation3 [shape = 's32[2]{0}', space=sflag, size = 0x8, scoped, tag = 'scoped memory for sequence_embedding_forward.8']
    #allocation4 [shape = 'u8[512]{0}', space=vmem, size = 0x400, scoped, tag = 'input window, operand 4, single buffered']
    #allocation5 [shape = 's32[1]{0}', space=sflag, size = 0x4, scoped, tag = 'scoped memory for sequence_embedding_forward.8']
    #allocation6 [shape = 'u8[512]{0}', space=vmem, size = 0x400, scoped, tag = 'input window, operand 6, single buffered']
    %12 = vsyncpa [#allocation3], 0
    %13 = vsyncpa [#allocation5], 0
    loop: start=0, step=1, limit=4
    $region2: #{sequence_embedding_forward.8} parent=1 // loop_pre_header
      _
    $region3: #{sequence_embedding_forward.8} parent=1 // loop_header
      %s15 = sphi 0, %s19
      %p16 = scmp.ge.s32.totalorder %s15, 4
      %s25 = sphi 0, %s27
      %s28 = sphi 0, %s25
      %s29 = sphi 0, %s28
      %s45 = sphi 0, %s29
      %s49 = sphi 0, %s49
      %s51 = sphi 0, %s49
      %s52 = sphi 0, %s51
      %s66 = sphi 0, %s52
      %s70 = sphi 0, %s70
      %s72 = sphi 0, %s70
      %s73 = sphi 0, %s72
      %s87 = sphi 0, %s73
      %s91 = sphi 0, %s91
      %s93 = sphi 0, %s91
      %s94 = sphi 0, %s93
      %s108 = sphi 0, %s94
      %s112 = sphi 0, %s112
      %s114 = sphi 0, %s112
      %s115 = sphi 0, %s114
      %s129 = sphi 0, %s115
      %s133 = sphi 0, %s133
      %s135 = sphi 0, %s133
      %s136 = sphi 0, %s135
      %s150 = sphi 0, %s136
      %s154 = sphi 0, %s154
      %s156 = sphi 0, %s154
      %s157 = sphi 0, %s156
      %s171 = sphi 0, %s157
      %s177 = sphi 0, %s179
      %s180 = sphi 0, %s177
      %s181 = sphi 0, %s180
      %s197 = sphi 0, %s181
    $region4: #{sequence_embedding_forward.8} parent=1 // loop_header_branch
      %18 = sbr.rel (%p16) target = $region8
    $region5: #{sequence_embedding_forward.8} parent=1 // loop_body
      %s20 = ssub.s32 %s15, 1
      %s21 = ssub.s32 %s15, 2
      %s22 = sadd.s32 %s15, 1
      %s23 = ssub.s32 %s15, %s22
      %p24 = scmp.eq.s32.totalorder %s23, 0
      %s26 = sadd.s32 %s25, 1
      %s27 = scalar_select %p24, %s25, %s26
      %p30 = pneg %p24
      %p31 = scmp.eq.s32.totalorder %s15, 1
      %p32 = por %p30, %p31
      %p33 = scmp.ne.s32.totalorder %s25, %s28
      %p34 = scmp.eq.s32.totalorder %s15, 0
      %p35 = por %p33, %p34
      %p36 = scmp.ne.s32.totalorder %s25, %s28
      %p37 = scmp.eq.s32.totalorder %s20, 1
      %p38 = por %p36, %p37
      %p39 = scmp.ne.s32.totalorder %s28, %s29
      %p40 = scmp.eq.s32.totalorder %s20, 0
      %p41 = por %p39, %p40
      %p42 = scmp.ne.s32.totalorder %s28, %s29
      %p43 = scmp.eq.s32.totalorder %s21, 1
      %p44 = por %p42, %p43
      %p46 = scmp.ne.s32.totalorder %s29, %s45
      %p47 = scmp.eq.s32.totalorder %s21, 0
      %p48 = por %p46, %p47
      %s50 = sadd.s32 %s49, 1
      %p53 = scmp.eq.s32.totalorder %s15, 1
      %p54 = scmp.ne.s32.totalorder %s49, %s51
      %p55 = scmp.eq.s32.totalorder %s15, 0
      %p56 = por %p54, %p55
      %p57 = scmp.ne.s32.totalorder %s49, %s51
      %p58 = scmp.eq.s32.totalorder %s20, 1
      %p59 = por %p57, %p58
      %p60 = scmp.ne.s32.totalorder %s51, %s52
      %p61 = scmp.eq.s32.totalorder %s20, 0
      %p62 = por %p60, %p61
      %p63 = scmp.ne.s32.totalorder %s51, %s52
      %p64 = scmp.eq.s32.totalorder %s21, 1
      %p65 = por %p63, %p64
      %p67 = scmp.ne.s32.totalorder %s52, %s66
      %p68 = scmp.eq.s32.totalorder %s21, 0
      %p69 = por %p67, %p68
      %s71 = sadd.s32 %s70, 1
      %p74 = scmp.eq.s32.totalorder %s15, 1
      %p75 = scmp.ne.s32.totalorder %s70, %s72
      %p76 = scmp.eq.s32.totalorder %s15, 0
      %p77 = por %p75, %p76
      %p78 = scmp.ne.s32.totalorder %s70, %s72
      %p79 = scmp.eq.s32.totalorder %s20, 1
      %p80 = por %p78, %p79
      %p81 = scmp.ne.s32.totalorder %s72, %s73
      %p82 = scmp.eq.s32.totalorder %s20, 0
      %p83 = por %p81, %p82
      %p84 = scmp.ne.s32.totalorder %s72, %s73
      %p85 = scmp.eq.s32.totalorder %s21, 1
      %p86 = por %p84, %p85
      %p88 = scmp.ne.s32.totalorder %s73, %s87
      %p89 = scmp.eq.s32.totalorder %s21, 0
      %p90 = por %p88, %p89
      %s92 = sadd.s32 %s91, 1
      %p95 = scmp.eq.s32.totalorder %s15, 1
      %p96 = scmp.ne.s32.totalorder %s91, %s93
      %p97 = scmp.eq.s32.totalorder %s15, 0
      %p98 = por %p96, %p97
      %p99 = scmp.ne.s32.totalorder %s91, %s93
      %p100 = scmp.eq.s32.totalorder %s20, 1
      %p101 = por %p99, %p100
      %p102 = scmp.ne.s32.totalorder %s93, %s94
      %p103 = scmp.eq.s32.totalorder %s20, 0
      %p104 = por %p102, %p103
      %p105 = scmp.ne.s32.totalorder %s93, %s94
      %p106 = scmp.eq.s32.totalorder %s21, 1
      %p107 = por %p105, %p106
      %p109 = scmp.ne.s32.totalorder %s94, %s108
      %p110 = scmp.eq.s32.totalorder %s21, 0
      %p111 = por %p109, %p110
      %s113 = sadd.s32 %s112, 1
      %p116 = scmp.eq.s32.totalorder %s15, 1
      %p117 = scmp.ne.s32.totalorder %s112, %s114
      %p118 = scmp.eq.s32.totalorder %s15, 0
      %p119 = por %p117, %p118
      %p120 = scmp.ne.s32.totalorder %s112, %s114
      %p121 = scmp.eq.s32.totalorder %s20, 1
      %p122 = por %p120, %p121
      %p123 = scmp.ne.s32.totalorder %s114, %s115
      %p124 = scmp.eq.s32.totalorder %s20, 0
      %p125 = por %p123, %p124
      %p126 = scmp.ne.s32.totalorder %s114, %s115
      %p127 = scmp.eq.s32.totalorder %s21, 1
      %p128 = por %p126, %p127
      %p130 = scmp.ne.s32.totalorder %s115, %s129
      %p131 = scmp.eq.s32.totalorder %s21, 0
      %p132 = por %p130, %p131
      %s134 = sadd.s32 %s133, 1
      %p137 = scmp.eq.s32.totalorder %s15, 1
      %p138 = scmp.ne.s32.totalorder %s133, %s135
      %p139 = scmp.eq.s32.totalorder %s15, 0
      %p140 = por %p138, %p139
      %p141 = scmp.ne.s32.totalorder %s133, %s135
      %p142 = scmp.eq.s32.totalorder %s20, 1
      %p143 = por %p141, %p142
      %p144 = scmp.ne.s32.totalorder %s135, %s136
      %p145 = scmp.eq.s32.totalorder %s20, 0
      %p146 = por %p144, %p145
      %p147 = scmp.ne.s32.totalorder %s135, %s136
      %p148 = scmp.eq.s32.totalorder %s21, 1
      %p149 = por %p147, %p148
      %p151 = scmp.ne.s32.totalorder %s136, %s150
      %p152 = scmp.eq.s32.totalorder %s21, 0
      %p153 = por %p151, %p152
      %s155 = sadd.s32 %s154, 1
      %p158 = scmp.eq.s32.totalorder %s15, 1
      %p159 = scmp.ne.s32.totalorder %s154, %s156
      %p160 = scmp.eq.s32.totalorder %s15, 0
      %p161 = por %p159, %p160
      %p162 = scmp.ne.s32.totalorder %s154, %s156
      %p163 = scmp.eq.s32.totalorder %s20, 1
      %p164 = por %p162, %p163
      %p165 = scmp.ne.s32.totalorder %s156, %s157
      %p166 = scmp.eq.s32.totalorder %s20, 0
      %p167 = por %p165, %p166
      %p168 = scmp.ne.s32.totalorder %s156, %s157
      %p169 = scmp.eq.s32.totalorder %s21, 1
      %p170 = por %p168, %p169
      %p172 = scmp.ne.s32.totalorder %s157, %s171
      %p173 = scmp.eq.s32.totalorder %s21, 0
      %p174 = por %p172, %p173
      %s175 = ssub.s32 %s15, %s22
      %p176 = scmp.eq.s32.totalorder %s175, 0
      %s178 = sadd.s32 %s177, 1
      %s179 = scalar_select %p176, %s177, %s178
      %p182 = pneg %p176
      %p183 = scmp.eq.s32.totalorder %s15, 1
      %p184 = por %p182, %p183
      %p185 = scmp.ne.s32.totalorder %s177, %s180
      %p186 = scmp.eq.s32.totalorder %s15, 0
      %p187 = por %p185, %p186
      %p188 = scmp.ne.s32.totalorder %s177, %s180
      %p189 = scmp.eq.s32.totalorder %s20, 1
      %p190 = por %p188, %p189
      %p191 = scmp.ne.s32.totalorder %s180, %s181
      %p192 = scmp.eq.s32.totalorder %s20, 0
      %p193 = por %p191, %p192
      %p194 = scmp.ne.s32.totalorder %s180, %s181
      %p195 = scmp.eq.s32.totalorder %s21, 1
      %p196 = por %p194, %p195
      %p198 = scmp.ne.s32.totalorder %s181, %s197
      %p199 = scmp.eq.s32.totalorder %s21, 0
      %p200 = por %p198, %p199
      %p201 = scmp.le.s32.totalorder 1, %s15
      %p202 = scmp.lt.s32.totalorder %s15, 3
      %p203 = pnand %p201, %p202
      %p204 = pneg %p203
      // Predicated region
      $region9: #{sequence_embedding_forward.8} parent=5 // pred_check
        _
      $region10: #{sequence_embedding_forward.8} parent=5 // pred_check_branch
        %206 = sbr.rel (%p203) target = $region12
      $region11: #{sequence_embedding_forward.8} parent=5 // pred_region
        %s207 = ssub.s32 %s15, 1
        // Predicated region
        $region13: #{sequence_embedding_forward.8} parent=11 // pred_check
          %p208 = pneg %p62
        $region14: #{sequence_embedding_forward.8} parent=11 // pred_check_branch
          %210 = sbr.rel (%p208) target = $region16
        $region15: #{sequence_embedding_forward.8} parent=11 // pred_region
          _
        $region16: #{sequence_embedding_forward.8} parent=11 // pred_fallthru
          _
        // Predicated region
        $region17: #{sequence_embedding_forward.8} parent=11 // pred_check
          %p211 = pneg %p83
        $region18: #{sequence_embedding_forward.8} parent=11 // pred_check_branch
          %213 = sbr.rel (%p211) target = $region20
        $region19: #{sequence_embedding_forward.8} parent=11 // pred_region
          %215 = vsyncadd [#allocation3], 0
          %s217 = sshll.u32 %s2, 4
          %s218 = int_to_ptr.hbm [resolvable:$true] %s217
          %s219 = sshll.u32 [#allocation2], 4
          %s220 = int_to_ptr.vmem [resolvable:$true] %s219
          %222 = dma.hbm_to_vmem [thread:$0]  %s218, 16, %s220, [#allocation3]
        $region20: #{sequence_embedding_forward.8} parent=11 // pred_fallthru
          _
        // Predicated region
        $region21: #{sequence_embedding_forward.8} parent=11 // pred_check
          %p223 = pneg %p104
        $region22: #{sequence_embedding_forward.8} parent=11 // pred_check_branch
          %225 = sbr.rel (%p223) target = $region24
        $region23: #{sequence_embedding_forward.8} parent=11 // pred_region
          _
        $region24: #{sequence_embedding_forward.8} parent=11 // pred_fallthru
          _
        // Predicated region
        $region25: #{sequence_embedding_forward.8} parent=11 // pred_check
          %p226 = pneg %p125
        $region26: #{sequence_embedding_forward.8} parent=11 // pred_check_branch
          %228 = sbr.rel (%p226) target = $region28
        $region27: #{sequence_embedding_forward.8} parent=11 // pred_region
          %230 = vsyncadd [#allocation5], 0
          %s232 = sshll.u32 %s4, 4
          %s233 = int_to_ptr.hbm [resolvable:$true] %s232
          %s234 = sshll.u32 [#allocation4], 4
          %s235 = int_to_ptr.vmem [resolvable:$true] %s234
          %237 = dma.hbm_to_vmem [thread:$0]  %s233, 16, %s235, [#allocation5]
        $region28: #{sequence_embedding_forward.8} parent=11 // pred_fallthru
          _
        // Predicated region
        $region29: #{sequence_embedding_forward.8} parent=11 // pred_check
          %p238 = pneg %p146
        $region30: #{sequence_embedding_forward.8} parent=11 // pred_check_branch
          %240 = sbr.rel (%p238) target = $region32
        $region31: #{sequence_embedding_forward.8} parent=11 // pred_region
          _
        $region32: #{sequence_embedding_forward.8} parent=11 // pred_fallthru
          _
        // Predicated region
        $region33: #{sequence_embedding_forward.8} parent=11 // pred_check
          %p241 = pneg %p167
        $region34: #{sequence_embedding_forward.8} parent=11 // pred_check_branch
          %243 = sbr.rel (%p241) target = $region36
        $region35: #{sequence_embedding_forward.8} parent=11 // pred_region
          %245 = vsyncadd [#allocation5], 0
          %s247 = sshll.u32 %s6, 4
          %s248 = int_to_ptr.hbm [resolvable:$true] %s247
          %s249 = sshll.u32 [#allocation6], 4
          %s250 = int_to_ptr.vmem [resolvable:$true] %s249
          %252 = dma.hbm_to_vmem [thread:$0]  %s248, 16, %s250, [#allocation5]
        $region36: #{sequence_embedding_forward.8} parent=11 // pred_fallthru
          _
      $region12: #{sequence_embedding_forward.8} parent=5 // pred_fallthru
        _
      %p253 = scmp.lt.s32.totalorder %s15, 2
      // Predicated region
      $region37: #{sequence_embedding_forward.8} parent=5 // pred_check
        %p254 = pneg %p253
      $region38: #{sequence_embedding_forward.8} parent=5 // pred_check_branch
        %256 = sbr.rel (%p254) target = $region40
      $region39: #{sequence_embedding_forward.8} parent=5 // pred_region
        // Predicated region
        $region41: #{sequence_embedding_forward.8} parent=39 // pred_check
          %p257 = pneg %p35
        $region42: #{sequence_embedding_forward.8} parent=39 // pred_check_branch
          %259 = sbr.rel (%p257) target = $region44
        $region43: #{sequence_embedding_forward.8} parent=39 // pred_region
          %p260 = scmp.lt.s32.totalorder %s15, 1
          %s261 = scalar_select %p260, %s15, 1
          %s262 = smul.addr %s261, 4
          %s263 = scalar_lea.vmem %s0, %s262
        $region44: #{sequence_embedding_forward.8} parent=39 // pred_fallthru
          _
      $region40: #{sequence_embedding_forward.8} parent=5 // pred_fallthru
        _
      %p264 = scmp.le.s32.totalorder 1, %s15
      %p265 = scmp.lt.s32.totalorder %s15, 3
      %p266 = pnand %p264, %p265
      %p267 = pneg %p266
      // Predicated region
      $region45: #{sequence_embedding_forward.8} parent=5 // pred_check
        _
      $region46: #{sequence_embedding_forward.8} parent=5 // pred_check_branch
        %269 = sbr.rel (%p266) target = $region48
      $region47: #{sequence_embedding_forward.8} parent=5 // pred_region
        %s270 = ssub.s32 %s15, 1
        // Predicated region
        $region49: #{sequence_embedding_forward.8} parent=47 // pred_check
          %p271 = pneg %p83
        $region50: #{sequence_embedding_forward.8} parent=47 // pred_check_branch
          %273 = sbr.rel (%p271) target = $region52
        $region51: #{sequence_embedding_forward.8} parent=47 // pred_region
          %275 = dma.done [#allocation3], 16
        $region52: #{sequence_embedding_forward.8} parent=47 // pred_fallthru
          _
        // Predicated region
        $region53: #{sequence_embedding_forward.8} parent=47 // pred_check
          %p276 = pneg %p125
        $region54: #{sequence_embedding_forward.8} parent=47 // pred_check_branch
          %278 = sbr.rel (%p276) target = $region56
        $region55: #{sequence_embedding_forward.8} parent=47 // pred_region
          %280 = dma.done [#allocation5], 16
        $region56: #{sequence_embedding_forward.8} parent=47 // pred_fallthru
          _
        // Predicated region
        $region57: #{sequence_embedding_forward.8} parent=47 // pred_check
          %p281 = pneg %p167
        $region58: #{sequence_embedding_forward.8} parent=47 // pred_check_branch
          %283 = sbr.rel (%p281) target = $region60
        $region59: #{sequence_embedding_forward.8} parent=47 // pred_region
          %285 = dma.done [#allocation5], 16
        $region60: #{sequence_embedding_forward.8} parent=47 // pred_fallthru
          _
        %p286 = scmp.lt.s32.totalorder %s20, 1
        %s287 = scalar_select %p286, %s20, 1
        %s288 = smul.addr %s287, 4
        %s289 = scalar_lea.vmem %s0, %s288
        %p290 = pneg %p41
        %p291 = pneg %p38
        %p292 = pneg %p62
        %p293 = pneg %p59
        %p294 = pneg %p83
        %p295 = pneg %p80
        %p296 = pneg %p104
        %p297 = pneg %p101
        %p298 = pneg %p125
        %p299 = pneg %p122
        %p300 = pneg %p146
        %p301 = pneg %p143
        %p302 = pneg %p167
        %p303 = pneg %p164
        %p304 = pneg %p193
        %p305 = pneg %p190
        %p306 = scmp.lt.s32.totalorder %s20, 1
        %s307 = scalar_select %p306, %s20, 1
        %s308 = smul.addr %s307, 4
        %s309 = scalar_lea.vmem %s7, %s308
        %p310 = scmp.lt.s32.totalorder %s20, 1
        %s311 = scalar_select %p310, %s20, 1
        %s312 = smul.addr %s311, 4
        %s313 = scalar_lea.vmem %s0, %s312
        %p314 = scmp.lt.s32.totalorder %s20, 1
        %s315 = scalar_select %p314, %s20, 1
        %s316 = smul.addr %s315, 4
        %s317 = scalar_lea.vmem %s7, %s316
        %v319 = vld [vmem:[%s313] sm:$0xf]
        %v320 = vunpack.c.l.bf16 %v319
        %v321 = vld [vmem:[%s1] sm:$0x1]
        %v322 = vld [vmem:[#allocation2] sm:$0x1]
        %vm323 = vcmask 261120
        %v324 = vsel %vm323, %v320, 0.0
        %325 = vadd.xlane.f32.xlu0 %v324
        %v326 = vpop.xlane.xlu0 %325
        %v327 = vrcp.pop 32.0
        %v328 = vmul.f32 32.0, %v327
        %v329 = vsub.f32 1.0, %v328
        %v330 = vmul.f32 %v327, %v329
        %v331 = vadd.f32 %v327, %v330
        %vm332 = vweird.f32 %v327
        %v333 = vsel %vm332, %v327, %v331
        %v334 = vmul.f32 %v326, %v333
        %v335 = vsub.f32 %v320, %v334
        %v336 = vmul.f32 %v335, %v335
        %v337 = vsel %vm323, %v336, 0.0
        %338 = vadd.xlane.f32.xlu0 %v337
        %v339 = vpop.xlane.xlu0 %338
        %v340 = vmul.f32 %v339, %v333
        %v341 = vadd.f32 %v340, 1e-05
        %v342 = vrsqrt.pop %v341
        %v343 = vmul.f32 %v342, %v341
        %v344 = vmul.f32 %v343, %v342
        %v345 = vmul.f32 0.5, %v344
        %v346 = vsub.f32 1.5, %v345
        %v347 = vmul.f32 %v342, %v346
        %vm348 = vweird.f32 %v341
        %vm349 = vweird.f32 %v342
        %vm350 = vmor %vm348, %vm349
        %v351 = vsel %vm350, %v342, %v347
        %v352 = vmul.f32 %v335, %v351
        %v354 = vperm.slane %v321, 0
        %v356 = vmul.f32 %v352, %v354
        %v358 = vperm.slane %v322, 0
        %v360 = vadd.f32 %v356, %v358
        %v361 = vpack.c.bf16 %v360, %v360
        %v362 = vld [vmem:[%s3] sm:$0xf]
        %v363 = vld [vmem:[%s3 + $0x4] sm:$0xf]
        %v364 = vld [vmem:[%s3 + $0x8] sm:$0xf]
        %v365 = vld [vmem:[%s3 + $0xc] sm:$0xf]
        %v366 = vld [vmem:[#allocation4] sm:$0x1]
        %v368 = vperm.slane %v366, 0
        %v374 = vunpack.c.l.b16 %v362
        %v375 = vunpack.c.l.b16 %v363
        %v376 = vunpack.c.l.b16 %v364
        %v377 = vunpack.c.l.b16 %v365
        %v378 = vpack.c.b16 %v375, %v374
        %v379 = vpack.c.b16 %v377, %v376
        %v383 = vsel %vm323, %v361, 0
        %385 = vmatpush.bf16.msra.mxu0 0
        %386 = vmatpush.bf16.msra.mxu0 0
        %387 = vmatpush.bf16.msra.mxu0 0
        %388 = vmatpush.bf16.msra.mxu0 0
        %389 = vmatpush.bf16.msra.mxu0 0
        %390 = vmatpush.bf16.msra.mxu0 0
        %391 = vmatpush.bf16.msra.mxu0 %v379
        %392 = vmatpush.bf16.msra.mxu0 %v378
        %393 = vmatmul.bf16.gmra.mxu0 %v383
        %v394 = vpop.f32.mrf.mxu0
        %v395 = vadd.f32 %v368, %v394
        %v396 = vpop.f32.mrf.mxu0
        %397 = vdwg.mxu0
        %v398 = vpack.c.bf16 %v395, %v395
        %400 = vrot.lane.b32.xlu0 %v398, 96
        %v401 = vpop.permute.xlu0 %400
        %vm402 = vcmask 64512
        %v404 = vsel %vm402, %v398, 0
        %v407 = vsel %vm402, %v401, 0
        %409 = vmatpush.bf16.xpose.msra.mxu0 0
        %410 = vmatpush.bf16.xpose.msra.mxu0 0
        %411 = vmatpush.bf16.xpose.msra.mxu0 0
        %412 = vmatpush.bf16.xpose.msra.mxu0 0
        %413 = vmatpush.bf16.xpose.msra.mxu0 0
        %414 = vmatpush.bf16.xpose.msra.mxu0 0
        %415 = vmatpush.bf16.xpose.msra.mxu0 0
        %416 = vmatpush.bf16.xpose.msra.mxu0 %v407
        %417 = vmatmul.bf16.gmra.mxu0 %v404
        %v418 = vpop.f32.mrf.mxu0
        %v419 = vadd.f32 0.0, %v418
        %v420 = vpop.f32.mrf.mxu0
        %421 = vdwg.mxu0
        %v422 = vmul.f32 %v419, 0.35355338
        %v423 = vsel %vm402, %v422, -inf
        %424 = vmax.xlane.f32.xlu0 %v423
        %v425 = vpop.xlane.xlu0 %424
        %v426 = vsub.f32 %v422, %v425
        %v427 = vmul.f32 %v426, 1.442695
        %v428 = vpow.pop %v427
        %v429 = vsel %vm402, %v428, 0.0
        %430 = vadd.xlane.f32.xlu0 %v429
        %v431 = vpop.xlane.xlu0 %430
        %v432 = vrcp.pop %v431
        %v433 = vmul.f32 %v431, %v432
        %v434 = vsub.f32 1.0, %v433
        %v435 = vmul.f32 %v432, %v434
        %v436 = vadd.f32 %v432, %v435
        %vm437 = vweird.f32 %v431
        %vm438 = vweird.f32 %v432
        %vm439 = vmor %vm437, %vm438
        %v440 = vsel %vm439, %v432, %v436
        %v441 = vand.u32 2147483647, %v431
        %vm442 = vcmp.eq.f32.partialorder %v441, 8.507059e+37
        %v443 = vand.u32 %v431, 2147483648
        %v444 = vor.u32 1.1754944e-38, %v443
        %v445 = vsel %vm442, %v444, %v440
        %v446 = vmul.f32 %v428, %v445
        %v447 = vpack.c.bf16 %v446, %v446
        %448 = vrot.lane.b32.xlu0 %v398, 64
        %v449 = vpop.permute.xlu0 %448
        %v451 = vsel %vm402, %v447, 0
        %vm453 = vcmask 1043456
        %v455 = vsel %vm453, %v449, 0
        %457 = vmatpush.bf16.msra.mxu0 0
        %458 = vmatpush.bf16.msra.mxu0 0
        %459 = vmatpush.bf16.msra.mxu0 0
        %460 = vmatpush.bf16.msra.mxu0 0
        %461 = vmatpush.bf16.msra.mxu0 0
        %462 = vmatpush.bf16.msra.mxu0 0
        %463 = vmatpush.bf16.msra.mxu0 0
        %464 = vmatpush.bf16.msra.mxu0 %v455
        %465 = vmatmul.bf16.gmra.mxu0 %v451
        %v466 = vpop.f32.mrf.mxu0
        %v467 = vadd.f32 0.0, %v466
        %v468 = vpop.f32.mrf.mxu0
        %469 = vdwg.mxu0
        %470 = vrot.lane.b32.xlu0 %v398, 120
        %v471 = vpop.permute.xlu0 %470
        %472 = vrot.lane.b32.xlu0 %v398, 88
        %v473 = vpop.permute.xlu0 %472
        %v475 = vsel %vm402, %v471, 0
        %v478 = vsel %vm402, %v473, 0
        %480 = vmatpush.bf16.xpose.msra.mxu0 0
        %481 = vmatpush.bf16.xpose.msra.mxu0 0
        %482 = vmatpush.bf16.xpose.msra.mxu0 0
        %483 = vmatpush.bf16.xpose.msra.mxu0 0
        %484 = vmatpush.bf16.xpose.msra.mxu0 0
        %485 = vmatpush.bf16.xpose.msra.mxu0 0
        %486 = vmatpush.bf16.xpose.msra.mxu0 0
        %487 = vmatpush.bf16.xpose.msra.mxu0 %v478
        %488 = vmatmul.bf16.gmra.mxu0 %v475
        %v489 = vpop.f32.mrf.mxu0
        %v490 = vadd.f32 0.0, %v489
        %v491 = vpop.f32.mrf.mxu0
        %492 = vdwg.mxu0
        %v493 = vmul.f32 %v490, 0.35355338
        %v494 = vsel %vm402, %v493, -inf
        %495 = vmax.xlane.f32.xlu0 %v494
        %v496 = vpop.xlane.xlu0 %495
        %v497 = vsub.f32 %v493, %v496
        %v498 = vmul.f32 %v497, 1.442695
        %v499 = vpow.pop %v498
        %v500 = vsel %vm402, %v499, 0.0
        %501 = vadd.xlane.f32.xlu0 %v500
        %v502 = vpop.xlane.xlu0 %501
        %v503 = vrcp.pop %v502
        %v504 = vmul.f32 %v502, %v503
        %v505 = vsub.f32 1.0, %v504
        %v506 = vmul.f32 %v503, %v505
        %v507 = vadd.f32 %v503, %v506
        %vm508 = vweird.f32 %v502
        %vm509 = vweird.f32 %v503
        %vm510 = vmor %vm508, %vm509
        %v511 = vsel %vm510, %v503, %v507
        %v512 = vand.u32 2147483647, %v502
        %vm513 = vcmp.eq.f32.partialorder %v512, 8.507059e+37
        %v514 = vand.u32 %v502, 2147483648
        %v515 = vor.u32 1.1754944e-38, %v514
        %v516 = vsel %vm513, %v515, %v511
        %v517 = vmul.f32 %v499, %v516
        %v518 = vpack.c.bf16 %v517, %v517
        %519 = vrot.lane.b32.xlu0 %v398, 56
        %v520 = vpop.permute.xlu0 %519
        %v522 = vsel %vm402, %v518, 0
        %v525 = vsel %vm453, %v520, 0
        %527 = vmatpush.bf16.msra.mxu0 0
        %528 = vmatpush.bf16.msra.mxu0 0
        %529 = vmatpush.bf16.msra.mxu0 0
        %530 = vmatpush.bf16.msra.mxu0 0
        %531 = vmatpush.bf16.msra.mxu0 0
        %532 = vmatpush.bf16.msra.mxu0 0
        %533 = vmatpush.bf16.msra.mxu0 0
        %534 = vmatpush.bf16.msra.mxu0 %v525
        %535 = vmatmul.bf16.gmra.mxu0 %v522
        %v536 = vpop.f32.mrf.mxu0
        %v537 = vadd.f32 0.0, %v536
        %v538 = vpop.f32.mrf.mxu0
        %539 = vdwg.mxu0
        %540 = vrot.lane.b32.xlu0 %v398, 112
        %v541 = vpop.permute.xlu0 %540
        %542 = vrot.lane.b32.xlu0 %v398, 80
        %v543 = vpop.permute.xlu0 %542
        %v545 = vsel %vm402, %v541, 0
        %v548 = vsel %vm402, %v543, 0
        %550 = vmatpush.bf16.xpose.msra.mxu0 0
        %551 = vmatpush.bf16.xpose.msra.mxu0 0
        %552 = vmatpush.bf16.xpose.msra.mxu0 0
        %553 = vmatpush.bf16.xpose.msra.mxu0 0
        %554 = vmatpush.bf16.xpose.msra.mxu0 0
        %555 = vmatpush.bf16.xpose.msra.mxu0 0
        %556 = vmatpush.bf16.xpose.msra.mxu0 0
        %557 = vmatpush.bf16.xpose.msra.mxu0 %v548
        %558 = vmatmul.bf16.gmra.mxu0 %v545
        %v559 = vpop.f32.mrf.mxu0
        %v560 = vadd.f32 0.0, %v559
        %v561 = vpop.f32.mrf.mxu0
        %562 = vdwg.mxu0
        %v563 = vmul.f32 %v560, 0.35355338
        %v564 = vsel %vm402, %v563, -inf
        %565 = vmax.xlane.f32.xlu0 %v564
        %v566 = vpop.xlane.xlu0 %565
        %v567 = vsub.f32 %v563, %v566
        %v568 = vmul.f32 %v567, 1.442695
        %v569 = vpow.pop %v568
        %v570 = vsel %vm402, %v569, 0.0
        %571 = vadd.xlane.f32.xlu0 %v570
        %v572 = vpop.xlane.xlu0 %571
        %v573 = vrcp.pop %v572
        %v574 = vmul.f32 %v572, %v573
        %v575 = vsub.f32 1.0, %v574
        %v576 = vmul.f32 %v573, %v575
        %v577 = vadd.f32 %v573, %v576
        %vm578 = vweird.f32 %v572
        %vm579 = vweird.f32 %v573
        %vm580 = vmor %vm578, %vm579
        %v581 = vsel %vm580, %v573, %v577
        %v582 = vand.u32 2147483647, %v572
        %vm583 = vcmp.eq.f32.partialorder %v582, 8.507059e+37
        %v584 = vand.u32 %v572, 2147483648
        %v585 = vor.u32 1.1754944e-38, %v584
        %v586 = vsel %vm583, %v585, %v581
        %v587 = vmul.f32 %v569, %v586
        %v588 = vpack.c.bf16 %v587, %v587
        %589 = vrot.lane.b32.xlu0 %v398, 48
        %v590 = vpop.permute.xlu0 %589
        %v592 = vsel %vm402, %v588, 0
        %v595 = vsel %vm453, %v590, 0
        %597 = vmatpush.bf16.msra.mxu0 0
        %598 = vmatpush.bf16.msra.mxu0 0
        %599 = vmatpush.bf16.msra.mxu0 0
        %600 = vmatpush.bf16.msra.mxu0 0
        %601 = vmatpush.bf16.msra.mxu0 0
        %602 = vmatpush.bf16.msra.mxu0 0
        %603 = vmatpush.bf16.msra.mxu0 0
        %604 = vmatpush.bf16.msra.mxu0 %v595
        %605 = vmatmul.bf16.gmra.mxu0 %v592
        %v606 = vpop.f32.mrf.mxu0
        %v607 = vadd.f32 0.0, %v606
        %v608 = vpop.f32.mrf.mxu0
        %609 = vdwg.mxu0
        %610 = vrot.lane.b32.xlu0 %v398, 104
        %v611 = vpop.permute.xlu0 %610
        %612 = vrot.lane.b32.xlu0 %v398, 72
        %v613 = vpop.permute.xlu0 %612
        %v615 = vsel %vm402, %v611, 0
        %v618 = vsel %vm402, %v613, 0
        %620 = vmatpush.bf16.xpose.msra.mxu0 0
        %621 = vmatpush.bf16.xpose.msra.mxu0 0
        %622 = vmatpush.bf16.xpose.msra.mxu0 0
        %623 = vmatpush.bf16.xpose.msra.mxu0 0
        %624 = vmatpush.bf16.xpose.msra.mxu0 0
        %625 = vmatpush.bf16.xpose.msra.mxu0 0
        %626 = vmatpush.bf16.xpose.msra.mxu0 0
        %627 = vmatpush.bf16.xpose.msra.mxu0 %v618
        %628 = vmatmul.bf16.gmra.mxu0 %v615
        %v629 = vpop.f32.mrf.mxu0
        %v630 = vadd.f32 0.0, %v629
        %v631 = vpop.f32.mrf.mxu0
        %632 = vdwg.mxu0
        %v633 = vmul.f32 %v630, 0.35355338
        %v634 = vsel %vm402, %v633, -inf
        %635 = vmax.xlane.f32.xlu0 %v634
        %v636 = vpop.xlane.xlu0 %635
        %v637 = vsub.f32 %v633, %v636
        %v638 = vmul.f32 %v637, 1.442695
        %v639 = vpow.pop %v638
        %v640 = vsel %vm402, %v639, 0.0
        %641 = vadd.xlane.f32.xlu0 %v640
        %v642 = vpop.xlane.xlu0 %641
        %v643 = vrcp.pop %v642
        %v644 = vmul.f32 %v642, %v643
        %v645 = vsub.f32 1.0, %v644
        %v646 = vmul.f32 %v643, %v645
        %v647 = vadd.f32 %v643, %v646
        %vm648 = vweird.f32 %v642
        %vm649 = vweird.f32 %v643
        %vm650 = vmor %vm648, %vm649
        %v651 = vsel %vm650, %v643, %v647
        %v652 = vand.u32 2147483647, %v642
        %vm653 = vcmp.eq.f32.partialorder %v652, 8.507059e+37
        %v654 = vand.u32 %v642, 2147483648
        %v655 = vor.u32 1.1754944e-38, %v654
        %v656 = vsel %vm653, %v655, %v651
        %v657 = vmul.f32 %v639, %v656
        %v658 = vpack.c.bf16 %v657, %v657
        %659 = vrot.lane.b32.xlu0 %v398, 40
        %v660 = vpop.permute.xlu0 %659
        %v662 = vsel %vm402, %v658, 0
        %v665 = vsel %vm453, %v660, 0
        %667 = vmatpush.bf16.msra.mxu0 0
        %668 = vmatpush.bf16.msra.mxu0 0
        %669 = vmatpush.bf16.msra.mxu0 0
        %670 = vmatpush.bf16.msra.mxu0 0
        %671 = vmatpush.bf16.msra.mxu0 0
        %672 = vmatpush.bf16.msra.mxu0 0
        %673 = vmatpush.bf16.msra.mxu0 0
        %674 = vmatpush.bf16.msra.mxu0 %v665
        %675 = vmatmul.bf16.gmra.mxu0 %v662
        %v676 = vpop.f32.mrf.mxu0
        %v677 = vadd.f32 0.0, %v676
        %v678 = vpop.f32.mrf.mxu0
        %679 = vdwg.mxu0
        %681 = vrot.lane.b32.xlu0 %v537, 8
        %v682 = vpop.permute.xlu0 %681
        %685 = vrot.lane.b32.xlu0 %v607, 16
        %v686 = vpop.permute.xlu0 %685
        %689 = vrot.lane.b32.xlu0 %v677, 24
        %v690 = vpop.permute.xlu0 %689
        %v692 = vsel %vm402, %v467, %v682
        %vm693 = vcmask 130048
        %v694 = vsel %vm693, %v692, %v686
        %vm695 = vcmask 195584
        %v696 = vsel %vm695, %v694, %v690
        %v697 = vpack.c.bf16 %v696, %v696
        %v698 = vld [vmem:[%s5] sm:$0xf]
        %v699 = vld [vmem:[%s5 + $0x4] sm:$0xf]
        %v700 = vld [vmem:[%s5 + $0x8] sm:$0xf]
        %v701 = vld [vmem:[%s5 + $0xc] sm:$0xf]
        %v702 = vld [vmem:[#allocation6] sm:$0x1]
        %v704 = vperm.slane %v702, 0
        %v710 = vunpack.c.l.b16 %v698
        %v711 = vunpack.c.l.b16 %v699
        %v712 = vunpack.c.l.b16 %v700
        %v713 = vunpack.c.l.b16 %v701
        %v714 = vpack.c.b16 %v711, %v710
        %v715 = vpack.c.b16 %v713, %v712
        %v719 = vsel %vm323, %v697, 0
        %721 = vmatpush.bf16.msra.mxu0 0
        %722 = vmatpush.bf16.msra.mxu0 0
        %723 = vmatpush.bf16.msra.mxu0 0
        %724 = vmatpush.bf16.msra.mxu0 0
        %725 = vmatpush.bf16.msra.mxu0 0
        %726 = vmatpush.bf16.msra.mxu0 0
        %727 = vmatpush.bf16.msra.mxu0 %v715
        %728 = vmatpush.bf16.msra.mxu0 %v714
        %729 = vmatmul.bf16.gmra.mxu0 %v719
        %v730 = vpop.f32.mrf.mxu0
        %v731 = vadd.f32 %v704, %v730
        %v732 = vpop.f32.mrf.mxu0
        %733 = vdwg.mxu0
        %v734 = vadd.f32 %v731, %v320
        %v735 = vpack.c.bf16 %v734, %v734
        %vm736 = vcmask 257024
        %737 = vst.msk [vmem:[%s317] sm:$0xf] %vm736, %v735
        %p738 = scmp.lt.s32.totalorder %s20, 1
        %s739 = scalar_select %p738, %s20, 1
        %s740 = smul.addr %s739, 4
        %s741 = scalar_lea.vmem %s7, %s740
        // Predicated region
        $region61: #{sequence_embedding_forward.8} parent=47 // pred_check
          %p742 = pneg %p190
        $region62: #{sequence_embedding_forward.8} parent=47 // pred_check_branch
          %744 = sbr.rel (%p742) target = $region64
        $region63: #{sequence_embedding_forward.8} parent=47 // pred_region
          _
        $region64: #{sequence_embedding_forward.8} parent=47 // pred_fallthru
          _
      $region48: #{sequence_embedding_forward.8} parent=5 // pred_fallthru
        _
      %p745 = scmp.le.s32.totalorder 2, %s15
      // Predicated region
      $region65: #{sequence_embedding_forward.8} parent=5 // pred_check
        %p746 = pneg %p745
      $region66: #{sequence_embedding_forward.8} parent=5 // pred_check_branch
        %748 = sbr.rel (%p746) target = $region68
      $region67: #{sequence_embedding_forward.8} parent=5 // pred_region
        %s749 = ssub.s32 %s15, 2
        // Predicated region
        $region69: #{sequence_embedding_forward.8} parent=67 // pred_check
          %p750 = pneg %p196
        $region70: #{sequence_embedding_forward.8} parent=67 // pred_check_branch
          %752 = sbr.rel (%p750) target = $region72
        $region71: #{sequence_embedding_forward.8} parent=67 // pred_region
          %p753 = scmp.lt.s32.totalorder %s21, 1
          %s754 = scalar_select %p753, %s21, 1
          %s755 = smul.addr %s754, 4
          %s756 = scalar_lea.vmem %s7, %s755
        $region72: #{sequence_embedding_forward.8} parent=67 // pred_fallthru
          _
      $region68: #{sequence_embedding_forward.8} parent=5 // pred_fallthru
        _
    $region6: #{sequence_embedding_forward.8} parent=1 // loop_footer
      %s19 = sadd.s32 1, %s15
    $region7: #{sequence_embedding_forward.8} parent=1 // loop_footer_branch
      %14 = sbr.rel target = $region3
    $region8: #{sequence_embedding_forward.8} parent=1 // loop_exit
      _
    %757 = vsyncpa [#allocation3], 1
    %s758 = scalar_lea.sflag [#allocation3], 1
    %759 = vsyncpa %s758, 1
    %760 = vsyncpa [#allocation5], 1

// kernel: sequence_embedding_forward.6
$region0: #{sequence_embedding_forward.6}
  #allocation0 [shape = 'u32[]', space=smem, size = 0x4, offset = 0x4, fixed_abs, tag = 'smem constant byte address 0x4 - core index']
  #allocation1 [shape = 'u32[72,128]{1,0:T(1,128)}', space=vmem, size = 0x9000, scoped, tag = 'internal scratch']
  %s0 = inlined_call_operand.vmem [shape: bf16[2,8,32], index: 0, kind: input, shape index: {}]
  %s1 = inlined_call_operand.vmem [shape: f32[1,32], index: 1, kind: input, shape index: {}]
  %s2 = inlined_call_operand.vmem [shape: f32[1,32], index: 2, kind: input, shape index: {}]
  %s3 = inlined_call_operand.vmem [shape: bf16[32,96], index: 3, kind: input, shape index: {}]
  %s4 = inlined_call_operand.vmem [shape: f32[1,96], index: 4, kind: input, shape index: {}]
  %s5 = inlined_call_operand.vmem [shape: bf16[32,32], index: 5, kind: input, shape index: {}]
  %s6 = inlined_call_operand.vmem [shape: f32[1,32], index: 6, kind: input, shape index: {}]
  %s7 = inlined_call_operand.vmem [shape: bf16[2,8,32], index: 7, kind: output, shape index: {}]
  %s8 = sld [smem:[#allocation0]]
  $region61: #{sequence_embedding_forward.6} parent=0
    _
  %s10 = ssub.s32 1, %s8
  %s11 = scalar_select 0, %s10, %s8
  loop: start=0, step=1, limit=4
  $region2: #{sequence_embedding_forward.6} parent=0 // loop_pre_header
    _
  $region3: #{sequence_embedding_forward.6} parent=0 // loop_header
    %s13 = sphi 0, %s17
    %p14 = scmp.ge.s32.totalorder %s13, 4
    %s23 = sphi 0, %s25
    %s26 = sphi 0, %s23
    %s27 = sphi 0, %s26
    %s43 = sphi 0, %s27
    %s47 = sphi 0, %s47
    %s49 = sphi 0, %s47
    %s50 = sphi 0, %s49
    %s64 = sphi 0, %s50
    %s68 = sphi 0, %s68
    %s70 = sphi 0, %s68
    %s71 = sphi 0, %s70
    %s85 = sphi 0, %s71
    %s89 = sphi 0, %s89
    %s91 = sphi 0, %s89
    %s92 = sphi 0, %s91
    %s106 = sphi 0, %s92
    %s110 = sphi 0, %s110
    %s112 = sphi 0, %s110
    %s113 = sphi 0, %s112
    %s127 = sphi 0, %s113
    %s131 = sphi 0, %s131
    %s133 = sphi 0, %s131
    %s134 = sphi 0, %s133
    %s148 = sphi 0, %s134
    %s152 = sphi 0, %s152
    %s154 = sphi 0, %s152
    %s155 = sphi 0, %s154
    %s169 = sphi 0, %s155
    %s175 = sphi 0, %s177
    %s178 = sphi 0, %s175
    %s179 = sphi 0, %s178
    %s195 = sphi 0, %s179
  $region4: #{sequence_embedding_forward.6} parent=0 // loop_header_branch
    %16 = sbr.rel (%p14) target = $region8
  $region5: #{sequence_embedding_forward.6} parent=0 // loop_body
    %s18 = ssub.s32 %s13, 1
    %s19 = ssub.s32 %s13, 2
    %s20 = sadd.s32 %s13, 1
    %s21 = ssub.s32 %s13, %s20
    %p22 = scmp.eq.s32.totalorder %s21, 0
    %s24 = sadd.s32 %s23, 1
    %s25 = scalar_select %p22, %s23, %s24
    %p28 = pneg %p22
    %p29 = scmp.eq.s32.totalorder %s13, 1
    %p30 = por %p28, %p29
    %p31 = scmp.ne.s32.totalorder %s23, %s26
    %p32 = scmp.eq.s32.totalorder %s13, 0
    %p33 = por %p31, %p32
    %p34 = scmp.ne.s32.totalorder %s23, %s26
    %p35 = scmp.eq.s32.totalorder %s18, 1
    %p36 = por %p34, %p35
    %p37 = scmp.ne.s32.totalorder %s26, %s27
    %p38 = scmp.eq.s32.totalorder %s18, 0
    %p39 = por %p37, %p38
    %p40 = scmp.ne.s32.totalorder %s26, %s27
    %p41 = scmp.eq.s32.totalorder %s19, 1
    %p42 = por %p40, %p41
    %p44 = scmp.ne.s32.totalorder %s27, %s43
    %p45 = scmp.eq.s32.totalorder %s19, 0
    %p46 = por %p44, %p45
    %s48 = sadd.s32 %s47, 1
    %p51 = scmp.eq.s32.totalorder %s13, 1
    %p52 = scmp.ne.s32.totalorder %s47, %s49
    %p53 = scmp.eq.s32.totalorder %s13, 0
    %p54 = por %p52, %p53
    %p55 = scmp.ne.s32.totalorder %s47, %s49
    %p56 = scmp.eq.s32.totalorder %s18, 1
    %p57 = por %p55, %p56
    %p58 = scmp.ne.s32.totalorder %s49, %s50
    %p59 = scmp.eq.s32.totalorder %s18, 0
    %p60 = por %p58, %p59
    %p61 = scmp.ne.s32.totalorder %s49, %s50
    %p62 = scmp.eq.s32.totalorder %s19, 1
    %p63 = por %p61, %p62
    %p65 = scmp.ne.s32.totalorder %s50, %s64
    %p66 = scmp.eq.s32.totalorder %s19, 0
    %p67 = por %p65, %p66
    %s69 = sadd.s32 %s68, 1
    %p72 = scmp.eq.s32.totalorder %s13, 1
    %p73 = scmp.ne.s32.totalorder %s68, %s70
    %p74 = scmp.eq.s32.totalorder %s13, 0
    %p75 = por %p73, %p74
    %p76 = scmp.ne.s32.totalorder %s68, %s70
    %p77 = scmp.eq.s32.totalorder %s18, 1
    %p78 = por %p76, %p77
    %p79 = scmp.ne.s32.totalorder %s70, %s71
    %p80 = scmp.eq.s32.totalorder %s18, 0
    %p81 = por %p79, %p80
    %p82 = scmp.ne.s32.totalorder %s70, %s71
    %p83 = scmp.eq.s32.totalorder %s19, 1
    %p84 = por %p82, %p83
    %p86 = scmp.ne.s32.totalorder %s71, %s85
    %p87 = scmp.eq.s32.totalorder %s19, 0
    %p88 = por %p86, %p87
    %s90 = sadd.s32 %s89, 1
    %p93 = scmp.eq.s32.totalorder %s13, 1
    %p94 = scmp.ne.s32.totalorder %s89, %s91
    %p95 = scmp.eq.s32.totalorder %s13, 0
    %p96 = por %p94, %p95
    %p97 = scmp.ne.s32.totalorder %s89, %s91
    %p98 = scmp.eq.s32.totalorder %s18, 1
    %p99 = por %p97, %p98
    %p100 = scmp.ne.s32.totalorder %s91, %s92
    %p101 = scmp.eq.s32.totalorder %s18, 0
    %p102 = por %p100, %p101
    %p103 = scmp.ne.s32.totalorder %s91, %s92
    %p104 = scmp.eq.s32.totalorder %s19, 1
    %p105 = por %p103, %p104
    %p107 = scmp.ne.s32.totalorder %s92, %s106
    %p108 = scmp.eq.s32.totalorder %s19, 0
    %p109 = por %p107, %p108
    %s111 = sadd.s32 %s110, 1
    %p114 = scmp.eq.s32.totalorder %s13, 1
    %p115 = scmp.ne.s32.totalorder %s110, %s112
    %p116 = scmp.eq.s32.totalorder %s13, 0
    %p117 = por %p115, %p116
    %p118 = scmp.ne.s32.totalorder %s110, %s112
    %p119 = scmp.eq.s32.totalorder %s18, 1
    %p120 = por %p118, %p119
    %p121 = scmp.ne.s32.totalorder %s112, %s113
    %p122 = scmp.eq.s32.totalorder %s18, 0
    %p123 = por %p121, %p122
    %p124 = scmp.ne.s32.totalorder %s112, %s113
    %p125 = scmp.eq.s32.totalorder %s19, 1
    %p126 = por %p124, %p125
    %p128 = scmp.ne.s32.totalorder %s113, %s127
    %p129 = scmp.eq.s32.totalorder %s19, 0
    %p130 = por %p128, %p129
    %s132 = sadd.s32 %s131, 1
    %p135 = scmp.eq.s32.totalorder %s13, 1
    %p136 = scmp.ne.s32.totalorder %s131, %s133
    %p137 = scmp.eq.s32.totalorder %s13, 0
    %p138 = por %p136, %p137
    %p139 = scmp.ne.s32.totalorder %s131, %s133
    %p140 = scmp.eq.s32.totalorder %s18, 1
    %p141 = por %p139, %p140
    %p142 = scmp.ne.s32.totalorder %s133, %s134
    %p143 = scmp.eq.s32.totalorder %s18, 0
    %p144 = por %p142, %p143
    %p145 = scmp.ne.s32.totalorder %s133, %s134
    %p146 = scmp.eq.s32.totalorder %s19, 1
    %p147 = por %p145, %p146
    %p149 = scmp.ne.s32.totalorder %s134, %s148
    %p150 = scmp.eq.s32.totalorder %s19, 0
    %p151 = por %p149, %p150
    %s153 = sadd.s32 %s152, 1
    %p156 = scmp.eq.s32.totalorder %s13, 1
    %p157 = scmp.ne.s32.totalorder %s152, %s154
    %p158 = scmp.eq.s32.totalorder %s13, 0
    %p159 = por %p157, %p158
    %p160 = scmp.ne.s32.totalorder %s152, %s154
    %p161 = scmp.eq.s32.totalorder %s18, 1
    %p162 = por %p160, %p161
    %p163 = scmp.ne.s32.totalorder %s154, %s155
    %p164 = scmp.eq.s32.totalorder %s18, 0
    %p165 = por %p163, %p164
    %p166 = scmp.ne.s32.totalorder %s154, %s155
    %p167 = scmp.eq.s32.totalorder %s19, 1
    %p168 = por %p166, %p167
    %p170 = scmp.ne.s32.totalorder %s155, %s169
    %p171 = scmp.eq.s32.totalorder %s19, 0
    %p172 = por %p170, %p171
    %s173 = ssub.s32 %s13, %s20
    %p174 = scmp.eq.s32.totalorder %s173, 0
    %s176 = sadd.s32 %s175, 1
    %s177 = scalar_select %p174, %s175, %s176
    %p180 = pneg %p174
    %p181 = scmp.eq.s32.totalorder %s13, 1
    %p182 = por %p180, %p181
    %p183 = scmp.ne.s32.totalorder %s175, %s178
    %p184 = scmp.eq.s32.totalorder %s13, 0
    %p185 = por %p183, %p184
    %p186 = scmp.ne.s32.totalorder %s175, %s178
    %p187 = scmp.eq.s32.totalorder %s18, 1
    %p188 = por %p186, %p187
    %p189 = scmp.ne.s32.totalorder %s178, %s179
    %p190 = scmp.eq.s32.totalorder %s18, 0
    %p191 = por %p189, %p190
    %p192 = scmp.ne.s32.totalorder %s178, %s179
    %p193 = scmp.eq.s32.totalorder %s19, 1
    %p194 = por %p192, %p193
    %p196 = scmp.ne.s32.totalorder %s179, %s195
    %p197 = scmp.eq.s32.totalorder %s19, 0
    %p198 = por %p196, %p197
    %p199 = scmp.le.s32.totalorder 1, %s13
    %p200 = scmp.lt.s32.totalorder %s13, 3
    %p201 = pnand %p199, %p200
    %p202 = pneg %p201
    // Predicated region
    $region9: #{sequence_embedding_forward.6} parent=5 // pred_check
      _
    $region10: #{sequence_embedding_forward.6} parent=5 // pred_check_branch
      %204 = sbr.rel (%p201) target = $region12
    $region11: #{sequence_embedding_forward.6} parent=5 // pred_region
      %s205 = ssub.s32 %s13, 1
      // Predicated region
      $region13: #{sequence_embedding_forward.6} parent=11 // pred_check
        %p206 = pneg %p60
      $region14: #{sequence_embedding_forward.6} parent=11 // pred_check_branch
        %208 = sbr.rel (%p206) target = $region16
      $region15: #{sequence_embedding_forward.6} parent=11 // pred_region
        _
      $region16: #{sequence_embedding_forward.6} parent=11 // pred_fallthru
        _
      // Predicated region
      $region17: #{sequence_embedding_forward.6} parent=11 // pred_check
        %p209 = pneg %p81
      $region18: #{sequence_embedding_forward.6} parent=11 // pred_check_branch
        %211 = sbr.rel (%p209) target = $region20
      $region19: #{sequence_embedding_forward.6} parent=11 // pred_region
        _
      $region20: #{sequence_embedding_forward.6} parent=11 // pred_fallthru
        _
      // Predicated region
      $region21: #{sequence_embedding_forward.6} parent=11 // pred_check
        %p212 = pneg %p102
      $region22: #{sequence_embedding_forward.6} parent=11 // pred_check_branch
        %214 = sbr.rel (%p212) target = $region24
      $region23: #{sequence_embedding_forward.6} parent=11 // pred_region
        _
      $region24: #{sequence_embedding_forward.6} parent=11 // pred_fallthru
        _
      // Predicated region
      $region25: #{sequence_embedding_forward.6} parent=11 // pred_check
        %p215 = pneg %p123
      $region26: #{sequence_embedding_forward.6} parent=11 // pred_check_branch
        %217 = sbr.rel (%p215) target = $region28
      $region27: #{sequence_embedding_forward.6} parent=11 // pred_region
        _
      $region28: #{sequence_embedding_forward.6} parent=11 // pred_fallthru
        _
      // Predicated region
      $region29: #{sequence_embedding_forward.6} parent=11 // pred_check
        %p218 = pneg %p144
      $region30: #{sequence_embedding_forward.6} parent=11 // pred_check_branch
        %220 = sbr.rel (%p218) target = $region32
      $region31: #{sequence_embedding_forward.6} parent=11 // pred_region
        _
      $region32: #{sequence_embedding_forward.6} parent=11 // pred_fallthru
        _
      // Predicated region
      $region33: #{sequence_embedding_forward.6} parent=11 // pred_check
        %p221 = pneg %p165
      $region34: #{sequence_embedding_forward.6} parent=11 // pred_check_branch
        %223 = sbr.rel (%p221) target = $region36
      $region35: #{sequence_embedding_forward.6} parent=11 // pred_region
        _
      $region36: #{sequence_embedding_forward.6} parent=11 // pred_fallthru
        _
    $region12: #{sequence_embedding_forward.6} parent=5 // pred_fallthru
      _
    %p224 = scmp.lt.s32.totalorder %s13, 2
    // Predicated region
    $region37: #{sequence_embedding_forward.6} parent=5 // pred_check
      %p225 = pneg %p224
    $region38: #{sequence_embedding_forward.6} parent=5 // pred_check_branch
      %227 = sbr.rel (%p225) target = $region40
    $region39: #{sequence_embedding_forward.6} parent=5 // pred_region
      // Predicated region
      $region41: #{sequence_embedding_forward.6} parent=39 // pred_check
        %p228 = pneg %p33
      $region42: #{sequence_embedding_forward.6} parent=39 // pred_check_branch
        %230 = sbr.rel (%p228) target = $region44
      $region43: #{sequence_embedding_forward.6} parent=39 // pred_region
        %p231 = scmp.lt.s32.totalorder %s13, 1
        %s232 = scalar_select %p231, %s13, 1
        %s233 = smul.addr %s232, 4
        %s234 = scalar_lea.vmem %s0, %s233
      $region44: #{sequence_embedding_forward.6} parent=39 // pred_fallthru
        _
    $region40: #{sequence_embedding_forward.6} parent=5 // pred_fallthru
      _
    %p235 = scmp.le.s32.totalorder 1, %s13
    %p236 = scmp.lt.s32.totalorder %s13, 3
    %p237 = pnand %p235, %p236
    %p238 = pneg %p237
    // Predicated region
    $region45: #{sequence_embedding_forward.6} parent=5 // pred_check
      _
    $region46: #{sequence_embedding_forward.6} parent=5 // pred_check_branch
      %240 = sbr.rel (%p237) target = $region48
    $region47: #{sequence_embedding_forward.6} parent=5 // pred_region
      %s241 = ssub.s32 %s13, 1
      %p242 = scmp.lt.s32.totalorder %s18, 1
      %s243 = scalar_select %p242, %s18, 1
      %s244 = smul.addr %s243, 4
      %s245 = scalar_lea.vmem %s0, %s244
      %p246 = pneg %p39
      %p247 = pneg %p36
      %p248 = pneg %p60
      %p249 = pneg %p57
      %p250 = pneg %p81
      %p251 = pneg %p78
      %p252 = pneg %p102
      %p253 = pneg %p99
      %p254 = pneg %p123
      %p255 = pneg %p120
      %p256 = pneg %p144
      %p257 = pneg %p141
      %p258 = pneg %p165
      %p259 = pneg %p162
      %p260 = pneg %p191
      %p261 = pneg %p188
      %p262 = scmp.lt.s32.totalorder %s18, 1
      %s263 = scalar_select %p262, %s18, 1
      %s264 = smul.addr %s263, 4
      %s265 = scalar_lea.vmem %s7, %s264
      %p266 = scmp.lt.s32.totalorder %s18, 1
      %s267 = scalar_select %p266, %s18, 1
      %s268 = smul.addr %s267, 4
      %s269 = scalar_lea.vmem %s0, %s268
      %p270 = scmp.lt.s32.totalorder %s18, 1
      %s271 = scalar_select %p270, %s18, 1
      %s272 = smul.addr %s271, 4
      %s273 = scalar_lea.vmem %s7, %s272
      %v275 = vld [vmem:[%s269] sm:$0xf]
      %v276 = vunpack.c.l.bf16 %v275
      %v277 = vld [vmem:[%s1] sm:$0x1]
      %v278 = vld [vmem:[%s2] sm:$0x1]
      %vm279 = vcmask 261120
      %v280 = vsel %vm279, %v276, 0.0
      %281 = vadd.xlane.f32.xlu0 %v280
      %v282 = vpop.xlane.xlu0 %281
      %v283 = vrcp.pop 32.0
      %v284 = vmul.f32 32.0, %v283
      %v285 = vsub.f32 1.0, %v284
      %v286 = vmul.f32 %v283, %v285
      %v287 = vadd.f32 %v283, %v286
      %vm288 = vweird.f32 %v283
      %v289 = vsel %vm288, %v283, %v287
      %v290 = vmul.f32 %v282, %v289
      %v291 = vsub.f32 %v276, %v290
      %v292 = vmul.f32 %v291, %v291
      %v293 = vsel %vm279, %v292, 0.0
      %294 = vadd.xlane.f32.xlu0 %v293
      %v295 = vpop.xlane.xlu0 %294
      %v296 = vmul.f32 %v295, %v289
      %v297 = vadd.f32 %v296, 1e-05
      %v298 = vrsqrt.pop %v297
      %v299 = vmul.f32 %v298, %v297
      %v300 = vmul.f32 %v299, %v298
      %v301 = vmul.f32 0.5, %v300
      %v302 = vsub.f32 1.5, %v301
      %v303 = vmul.f32 %v298, %v302
      %vm304 = vweird.f32 %v297
      %vm305 = vweird.f32 %v298
      %vm306 = vmor %vm304, %vm305
      %v307 = vsel %vm306, %v298, %v303
      %v308 = vmul.f32 %v291, %v307
      %v310 = vperm.slane %v277, 0
      %v312 = vmul.f32 %v308, %v310
      %v314 = vperm.slane %v278, 0
      %v316 = vadd.f32 %v312, %v314
      %v317 = vpack.c.bf16 %v316, %v316
      %v318 = vld [vmem:[%s3] sm:$0xf]
      %v319 = vld [vmem:[%s3 + $0x4] sm:$0xf]
      %v320 = vld [vmem:[%s3 + $0x8] sm:$0xf]
      %v321 = vld [vmem:[%s3 + $0xc] sm:$0xf]
      %v322 = vld [vmem:[%s4] sm:$0x1]
      %v324 = vperm.slane %v322, 0
      %v330 = vunpack.c.l.b16 %v318
      %v331 = vunpack.c.l.b16 %v319
      %v332 = vunpack.c.l.b16 %v320
      %v333 = vunpack.c.l.b16 %v321
      %v334 = vpack.c.b16 %v331, %v330
      %v335 = vpack.c.b16 %v333, %v332
      %v339 = vsel %vm279, %v317, 0
      %341 = vmatpush.bf16.msra.mxu0 0
      %342 = vmatpush.bf16.msra.mxu0 0
      %343 = vmatpush.bf16.msra.mxu0 0
      %344 = vmatpush.bf16.msra.mxu0 0
      %345 = vmatpush.bf16.msra.mxu0 0
      %346 = vmatpush.bf16.msra.mxu0 0
      %347 = vmatpush.bf16.msra.mxu0 %v335
      %348 = vmatpush.bf16.msra.mxu0 %v334
      %349 = vmatmul.bf16.gmra.mxu0 %v339
      %v350 = vpop.f32.mrf.mxu0
      %v351 = vadd.f32 %v324, %v350
      %v352 = vpop.f32.mrf.mxu0
      %353 = vdwg.mxu0
      %v354 = vpack.c.bf16 %v351, %v351
      %356 = vrot.lane.b32.xlu0 %v354, 96
      %v357 = vpop.permute.xlu0 %356
      %vm358 = vcmask 64512
      %v360 = vsel %vm358, %v354, 0
      %v363 = vsel %vm358, %v357, 0
      %365 = vmatpush.bf16.xpose.msra.mxu0 0
      %366 = vmatpush.bf16.xpose.msra.mxu0 0
      %367 = vmatpush.bf16.xpose.msra.mxu0 0
      %368 = vmatpush.bf16.xpose.msra.mxu0 0
      %369 = vmatpush.bf16.xpose.msra.mxu0 0
      %370 = vmatpush.bf16.xpose.msra.mxu0 0
      %371 = vmatpush.bf16.xpose.msra.mxu0 0
      %372 = vmatpush.bf16.xpose.msra.mxu0 %v363
      %373 = vmatmul.bf16.gmra.mxu0 %v360
      %v374 = vpop.f32.mrf.mxu0
      %v375 = vadd.f32 0.0, %v374
      %v376 = vpop.f32.mrf.mxu0
      %377 = vdwg.mxu0
      %v378 = vmul.f32 %v375, 0.35355338
      %v379 = vsel %vm358, %v378, -inf
      %380 = vmax.xlane.f32.xlu0 %v379
      %v381 = vpop.xlane.xlu0 %380
      %v382 = vsub.f32 %v378, %v381
      %v383 = vmul.f32 %v382, 1.442695
      %v384 = vpow.pop %v383
      %v385 = vsel %vm358, %v384, 0.0
      %386 = vadd.xlane.f32.xlu0 %v385
      %v387 = vpop.xlane.xlu0 %386
      %v388 = vrcp.pop %v387
      %v389 = vmul.f32 %v387, %v388
      %v390 = vsub.f32 1.0, %v389
      %v391 = vmul.f32 %v388, %v390
      %v392 = vadd.f32 %v388, %v391
      %vm393 = vweird.f32 %v387
      %vm394 = vweird.f32 %v388
      %vm395 = vmor %vm393, %vm394
      %v396 = vsel %vm395, %v388, %v392
      %v397 = vand.u32 2147483647, %v387
      %vm398 = vcmp.eq.f32.partialorder %v397, 8.507059e+37
      %v399 = vand.u32 %v387, 2147483648
      %v400 = vor.u32 1.1754944e-38, %v399
      %v401 = vsel %vm398, %v400, %v396
      %v402 = vmul.f32 %v384, %v401
      %v403 = vpack.c.bf16 %v402, %v402
      %404 = vrot.lane.b32.xlu0 %v354, 64
      %v405 = vpop.permute.xlu0 %404
      %v407 = vsel %vm358, %v403, 0
      %vm409 = vcmask 1043456
      %v411 = vsel %vm409, %v405, 0
      %413 = vmatpush.bf16.msra.mxu0 0
      %414 = vmatpush.bf16.msra.mxu0 0
      %415 = vmatpush.bf16.msra.mxu0 0
      %416 = vmatpush.bf16.msra.mxu0 0
      %417 = vmatpush.bf16.msra.mxu0 0
      %418 = vmatpush.bf16.msra.mxu0 0
      %419 = vmatpush.bf16.msra.mxu0 0
      %420 = vmatpush.bf16.msra.mxu0 %v411
      %421 = vmatmul.bf16.gmra.mxu0 %v407
      %v422 = vpop.f32.mrf.mxu0
      %v423 = vadd.f32 0.0, %v422
      %v424 = vpop.f32.mrf.mxu0
      %425 = vdwg.mxu0
      %426 = vrot.lane.b32.xlu0 %v354, 120
      %v427 = vpop.permute.xlu0 %426
      %428 = vrot.lane.b32.xlu0 %v354, 88
      %v429 = vpop.permute.xlu0 %428
      %v431 = vsel %vm358, %v427, 0
      %v434 = vsel %vm358, %v429, 0
      %436 = vmatpush.bf16.xpose.msra.mxu0 0
      %437 = vmatpush.bf16.xpose.msra.mxu0 0
      %438 = vmatpush.bf16.xpose.msra.mxu0 0
      %439 = vmatpush.bf16.xpose.msra.mxu0 0
      %440 = vmatpush.bf16.xpose.msra.mxu0 0
      %441 = vmatpush.bf16.xpose.msra.mxu0 0
      %442 = vmatpush.bf16.xpose.msra.mxu0 0
      %443 = vmatpush.bf16.xpose.msra.mxu0 %v434
      %444 = vmatmul.bf16.gmra.mxu0 %v431
      %v445 = vpop.f32.mrf.mxu0
      %v446 = vadd.f32 0.0, %v445
      %v447 = vpop.f32.mrf.mxu0
      %448 = vdwg.mxu0
      %v449 = vmul.f32 %v446, 0.35355338
      %v450 = vsel %vm358, %v449, -inf
      %451 = vmax.xlane.f32.xlu0 %v450
      %v452 = vpop.xlane.xlu0 %451
      %v453 = vsub.f32 %v449, %v452
      %v454 = vmul.f32 %v453, 1.442695
      %v455 = vpow.pop %v454
      %v456 = vsel %vm358, %v455, 0.0
      %457 = vadd.xlane.f32.xlu0 %v456
      %v458 = vpop.xlane.xlu0 %457
      %v459 = vrcp.pop %v458
      %v460 = vmul.f32 %v458, %v459
      %v461 = vsub.f32 1.0, %v460
      %v462 = vmul.f32 %v459, %v461
      %v463 = vadd.f32 %v459, %v462
      %vm464 = vweird.f32 %v458
      %vm465 = vweird.f32 %v459
      %vm466 = vmor %vm464, %vm465
      %v467 = vsel %vm466, %v459, %v463
      %v468 = vand.u32 2147483647, %v458
      %vm469 = vcmp.eq.f32.partialorder %v468, 8.507059e+37
      %v470 = vand.u32 %v458, 2147483648
      %v471 = vor.u32 1.1754944e-38, %v470
      %v472 = vsel %vm469, %v471, %v467
      %v473 = vmul.f32 %v455, %v472
      %v474 = vpack.c.bf16 %v473, %v473
      %475 = vrot.lane.b32.xlu0 %v354, 56
      %v476 = vpop.permute.xlu0 %475
      %v478 = vsel %vm358, %v474, 0
      %v481 = vsel %vm409, %v476, 0
      %483 = vmatpush.bf16.msra.mxu0 0
      %484 = vmatpush.bf16.msra.mxu0 0
      %485 = vmatpush.bf16.msra.mxu0 0
      %486 = vmatpush.bf16.msra.mxu0 0
      %487 = vmatpush.bf16.msra.mxu0 0
      %488 = vmatpush.bf16.msra.mxu0 0
      %489 = vmatpush.bf16.msra.mxu0 0
      %490 = vmatpush.bf16.msra.mxu0 %v481
      %491 = vmatmul.bf16.gmra.mxu0 %v478
      %v492 = vpop.f32.mrf.mxu0
      %v493 = vadd.f32 0.0, %v492
      %v494 = vpop.f32.mrf.mxu0
      %495 = vdwg.mxu0
      %496 = vrot.lane.b32.xlu0 %v354, 112
      %v497 = vpop.permute.xlu0 %496
      %498 = vrot.lane.b32.xlu0 %v354, 80
      %v499 = vpop.permute.xlu0 %498
      %v501 = vsel %vm358, %v497, 0
      %v504 = vsel %vm358, %v499, 0
      %506 = vmatpush.bf16.xpose.msra.mxu0 0
      %507 = vmatpush.bf16.xpose.msra.mxu0 0
      %508 = vmatpush.bf16.xpose.msra.mxu0 0
      %509 = vmatpush.bf16.xpose.msra.mxu0 0
      %510 = vmatpush.bf16.xpose.msra.mxu0 0
      %511 = vmatpush.bf16.xpose.msra.mxu0 0
      %512 = vmatpush.bf16.xpose.msra.mxu0 0
      %513 = vmatpush.bf16.xpose.msra.mxu0 %v504
      %514 = vmatmul.bf16.gmra.mxu0 %v501
      %v515 = vpop.f32.mrf.mxu0
      %v516 = vadd.f32 0.0, %v515
      %v517 = vpop.f32.mrf.mxu0
      %518 = vdwg.mxu0
      %v519 = vmul.f32 %v516, 0.35355338
      %v520 = vsel %vm358, %v519, -inf
      %521 = vmax.xlane.f32.xlu0 %v520
      %v522 = vpop.xlane.xlu0 %521
      %v523 = vsub.f32 %v519, %v522
      %v524 = vmul.f32 %v523, 1.442695
      %v525 = vpow.pop %v524
      %v526 = vsel %vm358, %v525, 0.0
      %527 = vadd.xlane.f32.xlu0 %v526
      %v528 = vpop.xlane.xlu0 %527
      %v529 = vrcp.pop %v528
      %v530 = vmul.f32 %v528, %v529
      %v531 = vsub.f32 1.0, %v530
      %v532 = vmul.f32 %v529, %v531
      %v533 = vadd.f32 %v529, %v532
      %vm534 = vweird.f32 %v528
      %vm535 = vweird.f32 %v529
      %vm536 = vmor %vm534, %vm535
      %v537 = vsel %vm536, %v529, %v533
      %v538 = vand.u32 2147483647, %v528
      %vm539 = vcmp.eq.f32.partialorder %v538, 8.507059e+37
      %v540 = vand.u32 %v528, 2147483648
      %v541 = vor.u32 1.1754944e-38, %v540
      %v542 = vsel %vm539, %v541, %v537
      %v543 = vmul.f32 %v525, %v542
      %v544 = vpack.c.bf16 %v543, %v543
      %545 = vrot.lane.b32.xlu0 %v354, 48
      %v546 = vpop.permute.xlu0 %545
      %v548 = vsel %vm358, %v544, 0
      %v551 = vsel %vm409, %v546, 0
      %553 = vmatpush.bf16.msra.mxu0 0
      %554 = vmatpush.bf16.msra.mxu0 0
      %555 = vmatpush.bf16.msra.mxu0 0
      %556 = vmatpush.bf16.msra.mxu0 0
      %557 = vmatpush.bf16.msra.mxu0 0
      %558 = vmatpush.bf16.msra.mxu0 0
      %559 = vmatpush.bf16.msra.mxu0 0
      %560 = vmatpush.bf16.msra.mxu0 %v551
      %561 = vmatmul.bf16.gmra.mxu0 %v548
      %v562 = vpop.f32.mrf.mxu0
      %v563 = vadd.f32 0.0, %v562
      %v564 = vpop.f32.mrf.mxu0
      %565 = vdwg.mxu0
      %566 = vrot.lane.b32.xlu0 %v354, 104
      %v567 = vpop.permute.xlu0 %566
      %568 = vrot.lane.b32.xlu0 %v354, 72
      %v569 = vpop.permute.xlu0 %568
      %v571 = vsel %vm358, %v567, 0
      %v574 = vsel %vm358, %v569, 0
      %576 = vmatpush.bf16.xpose.msra.mxu0 0
      %577 = vmatpush.bf16.xpose.msra.mxu0 0
      %578 = vmatpush.bf16.xpose.msra.mxu0 0
      %579 = vmatpush.bf16.xpose.msra.mxu0 0
      %580 = vmatpush.bf16.xpose.msra.mxu0 0
      %581 = vmatpush.bf16.xpose.msra.mxu0 0
      %582 = vmatpush.bf16.xpose.msra.mxu0 0
      %583 = vmatpush.bf16.xpose.msra.mxu0 %v574
      %584 = vmatmul.bf16.gmra.mxu0 %v571
      %v585 = vpop.f32.mrf.mxu0
      %v586 = vadd.f32 0.0, %v585
      %v587 = vpop.f32.mrf.mxu0
      %588 = vdwg.mxu0
      %v589 = vmul.f32 %v586, 0.35355338
      %v590 = vsel %vm358, %v589, -inf
      %591 = vmax.xlane.f32.xlu0 %v590
      %v592 = vpop.xlane.xlu0 %591
      %v593 = vsub.f32 %v589, %v592
      %v594 = vmul.f32 %v593, 1.442695
      %v595 = vpow.pop %v594
      %v596 = vsel %vm358, %v595, 0.0
      %597 = vadd.xlane.f32.xlu0 %v596
      %v598 = vpop.xlane.xlu0 %597
      %v599 = vrcp.pop %v598
      %v600 = vmul.f32 %v598, %v599
      %v601 = vsub.f32 1.0, %v600
      %v602 = vmul.f32 %v599, %v601
      %v603 = vadd.f32 %v599, %v602
      %vm604 = vweird.f32 %v598
      %vm605 = vweird.f32 %v599
      %vm606 = vmor %vm604, %vm605
      %v607 = vsel %vm606, %v599, %v603
      %v608 = vand.u32 2147483647, %v598
      %vm609 = vcmp.eq.f32.partialorder %v608, 8.507059e+37
      %v610 = vand.u32 %v598, 2147483648
      %v611 = vor.u32 1.1754944e-38, %v610
      %v612 = vsel %vm609, %v611, %v607
      %v613 = vmul.f32 %v595, %v612
      %v614 = vpack.c.bf16 %v613, %v613
      %615 = vrot.lane.b32.xlu0 %v354, 40
      %v616 = vpop.permute.xlu0 %615
      %v618 = vsel %vm358, %v614, 0
      %v621 = vsel %vm409, %v616, 0
      %623 = vmatpush.bf16.msra.mxu0 0
      %624 = vmatpush.bf16.msra.mxu0 0
      %625 = vmatpush.bf16.msra.mxu0 0
      %626 = vmatpush.bf16.msra.mxu0 0
      %627 = vmatpush.bf16.msra.mxu0 0
      %628 = vmatpush.bf16.msra.mxu0 0
      %629 = vmatpush.bf16.msra.mxu0 0
      %630 = vmatpush.bf16.msra.mxu0 %v621
      %631 = vmatmul.bf16.gmra.mxu0 %v618
      %v632 = vpop.f32.mrf.mxu0
      %v633 = vadd.f32 0.0, %v632
      %v634 = vpop.f32.mrf.mxu0
      %635 = vdwg.mxu0
      %637 = vrot.lane.b32.xlu0 %v493, 8
      %v638 = vpop.permute.xlu0 %637
      %641 = vrot.lane.b32.xlu0 %v563, 16
      %v642 = vpop.permute.xlu0 %641
      %645 = vrot.lane.b32.xlu0 %v633, 24
      %v646 = vpop.permute.xlu0 %645
      %v648 = vsel %vm358, %v423, %v638
      %vm649 = vcmask 130048
      %v650 = vsel %vm649, %v648, %v642
      %vm651 = vcmask 195584
      %v652 = vsel %vm651, %v650, %v646
      %v653 = vpack.c.bf16 %v652, %v652
      %v654 = vld [vmem:[%s5] sm:$0xf]
      %v655 = vld [vmem:[%s5 + $0x4] sm:$0xf]
      %v656 = vld [vmem:[%s5 + $0x8] sm:$0xf]
      %v657 = vld [vmem:[%s5 + $0xc] sm:$0xf]
      %v658 = vld [vmem:[%s6] sm:$0x1]
      %v660 = vperm.slane %v658, 0
      %v666 = vunpack.c.l.b16 %v654
      %v667 = vunpack.c.l.b16 %v655
      %v668 = vunpack.c.l.b16 %v656
      %v669 = vunpack.c.l.b16 %v657
      %v670 = vpack.c.b16 %v667, %v666
      %v671 = vpack.c.b16 %v669, %v668
      %v675 = vsel %vm279, %v653, 0
      %677 = vmatpush.bf16.msra.mxu0 0
      %678 = vmatpush.bf16.msra.mxu0 0
      %679 = vmatpush.bf16.msra.mxu0 0
      %680 = vmatpush.bf16.msra.mxu0 0
      %681 = vmatpush.bf16.msra.mxu0 0
      %682 = vmatpush.bf16.msra.mxu0 0
      %683 = vmatpush.bf16.msra.mxu0 %v671
      %684 = vmatpush.bf16.msra.mxu0 %v670
      %685 = vmatmul.bf16.gmra.mxu0 %v675
      %v686 = vpop.f32.mrf.mxu0
      %v687 = vadd.f32 %v660, %v686
      %v688 = vpop.f32.mrf.mxu0
      %689 = vdwg.mxu0
      %v690 = vadd.f32 %v687, %v276
      %v691 = vpack.c.bf16 %v690, %v690
      %vm692 = vcmask 257024
      %693 = vst.msk [vmem:[%s273] sm:$0xf] %vm692, %v691
      %p694 = scmp.lt.s32.totalorder %s18, 1
      %s695 = scalar_select %p694, %s18, 1
      %s696 = smul.addr %s695, 4
      %s697 = scalar_lea.vmem %s7, %s696
      // Predicated region
      $region49: #{sequence_embedding_forward.6} parent=47 // pred_check
        %p698 = pneg %p188
      $region50: #{sequence_embedding_forward.6} parent=47 // pred_check_branch
        %700 = sbr.rel (%p698) target = $region52
      $region51: #{sequence_embedding_forward.6} parent=47 // pred_region
        _
      $region52: #{sequence_embedding_forward.6} parent=47 // pred_fallthru
        _
    $region48: #{sequence_embedding_forward.6} parent=5 // pred_fallthru
      _
    %p701 = scmp.le.s32.totalorder 2, %s13
    // Predicated region
    $region53: #{sequence_embedding_forward.6} parent=5 // pred_check
      %p702 = pneg %p701
    $region54: #{sequence_embedding_forward.6} parent=5 // pred_check_branch
      %704 = sbr.rel (%p702) target = $region56
    $region55: #{sequence_embedding_forward.6} parent=5 // pred_region
      %s705 = ssub.s32 %s13, 2
      // Predicated region
      $region57: #{sequence_embedding_forward.6} parent=55 // pred_check
        %p706 = pneg %p194
      $region58: #{sequence_embedding_forward.6} parent=55 // pred_check_branch
        %708 = sbr.rel (%p706) target = $region60
      $region59: #{sequence_embedding_forward.6} parent=55 // pred_region
        %p709 = scmp.lt.s32.totalorder %s19, 1
        %s710 = scalar_select %p709, %s19, 1
        %s711 = smul.addr %s710, 4
        %s712 = scalar_lea.vmem %s7, %s711
      $region60: #{sequence_embedding_forward.6} parent=55 // pred_fallthru
        _
    $region56: #{sequence_embedding_forward.6} parent=5 // pred_fallthru
      _
  $region6: #{sequence_embedding_forward.6} parent=0 // loop_footer
    %s17 = sadd.s32 1, %s13
  $region7: #{sequence_embedding_forward.6} parent=0 // loop_footer_branch
    %12 = sbr.rel target = $region3
  $region8: #{sequence_embedding_forward.6} parent=0 // loop_exit
    _

// kernel: sequence_embedding_forward.7
$region0: #{sequence_embedding_forward.7}
  #allocation0 [shape = 'u32[]', space=smem, size = 0x4, offset = 0x4, fixed_abs, tag = 'smem constant byte address 0x4 - core index']
  #allocation1 [shape = 'u32[72,128]{1,0:T(1,128)}', space=vmem, size = 0x9000, scoped, tag = 'internal scratch']
  #allocation2 [shape = 'f32[8,128]{1,0:T(8,128)}', space=vmem, size = 0x1000, scoped, tag = 'scratch operand']
  #allocation3 [shape = 'f32[8,128]{1,0:T(8,128)}', space=vmem, size = 0x1000, scoped, tag = 'scratch operand']
  #allocation4 [shape = 'f32[8,128]{1,0:T(8,128)}', space=vmem, size = 0x1000, scoped, tag = 'scratch operand']
  %s0 = inlined_call_operand.vmem [shape: bf16[2,8,32], index: 0, kind: input, shape index: {}]
  %s1 = inlined_call_operand.vmem [shape: f32[1,32], index: 1, kind: input, shape index: {}]
  %s2 = inlined_call_operand.vmem [shape: f32[1,32], index: 2, kind: input, shape index: {}]
  %s3 = inlined_call_operand.vmem [shape: bf16[32,128], index: 3, kind: input, shape index: {}]
  %s4 = inlined_call_operand.vmem [shape: f32[1,128], index: 4, kind: input, shape index: {}]
  %s5 = inlined_call_operand.vmem [shape: f32[3,128], index: 5, kind: input, shape index: {}]
  %s6 = inlined_call_operand.hbm [shape: f32[1,128], index: 6, kind: input, shape index: {}]
  %s7 = inlined_call_operand.vmem [shape: bf16[128,128], index: 7, kind: input, shape index: {}]
  %s8 = inlined_call_operand.hbm [shape: f32[1,128], index: 8, kind: input, shape index: {}]
  %s9 = inlined_call_operand.vmem [shape: bf16[16,128], index: 9, kind: input, shape index: {}]
  %s10 = inlined_call_operand.vmem [shape: f32[16,1], index: 10, kind: input, shape index: {}]
  %s11 = inlined_call_operand.vmem [shape: f32[16,128], index: 11, kind: input, shape index: {}]
  %s12 = inlined_call_operand.hbm [shape: f32[1,128], index: 12, kind: input, shape index: {}]
  %s13 = inlined_call_operand.vmem [shape: bf16[128,32], index: 13, kind: input, shape index: {}]
  %s14 = inlined_call_operand.hbm [shape: f32[1,32], index: 14, kind: input, shape index: {}]
  %s15 = inlined_call_operand.vmem [shape: bf16[2,8,32], index: 15, kind: output, shape index: {}]
  %s16 = sld [smem:[#allocation0]]
  $region109: #{sequence_embedding_forward.7} parent=0
    _
  %s18 = ssub.s32 1, %s16
  %s19 = scalar_select 0, %s18, %s16
  $region1: #{sequence_embedding_forward.7} parent=0
    #allocation5 [shape = 'u8[512]{0}', space=vmem, size = 0x400, scoped, tag = 'input window, operand 6, single buffered']
    #allocation6 [shape = 's32[2]{0}', space=sflag, size = 0x8, scoped, tag = 'scoped memory for sequence_embedding_forward.7']
    #allocation7 [shape = 'u8[512]{0}', space=vmem, size = 0x400, scoped, tag = 'input window, operand 8, single buffered']
    #allocation8 [shape = 's32[1]{0}', space=sflag, size = 0x4, scoped, tag = 'scoped memory for sequence_embedding_forward.7']
    #allocation9 [shape = 'u8[512]{0}', space=vmem, size = 0x400, scoped, tag = 'input window, operand 12, single buffered']
    #allocation10 [shape = 'u8[512]{0}', space=vmem, size = 0x400, scoped, tag = 'input window, operand 14, single buffered']
    #allocation11 [shape = 's32[1]{0}', space=sflag, size = 0x4, scoped, tag = 'scoped memory for sequence_embedding_forward.7']
    %20 = vsyncpa [#allocation6], 0
    %21 = vsyncpa [#allocation8], 0
    %22 = vsyncpa [#allocation11], 0
    loop: start=0, step=1, limit=4
    $region2: #{sequence_embedding_forward.7} parent=1 // loop_pre_header
      _
    $region3: #{sequence_embedding_forward.7} parent=1 // loop_header
      %s24 = sphi 0, %s28
      %p25 = scmp.ge.s32.totalorder %s24, 4
      %s34 = sphi 0, %s36
      %s37 = sphi 0, %s34
      %s38 = sphi 0, %s37
      %s54 = sphi 0, %s38
      %s58 = sphi 0, %s58
      %s60 = sphi 0, %s58
      %s61 = sphi 0, %s60
      %s75 = sphi 0, %s61
      %s79 = sphi 0, %s79
      %s81 = sphi 0, %s79
      %s82 = sphi 0, %s81
      %s96 = sphi 0, %s82
      %s100 = sphi 0, %s100
      %s102 = sphi 0, %s100
      %s103 = sphi 0, %s102
      %s117 = sphi 0, %s103
      %s121 = sphi 0, %s121
      %s123 = sphi 0, %s121
      %s124 = sphi 0, %s123
      %s138 = sphi 0, %s124
      %s142 = sphi 0, %s142
      %s144 = sphi 0, %s142
      %s145 = sphi 0, %s144
      %s159 = sphi 0, %s145
      %s163 = sphi 0, %s163
      %s165 = sphi 0, %s163
      %s166 = sphi 0, %s165
      %s180 = sphi 0, %s166
      %s184 = sphi 0, %s184
      %s186 = sphi 0, %s184
      %s187 = sphi 0, %s186
      %s201 = sphi 0, %s187
      %s205 = sphi 0, %s205
      %s207 = sphi 0, %s205
      %s208 = sphi 0, %s207
      %s222 = sphi 0, %s208
      %s226 = sphi 0, %s226
      %s228 = sphi 0, %s226
      %s229 = sphi 0, %s228
      %s243 = sphi 0, %s229
      %s247 = sphi 0, %s247
      %s249 = sphi 0, %s247
      %s250 = sphi 0, %s249
      %s264 = sphi 0, %s250
      %s268 = sphi 0, %s268
      %s270 = sphi 0, %s268
      %s271 = sphi 0, %s270
      %s285 = sphi 0, %s271
      %s289 = sphi 0, %s289
      %s291 = sphi 0, %s289
      %s292 = sphi 0, %s291
      %s306 = sphi 0, %s292
      %s310 = sphi 0, %s310
      %s312 = sphi 0, %s310
      %s313 = sphi 0, %s312
      %s327 = sphi 0, %s313
      %s331 = sphi 0, %s331
      %s333 = sphi 0, %s331
      %s334 = sphi 0, %s333
      %s348 = sphi 0, %s334
      %s354 = sphi 0, %s356
      %s357 = sphi 0, %s354
      %s358 = sphi 0, %s357
      %s374 = sphi 0, %s358
    $region4: #{sequence_embedding_forward.7} parent=1 // loop_header_branch
      %27 = sbr.rel (%p25) target = $region8
    $region5: #{sequence_embedding_forward.7} parent=1 // loop_body
      %s29 = ssub.s32 %s24, 1
      %s30 = ssub.s32 %s24, 2
      %s31 = sadd.s32 %s24, 1
      %s32 = ssub.s32 %s24, %s31
      %p33 = scmp.eq.s32.totalorder %s32, 0
      %s35 = sadd.s32 %s34, 1
      %s36 = scalar_select %p33, %s34, %s35
      %p39 = pneg %p33
      %p40 = scmp.eq.s32.totalorder %s24, 1
      %p41 = por %p39, %p40
      %p42 = scmp.ne.s32.totalorder %s34, %s37
      %p43 = scmp.eq.s32.totalorder %s24, 0
      %p44 = por %p42, %p43
      %p45 = scmp.ne.s32.totalorder %s34, %s37
      %p46 = scmp.eq.s32.totalorder %s29, 1
      %p47 = por %p45, %p46
      %p48 = scmp.ne.s32.totalorder %s37, %s38
      %p49 = scmp.eq.s32.totalorder %s29, 0
      %p50 = por %p48, %p49
      %p51 = scmp.ne.s32.totalorder %s37, %s38
      %p52 = scmp.eq.s32.totalorder %s30, 1
      %p53 = por %p51, %p52
      %p55 = scmp.ne.s32.totalorder %s38, %s54
      %p56 = scmp.eq.s32.totalorder %s30, 0
      %p57 = por %p55, %p56
      %s59 = sadd.s32 %s58, 1
      %p62 = scmp.eq.s32.totalorder %s24, 1
      %p63 = scmp.ne.s32.totalorder %s58, %s60
      %p64 = scmp.eq.s32.totalorder %s24, 0
      %p65 = por %p63, %p64
      %p66 = scmp.ne.s32.totalorder %s58, %s60
      %p67 = scmp.eq.s32.totalorder %s29, 1
      %p68 = por %p66, %p67
      %p69 = scmp.ne.s32.totalorder %s60, %s61
      %p70 = scmp.eq.s32.totalorder %s29, 0
      %p71 = por %p69, %p70
      %p72 = scmp.ne.s32.totalorder %s60, %s61
      %p73 = scmp.eq.s32.totalorder %s30, 1
      %p74 = por %p72, %p73
      %p76 = scmp.ne.s32.totalorder %s61, %s75
      %p77 = scmp.eq.s32.totalorder %s30, 0
      %p78 = por %p76, %p77
      %s80 = sadd.s32 %s79, 1
      %p83 = scmp.eq.s32.totalorder %s24, 1
      %p84 = scmp.ne.s32.totalorder %s79, %s81
      %p85 = scmp.eq.s32.totalorder %s24, 0
      %p86 = por %p84, %p85
      %p87 = scmp.ne.s32.totalorder %s79, %s81
      %p88 = scmp.eq.s32.totalorder %s29, 1
      %p89 = por %p87, %p88
      %p90 = scmp.ne.s32.totalorder %s81, %s82
      %p91 = scmp.eq.s32.totalorder %s29, 0
      %p92 = por %p90, %p91
      %p93 = scmp.ne.s32.totalorder %s81, %s82
      %p94 = scmp.eq.s32.totalorder %s30, 1
      %p95 = por %p93, %p94
      %p97 = scmp.ne.s32.totalorder %s82, %s96
      %p98 = scmp.eq.s32.totalorder %s30, 0
      %p99 = por %p97, %p98
      %s101 = sadd.s32 %s100, 1
      %p104 = scmp.eq.s32.totalorder %s24, 1
      %p105 = scmp.ne.s32.totalorder %s100, %s102
      %p106 = scmp.eq.s32.totalorder %s24, 0
      %p107 = por %p105, %p106
      %p108 = scmp.ne.s32.totalorder %s100, %s102
      %p109 = scmp.eq.s32.totalorder %s29, 1
      %p110 = por %p108, %p109
      %p111 = scmp.ne.s32.totalorder %s102, %s103
      %p112 = scmp.eq.s32.totalorder %s29, 0
      %p113 = por %p111, %p112
      %p114 = scmp.ne.s32.totalorder %s102, %s103
      %p115 = scmp.eq.s32.totalorder %s30, 1
      %p116 = por %p114, %p115
      %p118 = scmp.ne.s32.totalorder %s103, %s117
      %p119 = scmp.eq.s32.totalorder %s30, 0
      %p120 = por %p118, %p119
      %s122 = sadd.s32 %s121, 1
      %p125 = scmp.eq.s32.totalorder %s24, 1
      %p126 = scmp.ne.s32.totalorder %s121, %s123
      %p127 = scmp.eq.s32.totalorder %s24, 0
      %p128 = por %p126, %p127
      %p129 = scmp.ne.s32.totalorder %s121, %s123
      %p130 = scmp.eq.s32.totalorder %s29, 1
      %p131 = por %p129, %p130
      %p132 = scmp.ne.s32.totalorder %s123, %s124
      %p133 = scmp.eq.s32.totalorder %s29, 0
      %p134 = por %p132, %p133
      %p135 = scmp.ne.s32.totalorder %s123, %s124
      %p136 = scmp.eq.s32.totalorder %s30, 1
      %p137 = por %p135, %p136
      %p139 = scmp.ne.s32.totalorder %s124, %s138
      %p140 = scmp.eq.s32.totalorder %s30, 0
      %p141 = por %p139, %p140
      %s143 = sadd.s32 %s142, 1
      %p146 = scmp.eq.s32.totalorder %s24, 1
      %p147 = scmp.ne.s32.totalorder %s142, %s144
      %p148 = scmp.eq.s32.totalorder %s24, 0
      %p149 = por %p147, %p148
      %p150 = scmp.ne.s32.totalorder %s142, %s144
      %p151 = scmp.eq.s32.totalorder %s29, 1
      %p152 = por %p150, %p151
      %p153 = scmp.ne.s32.totalorder %s144, %s145
      %p154 = scmp.eq.s32.totalorder %s29, 0
      %p155 = por %p153, %p154
      %p156 = scmp.ne.s32.totalorder %s144, %s145
      %p157 = scmp.eq.s32.totalorder %s30, 1
      %p158 = por %p156, %p157
      %p160 = scmp.ne.s32.totalorder %s145, %s159
      %p161 = scmp.eq.s32.totalorder %s30, 0
      %p162 = por %p160, %p161
      %s164 = sadd.s32 %s163, 1
      %p167 = scmp.eq.s32.totalorder %s24, 1
      %p168 = scmp.ne.s32.totalorder %s163, %s165
      %p169 = scmp.eq.s32.totalorder %s24, 0
      %p170 = por %p168, %p169
      %p171 = scmp.ne.s32.totalorder %s163, %s165
      %p172 = scmp.eq.s32.totalorder %s29, 1
      %p173 = por %p171, %p172
      %p174 = scmp.ne.s32.totalorder %s165, %s166
      %p175 = scmp.eq.s32.totalorder %s29, 0
      %p176 = por %p174, %p175
      %p177 = scmp.ne.s32.totalorder %s165, %s166
      %p178 = scmp.eq.s32.totalorder %s30, 1
      %p179 = por %p177, %p178
      %p181 = scmp.ne.s32.totalorder %s166, %s180
      %p182 = scmp.eq.s32.totalorder %s30, 0
      %p183 = por %p181, %p182
      %s185 = sadd.s32 %s184, 1
      %p188 = scmp.eq.s32.totalorder %s24, 1
      %p189 = scmp.ne.s32.totalorder %s184, %s186
      %p190 = scmp.eq.s32.totalorder %s24, 0
      %p191 = por %p189, %p190
      %p192 = scmp.ne.s32.totalorder %s184, %s186
      %p193 = scmp.eq.s32.totalorder %s29, 1
      %p194 = por %p192, %p193
      %p195 = scmp.ne.s32.totalorder %s186, %s187
      %p196 = scmp.eq.s32.totalorder %s29, 0
      %p197 = por %p195, %p196
      %p198 = scmp.ne.s32.totalorder %s186, %s187
      %p199 = scmp.eq.s32.totalorder %s30, 1
      %p200 = por %p198, %p199
      %p202 = scmp.ne.s32.totalorder %s187, %s201
      %p203 = scmp.eq.s32.totalorder %s30, 0
      %p204 = por %p202, %p203
      %s206 = sadd.s32 %s205, 1
      %p209 = scmp.eq.s32.totalorder %s24, 1
      %p210 = scmp.ne.s32.totalorder %s205, %s207
      %p211 = scmp.eq.s32.totalorder %s24, 0
      %p212 = por %p210, %p211
      %p213 = scmp.ne.s32.totalorder %s205, %s207
      %p214 = scmp.eq.s32.totalorder %s29, 1
      %p215 = por %p213, %p214
      %p216 = scmp.ne.s32.totalorder %s207, %s208
      %p217 = scmp.eq.s32.totalorder %s29, 0
      %p218 = por %p216, %p217
      %p219 = scmp.ne.s32.totalorder %s207, %s208
      %p220 = scmp.eq.s32.totalorder %s30, 1
      %p221 = por %p219, %p220
      %p223 = scmp.ne.s32.totalorder %s208, %s222
      %p224 = scmp.eq.s32.totalorder %s30, 0
      %p225 = por %p223, %p224
      %s227 = sadd.s32 %s226, 1
      %p230 = scmp.eq.s32.totalorder %s24, 1
      %p231 = scmp.ne.s32.totalorder %s226, %s228
      %p232 = scmp.eq.s32.totalorder %s24, 0
      %p233 = por %p231, %p232
      %p234 = scmp.ne.s32.totalorder %s226, %s228
      %p235 = scmp.eq.s32.totalorder %s29, 1
      %p236 = por %p234, %p235
      %p237 = scmp.ne.s32.totalorder %s228, %s229
      %p238 = scmp.eq.s32.totalorder %s29, 0
      %p239 = por %p237, %p238
      %p240 = scmp.ne.s32.totalorder %s228, %s229
      %p241 = scmp.eq.s32.totalorder %s30, 1
      %p242 = por %p240, %p241
      %p244 = scmp.ne.s32.totalorder %s229, %s243
      %p245 = scmp.eq.s32.totalorder %s30, 0
      %p246 = por %p244, %p245
      %s248 = sadd.s32 %s247, 1
      %p251 = scmp.eq.s32.totalorder %s24, 1
      %p252 = scmp.ne.s32.totalorder %s247, %s249
      %p253 = scmp.eq.s32.totalorder %s24, 0
      %p254 = por %p252, %p253
      %p255 = scmp.ne.s32.totalorder %s247, %s249
      %p256 = scmp.eq.s32.totalorder %s29, 1
      %p257 = por %p255, %p256
      %p258 = scmp.ne.s32.totalorder %s249, %s250
      %p259 = scmp.eq.s32.totalorder %s29, 0
      %p260 = por %p258, %p259
      %p261 = scmp.ne.s32.totalorder %s249, %s250
      %p262 = scmp.eq.s32.totalorder %s30, 1
      %p263 = por %p261, %p262
      %p265 = scmp.ne.s32.totalorder %s250, %s264
      %p266 = scmp.eq.s32.totalorder %s30, 0
      %p267 = por %p265, %p266
      %s269 = sadd.s32 %s268, 1
      %p272 = scmp.eq.s32.totalorder %s24, 1
      %p273 = scmp.ne.s32.totalorder %s268, %s270
      %p274 = scmp.eq.s32.totalorder %s24, 0
      %p275 = por %p273, %p274
      %p276 = scmp.ne.s32.totalorder %s268, %s270
      %p277 = scmp.eq.s32.totalorder %s29, 1
      %p278 = por %p276, %p277
      %p279 = scmp.ne.s32.totalorder %s270, %s271
      %p280 = scmp.eq.s32.totalorder %s29, 0
      %p281 = por %p279, %p280
      %p282 = scmp.ne.s32.totalorder %s270, %s271
      %p283 = scmp.eq.s32.totalorder %s30, 1
      %p284 = por %p282, %p283
      %p286 = scmp.ne.s32.totalorder %s271, %s285
      %p287 = scmp.eq.s32.totalorder %s30, 0
      %p288 = por %p286, %p287
      %s290 = sadd.s32 %s289, 1
      %p293 = scmp.eq.s32.totalorder %s24, 1
      %p294 = scmp.ne.s32.totalorder %s289, %s291
      %p295 = scmp.eq.s32.totalorder %s24, 0
      %p296 = por %p294, %p295
      %p297 = scmp.ne.s32.totalorder %s289, %s291
      %p298 = scmp.eq.s32.totalorder %s29, 1
      %p299 = por %p297, %p298
      %p300 = scmp.ne.s32.totalorder %s291, %s292
      %p301 = scmp.eq.s32.totalorder %s29, 0
      %p302 = por %p300, %p301
      %p303 = scmp.ne.s32.totalorder %s291, %s292
      %p304 = scmp.eq.s32.totalorder %s30, 1
      %p305 = por %p303, %p304
      %p307 = scmp.ne.s32.totalorder %s292, %s306
      %p308 = scmp.eq.s32.totalorder %s30, 0
      %p309 = por %p307, %p308
      %s311 = sadd.s32 %s310, 1
      %p314 = scmp.eq.s32.totalorder %s24, 1
      %p315 = scmp.ne.s32.totalorder %s310, %s312
      %p316 = scmp.eq.s32.totalorder %s24, 0
      %p317 = por %p315, %p316
      %p318 = scmp.ne.s32.totalorder %s310, %s312
      %p319 = scmp.eq.s32.totalorder %s29, 1
      %p320 = por %p318, %p319
      %p321 = scmp.ne.s32.totalorder %s312, %s313
      %p322 = scmp.eq.s32.totalorder %s29, 0
      %p323 = por %p321, %p322
      %p324 = scmp.ne.s32.totalorder %s312, %s313
      %p325 = scmp.eq.s32.totalorder %s30, 1
      %p326 = por %p324, %p325
      %p328 = scmp.ne.s32.totalorder %s313, %s327
      %p329 = scmp.eq.s32.totalorder %s30, 0
      %p330 = por %p328, %p329
      %s332 = sadd.s32 %s331, 1
      %p335 = scmp.eq.s32.totalorder %s24, 1
      %p336 = scmp.ne.s32.totalorder %s331, %s333
      %p337 = scmp.eq.s32.totalorder %s24, 0
      %p338 = por %p336, %p337
      %p339 = scmp.ne.s32.totalorder %s331, %s333
      %p340 = scmp.eq.s32.totalorder %s29, 1
      %p341 = por %p339, %p340
      %p342 = scmp.ne.s32.totalorder %s333, %s334
      %p343 = scmp.eq.s32.totalorder %s29, 0
      %p344 = por %p342, %p343
      %p345 = scmp.ne.s32.totalorder %s333, %s334
      %p346 = scmp.eq.s32.totalorder %s30, 1
      %p347 = por %p345, %p346
      %p349 = scmp.ne.s32.totalorder %s334, %s348
      %p350 = scmp.eq.s32.totalorder %s30, 0
      %p351 = por %p349, %p350
      %s352 = ssub.s32 %s24, %s31
      %p353 = scmp.eq.s32.totalorder %s352, 0
      %s355 = sadd.s32 %s354, 1
      %s356 = scalar_select %p353, %s354, %s355
      %p359 = pneg %p353
      %p360 = scmp.eq.s32.totalorder %s24, 1
      %p361 = por %p359, %p360
      %p362 = scmp.ne.s32.totalorder %s354, %s357
      %p363 = scmp.eq.s32.totalorder %s24, 0
      %p364 = por %p362, %p363
      %p365 = scmp.ne.s32.totalorder %s354, %s357
      %p366 = scmp.eq.s32.totalorder %s29, 1
      %p367 = por %p365, %p366
      %p368 = scmp.ne.s32.totalorder %s357, %s358
      %p369 = scmp.eq.s32.totalorder %s29, 0
      %p370 = por %p368, %p369
      %p371 = scmp.ne.s32.totalorder %s357, %s358
      %p372 = scmp.eq.s32.totalorder %s30, 1
      %p373 = por %p371, %p372
      %p375 = scmp.ne.s32.totalorder %s358, %s374
      %p376 = scmp.eq.s32.totalorder %s30, 0
      %p377 = por %p375, %p376
      %p378 = scmp.le.s32.totalorder 1, %s24
      %p379 = scmp.lt.s32.totalorder %s24, 3
      %p380 = pnand %p378, %p379
      %p381 = pneg %p380
      // Predicated region
      $region9: #{sequence_embedding_forward.7} parent=5 // pred_check
        _
      $region10: #{sequence_embedding_forward.7} parent=5 // pred_check_branch
        %383 = sbr.rel (%p380) target = $region12
      $region11: #{sequence_embedding_forward.7} parent=5 // pred_region
        %s384 = ssub.s32 %s24, 1
        // Predicated region
        $region13: #{sequence_embedding_forward.7} parent=11 // pred_check
          %p385 = pneg %p71
        $region14: #{sequence_embedding_forward.7} parent=11 // pred_check_branch
          %387 = sbr.rel (%p385) target = $region16
        $region15: #{sequence_embedding_forward.7} parent=11 // pred_region
          _
        $region16: #{sequence_embedding_forward.7} parent=11 // pred_fallthru
          _
        // Predicated region
        $region17: #{sequence_embedding_forward.7} parent=11 // pred_check
          %p388 = pneg %p92
        $region18: #{sequence_embedding_forward.7} parent=11 // pred_check_branch
          %390 = sbr.rel (%p388) target = $region20
        $region19: #{sequence_embedding_forward.7} parent=11 // pred_region
          _
        $region20: #{sequence_embedding_forward.7} parent=11 // pred_fallthru
          _
        // Predicated region
        $region21: #{sequence_embedding_forward.7} parent=11 // pred_check
          %p391 = pneg %p113
        $region22: #{sequence_embedding_forward.7} parent=11 // pred_check_branch
          %393 = sbr.rel (%p391) target = $region24
        $region23: #{sequence_embedding_forward.7} parent=11 // pred_region
          _
        $region24: #{sequence_embedding_forward.7} parent=11 // pred_fallthru
          _
        // Predicated region
        $region25: #{sequence_embedding_forward.7} parent=11 // pred_check
          %p394 = pneg %p134
        $region26: #{sequence_embedding_forward.7} parent=11 // pred_check_branch
          %396 = sbr.rel (%p394) target = $region28
        $region27: #{sequence_embedding_forward.7} parent=11 // pred_region
          _
        $region28: #{sequence_embedding_forward.7} parent=11 // pred_fallthru
          _
        // Predicated region
        $region29: #{sequence_embedding_forward.7} parent=11 // pred_check
          %p397 = pneg %p155
        $region30: #{sequence_embedding_forward.7} parent=11 // pred_check_branch
          %399 = sbr.rel (%p397) target = $region32
        $region31: #{sequence_embedding_forward.7} parent=11 // pred_region
          _
        $region32: #{sequence_embedding_forward.7} parent=11 // pred_fallthru
          _
        // Predicated region
        $region33: #{sequence_embedding_forward.7} parent=11 // pred_check
          %p400 = pneg %p176
        $region34: #{sequence_embedding_forward.7} parent=11 // pred_check_branch
          %402 = sbr.rel (%p400) target = $region36
        $region35: #{sequence_embedding_forward.7} parent=11 // pred_region
          %404 = vsyncadd [#allocation6], 0
          %s406 = sshll.u32 %s6, 4
          %s407 = int_to_ptr.hbm [resolvable:$true] %s406
          %s408 = sshll.u32 [#allocation5], 4
          %s409 = int_to_ptr.vmem [resolvable:$true] %s408
          %411 = dma.hbm_to_vmem [thread:$0]  %s407, 16, %s409, [#allocation6]
        $region36: #{sequence_embedding_forward.7} parent=11 // pred_fallthru
          _
        // Predicated region
        $region37: #{sequence_embedding_forward.7} parent=11 // pred_check
          %p412 = pneg %p197
        $region38: #{sequence_embedding_forward.7} parent=11 // pred_check_branch
          %414 = sbr.rel (%p412) target = $region40
        $region39: #{sequence_embedding_forward.7} parent=11 // pred_region
          _
        $region40: #{sequence_embedding_forward.7} parent=11 // pred_fallthru
          _
        // Predicated region
        $region41: #{sequence_embedding_forward.7} parent=11 // pred_check
          %p415 = pneg %p218
        $region42: #{sequence_embedding_forward.7} parent=11 // pred_check_branch
          %417 = sbr.rel (%p415) target = $region44
        $region43: #{sequence_embedding_forward.7} parent=11 // pred_region
          %419 = vsyncadd [#allocation8], 0
          %s421 = sshll.u32 %s8, 4
          %s422 = int_to_ptr.hbm [resolvable:$true] %s421
          %s423 = sshll.u32 [#allocation7], 4
          %s424 = int_to_ptr.vmem [resolvable:$true] %s423
          %426 = dma.hbm_to_vmem [thread:$0]  %s422, 16, %s424, [#allocation8]
        $region44: #{sequence_embedding_forward.7} parent=11 // pred_fallthru
          _
        // Predicated region
        $region45: #{sequence_embedding_forward.7} parent=11 // pred_check
          %p427 = pneg %p239
        $region46: #{sequence_embedding_forward.7} parent=11 // pred_check_branch
          %429 = sbr.rel (%p427) target = $region48
        $region47: #{sequence_embedding_forward.7} parent=11 // pred_region
          _
        $region48: #{sequence_embedding_forward.7} parent=11 // pred_fallthru
          _
        // Predicated region
        $region49: #{sequence_embedding_forward.7} parent=11 // pred_check
          %p430 = pneg %p260
        $region50: #{sequence_embedding_forward.7} parent=11 // pred_check_branch
          %432 = sbr.rel (%p430) target = $region52
        $region51: #{sequence_embedding_forward.7} parent=11 // pred_region
          _
        $region52: #{sequence_embedding_forward.7} parent=11 // pred_fallthru
          _
        // Predicated region
        $region53: #{sequence_embedding_forward.7} parent=11 // pred_check
          %p433 = pneg %p281
        $region54: #{sequence_embedding_forward.7} parent=11 // pred_check_branch
          %435 = sbr.rel (%p433) target = $region56
        $region55: #{sequence_embedding_forward.7} parent=11 // pred_region
          _
        $region56: #{sequence_embedding_forward.7} parent=11 // pred_fallthru
          _
        // Predicated region
        $region57: #{sequence_embedding_forward.7} parent=11 // pred_check
          %p436 = pneg %p302
        $region58: #{sequence_embedding_forward.7} parent=11 // pred_check_branch
          %438 = sbr.rel (%p436) target = $region60
        $region59: #{sequence_embedding_forward.7} parent=11 // pred_region
          %440 = vsyncadd [#allocation8], 0
          %s442 = sshll.u32 %s12, 4
          %s443 = int_to_ptr.hbm [resolvable:$true] %s442
          %s444 = sshll.u32 [#allocation9], 4
          %s445 = int_to_ptr.vmem [resolvable:$true] %s444
          %447 = dma.hbm_to_vmem [thread:$0]  %s443, 16, %s445, [#allocation8]
        $region60: #{sequence_embedding_forward.7} parent=11 // pred_fallthru
          _
        // Predicated region
        $region61: #{sequence_embedding_forward.7} parent=11 // pred_check
          %p448 = pneg %p323
        $region62: #{sequence_embedding_forward.7} parent=11 // pred_check_branch
          %450 = sbr.rel (%p448) target = $region64
        $region63: #{sequence_embedding_forward.7} parent=11 // pred_region
          _
        $region64: #{sequence_embedding_forward.7} parent=11 // pred_fallthru
          _
        // Predicated region
        $region65: #{sequence_embedding_forward.7} parent=11 // pred_check
          %p451 = pneg %p344
        $region66: #{sequence_embedding_forward.7} parent=11 // pred_check_branch
          %453 = sbr.rel (%p451) target = $region68
        $region67: #{sequence_embedding_forward.7} parent=11 // pred_region
          %455 = vsyncadd [#allocation11], 0
          %s457 = sshll.u32 %s14, 4
          %s458 = int_to_ptr.hbm [resolvable:$true] %s457
          %s459 = sshll.u32 [#allocation10], 4
          %s460 = int_to_ptr.vmem [resolvable:$true] %s459
          %462 = dma.hbm_to_vmem [thread:$0]  %s458, 16, %s460, [#allocation11]
        $region68: #{sequence_embedding_forward.7} parent=11 // pred_fallthru
          _
      $region12: #{sequence_embedding_forward.7} parent=5 // pred_fallthru
        _
      %p463 = scmp.lt.s32.totalorder %s24, 2
      // Predicated region
      $region69: #{sequence_embedding_forward.7} parent=5 // pred_check
        %p464 = pneg %p463
      $region70: #{sequence_embedding_forward.7} parent=5 // pred_check_branch
        %466 = sbr.rel (%p464) target = $region72
      $region71: #{sequence_embedding_forward.7} parent=5 // pred_region
        // Predicated region
        $region73: #{sequence_embedding_forward.7} parent=71 // pred_check
          %p467 = pneg %p44
        $region74: #{sequence_embedding_forward.7} parent=71 // pred_check_branch
          %469 = sbr.rel (%p467) target = $region76
        $region75: #{sequence_embedding_forward.7} parent=71 // pred_region
          %p470 = scmp.lt.s32.totalorder %s24, 1
          %s471 = scalar_select %p470, %s24, 1
          %s472 = smul.addr %s471, 4
          %s473 = scalar_lea.vmem %s0, %s472
        $region76: #{sequence_embedding_forward.7} parent=71 // pred_fallthru
          _
      $region72: #{sequence_embedding_forward.7} parent=5 // pred_fallthru
        _
      %p474 = scmp.le.s32.totalorder 1, %s24
      %p475 = scmp.lt.s32.totalorder %s24, 3
      %p476 = pnand %p474, %p475
      %p477 = pneg %p476
      // Predicated region
      $region77: #{sequence_embedding_forward.7} parent=5 // pred_check
        _
      $region78: #{sequence_embedding_forward.7} parent=5 // pred_check_branch
        %479 = sbr.rel (%p476) target = $region80
      $region79: #{sequence_embedding_forward.7} parent=5 // pred_region
        %s480 = ssub.s32 %s24, 1
        // Predicated region
        $region81: #{sequence_embedding_forward.7} parent=79 // pred_check
          %p481 = pneg %p176
        $region82: #{sequence_embedding_forward.7} parent=79 // pred_check_branch
          %483 = sbr.rel (%p481) target = $region84
        $region83: #{sequence_embedding_forward.7} parent=79 // pred_region
          %485 = dma.done [#allocation6], 16
        $region84: #{sequence_embedding_forward.7} parent=79 // pred_fallthru
          _
        // Predicated region
        $region85: #{sequence_embedding_forward.7} parent=79 // pred_check
          %p486 = pneg %p218
        $region86: #{sequence_embedding_forward.7} parent=79 // pred_check_branch
          %488 = sbr.rel (%p486) target = $region88
        $region87: #{sequence_embedding_forward.7} parent=79 // pred_region
          %490 = dma.done [#allocation8], 16
        $region88: #{sequence_embedding_forward.7} parent=79 // pred_fallthru
          _
        // Predicated region
        $region89: #{sequence_embedding_forward.7} parent=79 // pred_check
          %p491 = pneg %p302
        $region90: #{sequence_embedding_forward.7} parent=79 // pred_check_branch
          %493 = sbr.rel (%p491) target = $region92
        $region91: #{sequence_embedding_forward.7} parent=79 // pred_region
          %495 = dma.done [#allocation8], 16
        $region92: #{sequence_embedding_forward.7} parent=79 // pred_fallthru
          _
        // Predicated region
        $region93: #{sequence_embedding_forward.7} parent=79 // pred_check
          %p496 = pneg %p344
        $region94: #{sequence_embedding_forward.7} parent=79 // pred_check_branch
          %498 = sbr.rel (%p496) target = $region96
        $region95: #{sequence_embedding_forward.7} parent=79 // pred_region
          %500 = dma.done [#allocation11], 16
        $region96: #{sequence_embedding_forward.7} parent=79 // pred_fallthru
          _
        %p501 = scmp.lt.s32.totalorder %s29, 1
        %s502 = scalar_select %p501, %s29, 1
        %s503 = smul.addr %s502, 4
        %s504 = scalar_lea.vmem %s0, %s503
        %p505 = pneg %p50
        %p506 = pneg %p47
        %p507 = pneg %p71
        %p508 = pneg %p68
        %p509 = pneg %p92
        %p510 = pneg %p89
        %p511 = pneg %p113
        %p512 = pneg %p110
        %p513 = pneg %p134
        %p514 = pneg %p131
        %p515 = pneg %p155
        %p516 = pneg %p152
        %p517 = pneg %p176
        %p518 = pneg %p173
        %p519 = pneg %p197
        %p520 = pneg %p194
        %p521 = pneg %p218
        %p522 = pneg %p215
        %p523 = pneg %p239
        %p524 = pneg %p236
        %p525 = pneg %p260
        %p526 = pneg %p257
        %p527 = pneg %p281
        %p528 = pneg %p278
        %p529 = pneg %p302
        %p530 = pneg %p299
        %p531 = pneg %p323
        %p532 = pneg %p320
        %p533 = pneg %p344
        %p534 = pneg %p341
        %p535 = pneg %p370
        %p536 = pneg %p367
        %p537 = scmp.lt.s32.totalorder %s29, 1
        %s538 = scalar_select %p537, %s29, 1
        %s539 = smul.addr %s538, 4
        %s540 = scalar_lea.vmem %s15, %s539
        %p541 = scmp.lt.s32.totalorder %s29, 1
        %s542 = scalar_select %p541, %s29, 1
        %s543 = smul.addr %s542, 4
        %s544 = scalar_lea.vmem %s0, %s543
        %p545 = scmp.lt.s32.totalorder %s29, 1
        %s546 = scalar_select %p545, %s29, 1
        %s547 = smul.addr %s546, 4
        %s548 = scalar_lea.vmem %s15, %s547
        %v550 = vld [vmem:[%s544] sm:$0xf]
        %v551 = vunpack.c.l.bf16 %v550
        %v552 = vld [vmem:[%s1] sm:$0x1]
        %v553 = vld [vmem:[%s2] sm:$0x1]
        %vm554 = vcmask 261120
        %v555 = vsel %vm554, %v551, 0.0
        %556 = vadd.xlane.f32.xlu0 %v555
        %v557 = vpop.xlane.xlu0 %556
        %v558 = vrcp.pop 32.0
        %v559 = vmul.f32 32.0, %v558
        %v560 = vsub.f32 1.0, %v559
        %v561 = vmul.f32 %v558, %v560
        %v562 = vadd.f32 %v558, %v561
        %vm563 = vweird.f32 %v558
        %v564 = vsel %vm563, %v558, %v562
        %v565 = vmul.f32 %v557, %v564
        %v566 = vsub.f32 %v551, %v565
        %v567 = vmul.f32 %v566, %v566
        %v568 = vsel %vm554, %v567, 0.0
        %569 = vadd.xlane.f32.xlu0 %v568
        %v570 = vpop.xlane.xlu0 %569
        %v571 = vmul.f32 %v570, %v564
        %v572 = vadd.f32 %v571, 1e-05
        %v573 = vrsqrt.pop %v572
        %v574 = vmul.f32 %v573, %v572
        %v575 = vmul.f32 %v574, %v573
        %v576 = vmul.f32 0.5, %v575
        %v577 = vsub.f32 1.5, %v576
        %v578 = vmul.f32 %v573, %v577
        %vm579 = vweird.f32 %v572
        %vm580 = vweird.f32 %v573
        %vm581 = vmor %vm579, %vm580
        %v582 = vsel %vm581, %v573, %v578
        %v583 = vmul.f32 %v566, %v582
        %v585 = vperm.slane %v552, 0
        %v587 = vmul.f32 %v583, %v585
        %v589 = vperm.slane %v553, 0
        %v591 = vadd.f32 %v587, %v589
        %v592 = vpack.c.bf16 %v591, %v591
        %v593 = vld [vmem:[%s3] sm:$0xf]
        %v594 = vld [vmem:[%s3 + $0x4] sm:$0xf]
        %v595 = vld [vmem:[%s3 + $0x8] sm:$0xf]
        %v596 = vld [vmem:[%s3 + $0xc] sm:$0xf]
        %v597 = vld [vmem:[%s4] sm:$0x1]
        %v599 = vperm.slane %v597, 0
        %v605 = vunpack.c.l.b16 %v593
        %v606 = vunpack.c.l.b16 %v594
        %v607 = vunpack.c.l.b16 %v595
        %v608 = vunpack.c.l.b16 %v596
        %v609 = vpack.c.b16 %v606, %v605
        %v610 = vpack.c.b16 %v608, %v607
        %v614 = vsel %vm554, %v592, 0
        %616 = vmatpush.bf16.msra.mxu0 0
        %617 = vmatpush.bf16.msra.mxu0 0
        %618 = vmatpush.bf16.msra.mxu0 0
        %619 = vmatpush.bf16.msra.mxu0 0
        %620 = vmatpush.bf16.msra.mxu0 0
        %621 = vmatpush.bf16.msra.mxu0 0
        %622 = vmatpush.bf16.msra.mxu0 %v610
        %623 = vmatpush.bf16.msra.mxu0 %v609
        %624 = vmatmul.bf16.gmra.mxu0 %v614
        %v625 = vpop.f32.mrf.mxu0
        %v626 = vadd.f32 %v599, %v625
        %v627 = vpop.f32.mrf.mxu0
        %628 = vdwg.mxu0
        %v629 = vld [vmem:[%s5] sm:$0x7]
        %v630 = vlaneseq
        %v631 = vshrl.u32 %v630, 7
        %vm632 = vcmp.eq.s32.totalorder %v631, 0
        %v633 = vrot.slane %v626, 7
        %v634 = vsel %vm632, 0.0, %v633
        %vm635 = vcmp.eq.s32.totalorder %v631, 7
        %v636 = vrot.slane %v626, 1
        %v637 = vsel %vm635, 0.0, %v636
        %v638 = vperm.slane %v629, 0
        %v639 = vmul.f32 %v634, %v638
        %v640 = vperm.slane %v629, 1
        %v641 = vmul.f32 %v626, %v640
        %v642 = vadd.f32 %v639, %v641
        %v643 = vperm.slane %v629, 2
        %v644 = vmul.f32 %v637, %v643
        %v645 = vadd.f32 %v642, %v644
        %v646 = vld [vmem:[#allocation5] sm:$0x1]
        %v648 = vperm.slane %v646, 0
        %v650 = vadd.f32 %v645, %v648
        %v651 = vxor.u32 %v650, 2147483648
        %v652 = vmul.f32 %v651, 1.442695
        %v653 = vpow.pop %v652
        %v654 = vadd.f32 %v653, 1.0
        %v655 = vrcp.pop %v654
        %v656 = vmul.f32 %v654, %v655
        %v657 = vsub.f32 1.0, %v656
        %v658 = vmul.f32 %v655, %v657
        %v659 = vadd.f32 %v655, %v658
        %vm660 = vweird.f32 %v654
        %vm661 = vweird.f32 %v655
        %vm662 = vmor %vm660, %vm661
        %v663 = vsel %vm662, %v655, %v659
        %v664 = vand.u32 2147483647, %v654
        %vm665 = vcmp.eq.f32.partialorder %v664, 8.507059e+37
        %v666 = vand.u32 %v654, 2147483648
        %v667 = vor.u32 1.1754944e-38, %v666
        %v668 = vsel %vm665, %v667, %v663
        %v669 = vmul.f32 1.0, %v668
        %v670 = vmul.f32 %v650, %v669
        %671 = vst [vmem:[#allocation2] sm:$0xff] %v670
        %v672 = vpack.c.bf16 %v670, %v670
        %v673 = vld [vmem:[%s7] sm:$0xf]
        %v674 = vld [vmem:[%s7 + $0x4] sm:$0xf]
        %v675 = vld [vmem:[%s7 + $0x8] sm:$0xf]
        %v676 = vld [vmem:[%s7 + $0xc] sm:$0xf]
        %v677 = vld [vmem:[%s7 + $0x10] sm:$0xf]
        %v678 = vld [vmem:[%s7 + $0x14] sm:$0xf]
        %v679 = vld [vmem:[%s7 + $0x18] sm:$0xf]
        %v680 = vld [vmem:[%s7 + $0x1c] sm:$0xf]
        %v681 = vld [vmem:[%s7 + $0x20] sm:$0xf]
        %v682 = vld [vmem:[%s7 + $0x24] sm:$0xf]
        %v683 = vld [vmem:[%s7 + $0x28] sm:$0xf]
        %v684 = vld [vmem:[%s7 + $0x2c] sm:$0xf]
        %v685 = vld [vmem:[%s7 + $0x30] sm:$0xf]
        %v686 = vld [vmem:[%s7 + $0x34] sm:$0xf]
        %v687 = vld [vmem:[%s7 + $0x38] sm:$0xf]
        %v688 = vld [vmem:[%s7 + $0x3c] sm:$0xf]
        %v689 = vld [vmem:[#allocation7] sm:$0x1]
        %v691 = vperm.slane %v689, 0
        %v709 = vunpack.c.l.b16 %v673
        %v710 = vunpack.c.l.b16 %v674
        %v711 = vunpack.c.l.b16 %v675
        %v712 = vunpack.c.l.b16 %v676
        %v713 = vunpack.c.l.b16 %v677
        %v714 = vunpack.c.l.b16 %v678
        %v715 = vunpack.c.l.b16 %v679
        %v716 = vunpack.c.l.b16 %v680
        %v717 = vunpack.c.l.b16 %v681
        %v718 = vunpack.c.l.b16 %v682
        %v719 = vunpack.c.l.b16 %v683
        %v720 = vunpack.c.l.b16 %v684
        %v721 = vunpack.c.l.b16 %v685
        %v722 = vunpack.c.l.b16 %v686
        %v723 = vunpack.c.l.b16 %v687
        %v724 = vunpack.c.l.b16 %v688
        %v725 = vpack.c.b16 %v710, %v709
        %v726 = vpack.c.b16 %v712, %v711
        %v727 = vpack.c.b16 %v714, %v713
        %v728 = vpack.c.b16 %v716, %v715
        %v729 = vpack.c.b16 %v718, %v717
        %v730 = vpack.c.b16 %v720, %v719
        %v731 = vpack.c.b16 %v722, %v721
        %v732 = vpack.c.b16 %v724, %v723
        %741 = vmatpush.bf16.msra.mxu0 %v732
        %742 = vmatpush.bf16.msra.mxu0 %v731
        %743 = vmatpush.bf16.msra.mxu0 %v730
        %744 = vmatpush.bf16.msra.mxu0 %v729
        %745 = vmatpush.bf16.msra.mxu0 %v728
        %746 = vmatpush.bf16.msra.mxu0 %v727
        %747 = vmatpush.bf16.msra.mxu0 %v726
        %748 = vmatpush.bf16.msra.mxu0 %v725
        %749 = vmatmul.bf16.gmra.mxu0 %v672
        %v750 = vpop.f32.mrf.mxu0
        %v751 = vadd.f32 %v691, %v750
        %v752 = vpop.f32.mrf.mxu0
        %753 = vdwg.mxu0
        %v754 = vmax.f32 %v751, 0.0
        %v755 = vand.u32 2147483647, %v751
        %v756 = vsub.f32 0.0, %v755
        %v757 = vmul.f32 %v756, 1.442695
        %v758 = vpow.pop %v757
        %v759 = vadd.f32 %v758, 1.0
        %v760 = vlog2.pop %v759
        %v761 = vmul.f32 %v760, 0.6931472
        %v762 = vmul.f32 -0.5, %v758
        %v763 = vadd.f32 %v762, 1.0
        %v764 = vmul.f32 %v763, %v758
        %v765 = vand.u32 2147483647, %v758
        %vm766 = vcmp.lt.f32.partialorder %v765, 0.0004427343
        %v767 = vsel %vm766, %v764, %v761
        %v768 = vadd.f32 %v754, %v767
        %769 = vst [vmem:[#allocation3] sm:$0xff] %v768
        %v770 = vld [vmem:[%s11] sm:$0xff]
        %v771 = vld [vmem:[%s11 + $0x8] sm:$0xff]
        %v772 = vld [vmem:[#allocation9] sm:$0x1]
        %v773 = vld [vmem:[%s9] sm:$0xf]
        %v774 = vld [vmem:[%s9 + $0x4] sm:$0xf]
        %v775 = vld [vmem:[%s10] sm:$0xff]
        %v776 = vld [vmem:[%s10 + $0x8] sm:$0xff]
        %v777 = vadd.s32 %v631, 8
        %v778 = vlaneseq
        %v779 = vand.u32 %v778, 127
        %vm780 = vcmp.lt.s32.totalorder %v631, 8
        %vm781 = vcmp.lt.s32.totalorder %v777, 8
        %vm782 = vcmp.lt.s32.totalorder %v779, 64
        %vm783 = vmxor %vm780, %vm782
        %vm784 = vmxor %vm781, %vm782
        %vm785 = vmxor %vm783, 1
        %vm786 = vmxor %vm784, 1
        %v787 = vld [vmem:[#allocation3] sm:$0xff]
        %v788 = vld [vmem:[#allocation2] sm:$0xff]
        %v789 = vpack.c.bf16 %v788, %v788
        %791 = vset.pattern.permute.xlu0 0
        %792 = vperm.xlu0 %791, %v775
        %v793 = vpop.permute.xlu0 %792
        %796 = vset.pattern.permute.xlu0 0
        %797 = vperm.xlu0 %796, %v776
        %v798 = vpop.permute.xlu0 %797
        %v802 = vunpack.c.l.b16 %v773
        %v803 = vunpack.c.l.b16 %v774
        %v804 = vpack.c.b16 %v803, %v802
        %806 = vmatpush.bf16.xpose.msra.mxu0 0
        %807 = vmatpush.bf16.xpose.msra.mxu0 0
        %808 = vmatpush.bf16.xpose.msra.mxu0 0
        %809 = vmatpush.bf16.xpose.msra.mxu0 0
        %810 = vmatpush.bf16.xpose.msra.mxu0 0
        %811 = vmatpush.bf16.xpose.msra.mxu0 0
        %812 = vmatpush.bf16.xpose.msra.mxu0 0
        %813 = vmatpush.bf16.xpose.msra.mxu0 %v789
        %814 = vmatmul.bf16.gmra.mxu0 %v804
        %v815 = vpop.f32.mrf.mxu0
        %v816 = vadd.f32 %v793, %v815
        %v817 = vpop.f32.mrf.mxu0
        %v818 = vadd.f32 %v798, %v817
        %819 = vdwg.mxu0
        %v820 = vmul.f32 %v787, %v788
        %v821 = vperm.slane %v787, 0
        %v822 = vmul.f32 %v821, %v770
        %v823 = vmul.f32 %v821, %v771
        %v824 = vmul.f32 %v822, 1.442695
        %v825 = vpow.pop %v824
        %v826 = vmul.f32 %v823, 1.442695
        %v827 = vpow.pop %v826
        %v828 = vmul.f32 %v825, 0.0
        %v829 = vmul.f32 %v827, 0.0
        %v830 = vperm.slane %v820, 0
        %832 = vset.pattern.permute.xlu0 0
        %833 = vperm.xlu0 %832, %v816
        %v834 = vpop.permute.xlu0 %833
        %837 = vset.pattern.permute.xlu0 0
        %838 = vperm.xlu0 %837, %v818
        %v839 = vpop.permute.xlu0 %838
        %v841 = vmul.f32 %v830, %v834
        %v842 = vmul.f32 %v830, %v839
        %v843 = vsel %vm785, %v841, 0.0
        %v844 = vsel %vm786, %v842, 0.0
        %v845 = vadd.f32 %v828, %v843
        %v846 = vadd.f32 %v829, %v844
        %v847 = vadd.f32 %v845, %v846
        %v848 = vrot.slane %v847, 4
        %v849 = vadd.f32 %v847, %v848
        %v850 = vrot.slane %v849, 2
        %v851 = vadd.f32 %v849, %v850
        %v852 = vrot.slane %v851, 1
        %v853 = vadd.f32 %v851, %v852
        %v854 = vperm.slane %v787, 1
        %v855 = vmul.f32 %v854, %v770
        %v856 = vmul.f32 %v854, %v771
        %v857 = vmul.f32 %v855, 1.442695
        %v858 = vpow.pop %v857
        %v859 = vmul.f32 %v856, 1.442695
        %v860 = vpow.pop %v859
        %v861 = vmul.f32 %v858, %v845
        %v862 = vmul.f32 %v860, %v846
        %v863 = vperm.slane %v820, 1
        %864 = vset.pattern.permute.xlu0 1
        %865 = vperm.xlu0 %864, %v816
        %v866 = vpop.permute.xlu0 %865
        %868 = vset.pattern.permute.xlu0 1
        %869 = vperm.xlu0 %868, %v818
        %v870 = vpop.permute.xlu0 %869
        %v872 = vmul.f32 %v863, %v866
        %v873 = vmul.f32 %v863, %v870
        %v874 = vsel %vm785, %v872, 0.0
        %v875 = vsel %vm786, %v873, 0.0
        %v876 = vadd.f32 %v861, %v874
        %v877 = vadd.f32 %v862, %v875
        %v878 = vadd.f32 %v876, %v877
        %v879 = vrot.slane %v878, 4
        %v880 = vadd.f32 %v878, %v879
        %v881 = vrot.slane %v880, 2
        %v882 = vadd.f32 %v880, %v881
        %v883 = vrot.slane %v882, 1
        %v884 = vadd.f32 %v882, %v883
        %v885 = vperm.slane %v787, 2
        %v886 = vmul.f32 %v885, %v770
        %v887 = vmul.f32 %v885, %v771
        %v888 = vmul.f32 %v886, 1.442695
        %v889 = vpow.pop %v888
        %v890 = vmul.f32 %v887, 1.442695
        %v891 = vpow.pop %v890
        %v892 = vmul.f32 %v889, %v876
        %v893 = vmul.f32 %v891, %v877
        %v894 = vperm.slane %v820, 2
        %895 = vset.pattern.permute.xlu0 2
        %896 = vperm.xlu0 %895, %v816
        %v897 = vpop.permute.xlu0 %896
        %899 = vset.pattern.permute.xlu0 2
        %900 = vperm.xlu0 %899, %v818
        %v901 = vpop.permute.xlu0 %900
        %v903 = vmul.f32 %v894, %v897
        %v904 = vmul.f32 %v894, %v901
        %v905 = vsel %vm785, %v903, 0.0
        %v906 = vsel %vm786, %v904, 0.0
        %v907 = vadd.f32 %v892, %v905
        %v908 = vadd.f32 %v893, %v906
        %v909 = vadd.f32 %v907, %v908
        %v910 = vrot.slane %v909, 4
        %v911 = vadd.f32 %v909, %v910
        %v912 = vrot.slane %v911, 2
        %v913 = vadd.f32 %v911, %v912
        %v914 = vrot.slane %v913, 1
        %v915 = vadd.f32 %v913, %v914
        %v916 = vperm.slane %v787, 3
        %v917 = vmul.f32 %v916, %v770
        %v918 = vmul.f32 %v916, %v771
        %v919 = vmul.f32 %v917, 1.442695
        %v920 = vpow.pop %v919
        %v921 = vmul.f32 %v918, 1.442695
        %v922 = vpow.pop %v921
        %v923 = vmul.f32 %v920, %v907
        %v924 = vmul.f32 %v922, %v908
        %v925 = vperm.slane %v820, 3
        %926 = vset.pattern.permute.xlu0 3
        %927 = vperm.xlu0 %926, %v816
        %v928 = vpop.permute.xlu0 %927
        %930 = vset.pattern.permute.xlu0 3
        %931 = vperm.xlu0 %930, %v818
        %v932 = vpop.permute.xlu0 %931
        %v934 = vmul.f32 %v925, %v928
        %v935 = vmul.f32 %v925, %v932
        %v936 = vsel %vm785, %v934, 0.0
        %v937 = vsel %vm786, %v935, 0.0
        %v938 = vadd.f32 %v923, %v936
        %v939 = vadd.f32 %v924, %v937
        %v940 = vadd.f32 %v938, %v939
        %v941 = vrot.slane %v940, 4
        %v942 = vadd.f32 %v940, %v941
        %v943 = vrot.slane %v942, 2
        %v944 = vadd.f32 %v942, %v943
        %v945 = vrot.slane %v944, 1
        %v946 = vadd.f32 %v944, %v945
        %v947 = vperm.slane %v787, 4
        %v948 = vmul.f32 %v947, %v770
        %v949 = vmul.f32 %v947, %v771
        %v950 = vmul.f32 %v948, 1.442695
        %v951 = vpow.pop %v950
        %v952 = vmul.f32 %v949, 1.442695
        %v953 = vpow.pop %v952
        %v954 = vmul.f32 %v951, %v938
        %v955 = vmul.f32 %v953, %v939
        %v956 = vperm.slane %v820, 4
        %957 = vset.pattern.permute.xlu0 4
        %958 = vperm.xlu0 %957, %v816
        %v959 = vpop.permute.xlu0 %958
        %961 = vset.pattern.permute.xlu0 4
        %962 = vperm.xlu0 %961, %v818
        %v963 = vpop.permute.xlu0 %962
        %v965 = vmul.f32 %v956, %v959
        %v966 = vmul.f32 %v956, %v963
        %v967 = vsel %vm785, %v965, 0.0
        %v968 = vsel %vm786, %v966, 0.0
        %v969 = vadd.f32 %v954, %v967
        %v970 = vadd.f32 %v955, %v968
        %v971 = vadd.f32 %v969, %v970
        %v972 = vrot.slane %v971, 4
        %v973 = vadd.f32 %v971, %v972
        %v974 = vrot.slane %v973, 2
        %v975 = vadd.f32 %v973, %v974
        %v976 = vrot.slane %v975, 1
        %v977 = vadd.f32 %v975, %v976
        %v978 = vperm.slane %v787, 5
        %v979 = vmul.f32 %v978, %v770
        %v980 = vmul.f32 %v978, %v771
        %v981 = vmul.f32 %v979, 1.442695
        %v982 = vpow.pop %v981
        %v983 = vmul.f32 %v980, 1.442695
        %v984 = vpow.pop %v983
        %v985 = vmul.f32 %v982, %v969
        %v986 = vmul.f32 %v984, %v970
        %v987 = vperm.slane %v820, 5
        %988 = vset.pattern.permute.xlu0 5
        %989 = vperm.xlu0 %988, %v816
        %v990 = vpop.permute.xlu0 %989
        %992 = vset.pattern.permute.xlu0 5
        %993 = vperm.xlu0 %992, %v818
        %v994 = vpop.permute.xlu0 %993
        %v996 = vmul.f32 %v987, %v990
        %v997 = vmul.f32 %v987, %v994
        %v998 = vsel %vm785, %v996, 0.0
        %v999 = vsel %vm786, %v997, 0.0
        %v1000 = vadd.f32 %v985, %v998
        %v1001 = vadd.f32 %v986, %v999
        %v1002 = vadd.f32 %v1000, %v1001
        %v1003 = vrot.slane %v1002, 4
        %v1004 = vadd.f32 %v1002, %v1003
        %v1005 = vrot.slane %v1004, 2
        %v1006 = vadd.f32 %v1004, %v1005
        %v1007 = vrot.slane %v1006, 1
        %v1008 = vadd.f32 %v1006, %v1007
        %v1009 = vperm.slane %v787, 6
        %v1010 = vmul.f32 %v1009, %v770
        %v1011 = vmul.f32 %v1009, %v771
        %v1012 = vmul.f32 %v1010, 1.442695
        %v1013 = vpow.pop %v1012
        %v1014 = vmul.f32 %v1011, 1.442695
        %v1015 = vpow.pop %v1014
        %v1016 = vmul.f32 %v1013, %v1000
        %v1017 = vmul.f32 %v1015, %v1001
        %v1018 = vperm.slane %v820, 6
        %1019 = vset.pattern.permute.xlu0 6
        %1020 = vperm.xlu0 %1019, %v816
        %v1021 = vpop.permute.xlu0 %1020
        %1023 = vset.pattern.permute.xlu0 6
        %1024 = vperm.xlu0 %1023, %v818
        %v1025 = vpop.permute.xlu0 %1024
        %v1027 = vmul.f32 %v1018, %v1021
        %v1028 = vmul.f32 %v1018, %v1025
        %v1029 = vsel %vm785, %v1027, 0.0
        %v1030 = vsel %vm786, %v1028, 0.0
        %v1031 = vadd.f32 %v1016, %v1029
        %v1032 = vadd.f32 %v1017, %v1030
        %v1033 = vadd.f32 %v1031, %v1032
        %v1034 = vrot.slane %v1033, 4
        %v1035 = vadd.f32 %v1033, %v1034
        %v1036 = vrot.slane %v1035, 2
        %v1037 = vadd.f32 %v1035, %v1036
        %v1038 = vrot.slane %v1037, 1
        %v1039 = vadd.f32 %v1037, %v1038
        %v1040 = vperm.slane %v787, 7
        %v1041 = vmul.f32 %v1040, %v770
        %v1042 = vmul.f32 %v1040, %v771
        %v1043 = vmul.f32 %v1041, 1.442695
        %v1044 = vpow.pop %v1043
        %v1045 = vmul.f32 %v1042, 1.442695
        %v1046 = vpow.pop %v1045
        %v1047 = vmul.f32 %v1044, %v1031
        %v1048 = vmul.f32 %v1046, %v1032
        %v1049 = vperm.slane %v820, 7
        %1050 = vset.pattern.permute.xlu0 7
        %1051 = vperm.xlu0 %1050, %v816
        %v1052 = vpop.permute.xlu0 %1051
        %1054 = vset.pattern.permute.xlu0 7
        %1055 = vperm.xlu0 %1054, %v818
        %v1056 = vpop.permute.xlu0 %1055
        %v1058 = vmul.f32 %v1049, %v1052
        %v1059 = vmul.f32 %v1049, %v1056
        %v1060 = vsel %vm785, %v1058, 0.0
        %v1061 = vsel %vm786, %v1059, 0.0
        %v1062 = vadd.f32 %v1047, %v1060
        %v1063 = vadd.f32 %v1048, %v1061
        %v1064 = vadd.f32 %v1062, %v1063
        %v1065 = vrot.slane %v1064, 4
        %v1066 = vadd.f32 %v1064, %v1065
        %v1067 = vrot.slane %v1066, 2
        %v1068 = vadd.f32 %v1066, %v1067
        %v1069 = vrot.slane %v1068, 1
        %v1070 = vadd.f32 %v1068, %v1069
        %vm1071 = vcmask 1040384
        %v1072 = vsel %vm1071, %v853, %v884
        %vm1073 = vcmask 1041408
        %v1074 = vsel %vm1073, %v1072, %v915
        %vm1075 = vcmask 1042432
        %v1076 = vsel %vm1075, %v1074, %v946
        %vm1077 = vcmask 1043456
        %v1078 = vsel %vm1077, %v1076, %v977
        %vm1079 = vcmask 1044480
        %v1080 = vsel %vm1079, %v1078, %v1008
        %vm1081 = vcmask 1045504
        %v1082 = vsel %vm1081, %v1080, %v1039
        %vm1083 = vcmask 1046528
        %v1084 = vsel %vm1083, %v1082, %v1070
        %1085 = vst [vmem:[#allocation4] sm:$0xff] %v1084
        %v1086 = vld [vmem:[#allocation4] sm:$0xff]
        %v1087 = vld [vmem:[#allocation2] sm:$0xff]
        %v1089 = vperm.slane %v772, 0
        %v1091 = vmul.f32 %v1087, %v1089
        %v1092 = vadd.f32 %v1086, %v1091
        %v1093 = vpack.c.bf16 %v1092, %v1092
        %v1094 = vld [vmem:[%s13] sm:$0xf]
        %v1095 = vld [vmem:[%s13 + $0x4] sm:$0xf]
        %v1096 = vld [vmem:[%s13 + $0x8] sm:$0xf]
        %v1097 = vld [vmem:[%s13 + $0xc] sm:$0xf]
        %v1098 = vld [vmem:[%s13 + $0x10] sm:$0xf]
        %v1099 = vld [vmem:[%s13 + $0x14] sm:$0xf]
        %v1100 = vld [vmem:[%s13 + $0x18] sm:$0xf]
        %v1101 = vld [vmem:[%s13 + $0x1c] sm:$0xf]
        %v1102 = vld [vmem:[%s13 + $0x20] sm:$0xf]
        %v1103 = vld [vmem:[%s13 + $0x24] sm:$0xf]
        %v1104 = vld [vmem:[%s13 + $0x28] sm:$0xf]
        %v1105 = vld [vmem:[%s13 + $0x2c] sm:$0xf]
        %v1106 = vld [vmem:[%s13 + $0x30] sm:$0xf]
        %v1107 = vld [vmem:[%s13 + $0x34] sm:$0xf]
        %v1108 = vld [vmem:[%s13 + $0x38] sm:$0xf]
        %v1109 = vld [vmem:[%s13 + $0x3c] sm:$0xf]
        %v1110 = vld [vmem:[#allocation10] sm:$0x1]
        %v1112 = vperm.slane %v1110, 0
        %v1130 = vunpack.c.l.b16 %v1094
        %v1131 = vunpack.c.l.b16 %v1095
        %v1132 = vunpack.c.l.b16 %v1096
        %v1133 = vunpack.c.l.b16 %v1097
        %v1134 = vunpack.c.l.b16 %v1098
        %v1135 = vunpack.c.l.b16 %v1099
        %v1136 = vunpack.c.l.b16 %v1100
        %v1137 = vunpack.c.l.b16 %v1101
        %v1138 = vunpack.c.l.b16 %v1102
        %v1139 = vunpack.c.l.b16 %v1103
        %v1140 = vunpack.c.l.b16 %v1104
        %v1141 = vunpack.c.l.b16 %v1105
        %v1142 = vunpack.c.l.b16 %v1106
        %v1143 = vunpack.c.l.b16 %v1107
        %v1144 = vunpack.c.l.b16 %v1108
        %v1145 = vunpack.c.l.b16 %v1109
        %v1146 = vpack.c.b16 %v1131, %v1130
        %v1147 = vpack.c.b16 %v1133, %v1132
        %v1148 = vpack.c.b16 %v1135, %v1134
        %v1149 = vpack.c.b16 %v1137, %v1136
        %v1150 = vpack.c.b16 %v1139, %v1138
        %v1151 = vpack.c.b16 %v1141, %v1140
        %v1152 = vpack.c.b16 %v1143, %v1142
        %v1153 = vpack.c.b16 %v1145, %v1144
        %1162 = vmatpush.bf16.msra.mxu0 %v1153
        %1163 = vmatpush.bf16.msra.mxu0 %v1152
        %1164 = vmatpush.bf16.msra.mxu0 %v1151
        %1165 = vmatpush.bf16.msra.mxu0 %v1150
        %1166 = vmatpush.bf16.msra.mxu0 %v1149
        %1167 = vmatpush.bf16.msra.mxu0 %v1148
        %1168 = vmatpush.bf16.msra.mxu0 %v1147
        %1169 = vmatpush.bf16.msra.mxu0 %v1146
        %1170 = vmatmul.bf16.gmra.mxu0 %v1093
        %v1171 = vpop.f32.mrf.mxu0
        %v1172 = vadd.f32 %v1112, %v1171
        %v1173 = vpop.f32.mrf.mxu0
        %1174 = vdwg.mxu0
        %v1175 = vpack.c.bf16 %v1172, %v1172
        %vm1176 = vcmask 257024
        %1177 = vst.msk [vmem:[%s548] sm:$0xf] %vm1176, %v1175
        %p1178 = scmp.lt.s32.totalorder %s29, 1
        %s1179 = scalar_select %p1178, %s29, 1
        %s1180 = smul.addr %s1179, 4
        %s1181 = scalar_lea.vmem %s15, %s1180
        // Predicated region
        $region97: #{sequence_embedding_forward.7} parent=79 // pred_check
          %p1182 = pneg %p367
        $region98: #{sequence_embedding_forward.7} parent=79 // pred_check_branch
          %1184 = sbr.rel (%p1182) target = $region100
        $region99: #{sequence_embedding_forward.7} parent=79 // pred_region
          _
        $region100: #{sequence_embedding_forward.7} parent=79 // pred_fallthru
          _
      $region80: #{sequence_embedding_forward.7} parent=5 // pred_fallthru
        _
      %p1185 = scmp.le.s32.totalorder 2, %s24
      // Predicated region
      $region101: #{sequence_embedding_forward.7} parent=5 // pred_check
        %p1186 = pneg %p1185
      $region102: #{sequence_embedding_forward.7} parent=5 // pred_check_branch
        %1188 = sbr.rel (%p1186) target = $region104
      $region103: #{sequence_embedding_forward.7} parent=5 // pred_region
        %s1189 = ssub.s32 %s24, 2
        // Predicated region
        $region105: #{sequence_embedding_forward.7} parent=103 // pred_check
          %p1190 = pneg %p373
        $region106: #{sequence_embedding_forward.7} parent=103 // pred_check_branch
          %1192 = sbr.rel (%p1190) target = $region108
        $region107: #{sequence_embedding_forward.7} parent=103 // pred_region
          %p1193 = scmp.lt.s32.totalorder %s30, 1
          %s1194 = scalar_select %p1193, %s30, 1
          %s1195 = smul.addr %s1194, 4
          %s1196 = scalar_lea.vmem %s15, %s1195
        $region108: #{sequence_embedding_forward.7} parent=103 // pred_fallthru
          _
      $region104: #{sequence_embedding_forward.7} parent=5 // pred_fallthru
        _
    $region6: #{sequence_embedding_forward.7} parent=1 // loop_footer
      %s28 = sadd.s32 1, %s24
    $region7: #{sequence_embedding_forward.7} parent=1 // loop_footer_branch
      %23 = sbr.rel target = $region3
    $region8: #{sequence_embedding_forward.7} parent=1 // loop_exit
      _
    %1197 = vsyncpa [#allocation6], 1
    %s1198 = scalar_lea.sflag [#allocation6], 1
    %1199 = vsyncpa %s1198, 1
    %1200 = vsyncpa [#allocation8], 1
    %1201 = vsyncpa [#allocation11], 1

// kernel: sequence_embedding_forward.5
$region0: #{sequence_embedding_forward.5}
  #allocation0 [shape = 'u32[]', space=smem, size = 0x4, offset = 0x4, fixed_abs, tag = 'smem constant byte address 0x4 - core index']
  #allocation1 [shape = 'u32[72,128]{1,0:T(1,128)}', space=vmem, size = 0x9000, scoped, tag = 'internal scratch']
  #allocation2 [shape = 'f32[8,128]{1,0:T(8,128)}', space=vmem, size = 0x1000, scoped, tag = 'scratch operand']
  #allocation3 [shape = 'f32[8,128]{1,0:T(8,128)}', space=vmem, size = 0x1000, scoped, tag = 'scratch operand']
  #allocation4 [shape = 'f32[8,128]{1,0:T(8,128)}', space=vmem, size = 0x1000, scoped, tag = 'scratch operand']
  %s0 = inlined_call_operand.vmem [shape: bf16[2,8,32], index: 0, kind: input, shape index: {}]
  %s1 = inlined_call_operand.vmem [shape: f32[1,32], index: 1, kind: input, shape index: {}]
  %s2 = inlined_call_operand.vmem [shape: f32[1,32], index: 2, kind: input, shape index: {}]
  %s3 = inlined_call_operand.vmem [shape: bf16[32,128], index: 3, kind: input, shape index: {}]
  %s4 = inlined_call_operand.vmem [shape: f32[1,128], index: 4, kind: input, shape index: {}]
  %s5 = inlined_call_operand.vmem [shape: f32[3,128], index: 5, kind: input, shape index: {}]
  %s6 = inlined_call_operand.vmem [shape: f32[1,128], index: 6, kind: input, shape index: {}]
  %s7 = inlined_call_operand.vmem [shape: bf16[128,128], index: 7, kind: input, shape index: {}]
  %s8 = inlined_call_operand.vmem [shape: f32[1,128], index: 8, kind: input, shape index: {}]
  %s9 = inlined_call_operand.vmem [shape: bf16[16,128], index: 9, kind: input, shape index: {}]
  %s10 = inlined_call_operand.vmem [shape: f32[16,1], index: 10, kind: input, shape index: {}]
  %s11 = inlined_call_operand.vmem [shape: f32[16,128], index: 11, kind: input, shape index: {}]
  %s12 = inlined_call_operand.vmem [shape: f32[1,128], index: 12, kind: input, shape index: {}]
  %s13 = inlined_call_operand.vmem [shape: bf16[128,32], index: 13, kind: input, shape index: {}]
  %s14 = inlined_call_operand.vmem [shape: f32[1,32], index: 14, kind: input, shape index: {}]
  %s15 = inlined_call_operand.vmem [shape: bf16[2,8,32], index: 15, kind: output, shape index: {}]
  %s16 = sld [smem:[#allocation0]]
  $region93: #{sequence_embedding_forward.5} parent=0
    _
  %s18 = ssub.s32 1, %s16
  %s19 = scalar_select 0, %s18, %s16
  loop: start=0, step=1, limit=4
  $region2: #{sequence_embedding_forward.5} parent=0 // loop_pre_header
    _
  $region3: #{sequence_embedding_forward.5} parent=0 // loop_header
    %s21 = sphi 0, %s25
    %p22 = scmp.ge.s32.totalorder %s21, 4
    %s31 = sphi 0, %s33
    %s34 = sphi 0, %s31
    %s35 = sphi 0, %s34
    %s51 = sphi 0, %s35
    %s55 = sphi 0, %s55
    %s57 = sphi 0, %s55
    %s58 = sphi 0, %s57
    %s72 = sphi 0, %s58
    %s76 = sphi 0, %s76
    %s78 = sphi 0, %s76
    %s79 = sphi 0, %s78
    %s93 = sphi 0, %s79
    %s97 = sphi 0, %s97
    %s99 = sphi 0, %s97
    %s100 = sphi 0, %s99
    %s114 = sphi 0, %s100
    %s118 = sphi 0, %s118
    %s120 = sphi 0, %s118
    %s121 = sphi 0, %s120
    %s135 = sphi 0, %s121
    %s139 = sphi 0, %s139
    %s141 = sphi 0, %s139
    %s142 = sphi 0, %s141
    %s156 = sphi 0, %s142
    %s160 = sphi 0, %s160
    %s162 = sphi 0, %s160
    %s163 = sphi 0, %s162
    %s177 = sphi 0, %s163
    %s181 = sphi 0, %s181
    %s183 = sphi 0, %s181
    %s184 = sphi 0, %s183
    %s198 = sphi 0, %s184
    %s202 = sphi 0, %s202
    %s204 = sphi 0, %s202
    %s205 = sphi 0, %s204
    %s219 = sphi 0, %s205
    %s223 = sphi 0, %s223
    %s225 = sphi 0, %s223
    %s226 = sphi 0, %s225
    %s240 = sphi 0, %s226
    %s244 = sphi 0, %s244
    %s246 = sphi 0, %s244
    %s247 = sphi 0, %s246
    %s261 = sphi 0, %s247
    %s265 = sphi 0, %s265
    %s267 = sphi 0, %s265
    %s268 = sphi 0, %s267
    %s282 = sphi 0, %s268
    %s286 = sphi 0, %s286
    %s288 = sphi 0, %s286
    %s289 = sphi 0, %s288
    %s303 = sphi 0, %s289
    %s307 = sphi 0, %s307
    %s309 = sphi 0, %s307
    %s310 = sphi 0, %s309
    %s324 = sphi 0, %s310
    %s328 = sphi 0, %s328
    %s330 = sphi 0, %s328
    %s331 = sphi 0, %s330
    %s345 = sphi 0, %s331
    %s351 = sphi 0, %s353
    %s354 = sphi 0, %s351
    %s355 = sphi 0, %s354
    %s371 = sphi 0, %s355
  $region4: #{sequence_embedding_forward.5} parent=0 // loop_header_branch
    %24 = sbr.rel (%p22) target = $region8
  $region5: #{sequence_embedding_forward.5} parent=0 // loop_body
    %s26 = ssub.s32 %s21, 1
    %s27 = ssub.s32 %s21, 2
    %s28 = sadd.s32 %s21, 1
    %s29 = ssub.s32 %s21, %s28
    %p30 = scmp.eq.s32.totalorder %s29, 0
    %s32 = sadd.s32 %s31, 1
    %s33 = scalar_select %p30, %s31, %s32
    %p36 = pneg %p30
    %p37 = scmp.eq.s32.totalorder %s21, 1
    %p38 = por %p36, %p37
    %p39 = scmp.ne.s32.totalorder %s31, %s34
    %p40 = scmp.eq.s32.totalorder %s21, 0
    %p41 = por %p39, %p40
    %p42 = scmp.ne.s32.totalorder %s31, %s34
    %p43 = scmp.eq.s32.totalorder %s26, 1
    %p44 = por %p42, %p43
    %p45 = scmp.ne.s32.totalorder %s34, %s35
    %p46 = scmp.eq.s32.totalorder %s26, 0
    %p47 = por %p45, %p46
    %p48 = scmp.ne.s32.totalorder %s34, %s35
    %p49 = scmp.eq.s32.totalorder %s27, 1
    %p50 = por %p48, %p49
    %p52 = scmp.ne.s32.totalorder %s35, %s51
    %p53 = scmp.eq.s32.totalorder %s27, 0
    %p54 = por %p52, %p53
    %s56 = sadd.s32 %s55, 1
    %p59 = scmp.eq.s32.totalorder %s21, 1
    %p60 = scmp.ne.s32.totalorder %s55, %s57
    %p61 = scmp.eq.s32.totalorder %s21, 0
    %p62 = por %p60, %p61
    %p63 = scmp.ne.s32.totalorder %s55, %s57
    %p64 = scmp.eq.s32.totalorder %s26, 1
    %p65 = por %p63, %p64
    %p66 = scmp.ne.s32.totalorder %s57, %s58
    %p67 = scmp.eq.s32.totalorder %s26, 0
    %p68 = por %p66, %p67
    %p69 = scmp.ne.s32.totalorder %s57, %s58
    %p70 = scmp.eq.s32.totalorder %s27, 1
    %p71 = por %p69, %p70
    %p73 = scmp.ne.s32.totalorder %s58, %s72
    %p74 = scmp.eq.s32.totalorder %s27, 0
    %p75 = por %p73, %p74
    %s77 = sadd.s32 %s76, 1
    %p80 = scmp.eq.s32.totalorder %s21, 1
    %p81 = scmp.ne.s32.totalorder %s76, %s78
    %p82 = scmp.eq.s32.totalorder %s21, 0
    %p83 = por %p81, %p82
    %p84 = scmp.ne.s32.totalorder %s76, %s78
    %p85 = scmp.eq.s32.totalorder %s26, 1
    %p86 = por %p84, %p85
    %p87 = scmp.ne.s32.totalorder %s78, %s79
    %p88 = scmp.eq.s32.totalorder %s26, 0
    %p89 = por %p87, %p88
    %p90 = scmp.ne.s32.totalorder %s78, %s79
    %p91 = scmp.eq.s32.totalorder %s27, 1
    %p92 = por %p90, %p91
    %p94 = scmp.ne.s32.totalorder %s79, %s93
    %p95 = scmp.eq.s32.totalorder %s27, 0
    %p96 = por %p94, %p95
    %s98 = sadd.s32 %s97, 1
    %p101 = scmp.eq.s32.totalorder %s21, 1
    %p102 = scmp.ne.s32.totalorder %s97, %s99
    %p103 = scmp.eq.s32.totalorder %s21, 0
    %p104 = por %p102, %p103
    %p105 = scmp.ne.s32.totalorder %s97, %s99
    %p106 = scmp.eq.s32.totalorder %s26, 1
    %p107 = por %p105, %p106
    %p108 = scmp.ne.s32.totalorder %s99, %s100
    %p109 = scmp.eq.s32.totalorder %s26, 0
    %p110 = por %p108, %p109
    %p111 = scmp.ne.s32.totalorder %s99, %s100
    %p112 = scmp.eq.s32.totalorder %s27, 1
    %p113 = por %p111, %p112
    %p115 = scmp.ne.s32.totalorder %s100, %s114
    %p116 = scmp.eq.s32.totalorder %s27, 0
    %p117 = por %p115, %p116
    %s119 = sadd.s32 %s118, 1
    %p122 = scmp.eq.s32.totalorder %s21, 1
    %p123 = scmp.ne.s32.totalorder %s118, %s120
    %p124 = scmp.eq.s32.totalorder %s21, 0
    %p125 = por %p123, %p124
    %p126 = scmp.ne.s32.totalorder %s118, %s120
    %p127 = scmp.eq.s32.totalorder %s26, 1
    %p128 = por %p126, %p127
    %p129 = scmp.ne.s32.totalorder %s120, %s121
    %p130 = scmp.eq.s32.totalorder %s26, 0
    %p131 = por %p129, %p130
    %p132 = scmp.ne.s32.totalorder %s120, %s121
    %p133 = scmp.eq.s32.totalorder %s27, 1
    %p134 = por %p132, %p133
    %p136 = scmp.ne.s32.totalorder %s121, %s135
    %p137 = scmp.eq.s32.totalorder %s27, 0
    %p138 = por %p136, %p137
    %s140 = sadd.s32 %s139, 1
    %p143 = scmp.eq.s32.totalorder %s21, 1
    %p144 = scmp.ne.s32.totalorder %s139, %s141
    %p145 = scmp.eq.s32.totalorder %s21, 0
    %p146 = por %p144, %p145
    %p147 = scmp.ne.s32.totalorder %s139, %s141
    %p148 = scmp.eq.s32.totalorder %s26, 1
    %p149 = por %p147, %p148
    %p150 = scmp.ne.s32.totalorder %s141, %s142
    %p151 = scmp.eq.s32.totalorder %s26, 0
    %p152 = por %p150, %p151
    %p153 = scmp.ne.s32.totalorder %s141, %s142
    %p154 = scmp.eq.s32.totalorder %s27, 1
    %p155 = por %p153, %p154
    %p157 = scmp.ne.s32.totalorder %s142, %s156
    %p158 = scmp.eq.s32.totalorder %s27, 0
    %p159 = por %p157, %p158
    %s161 = sadd.s32 %s160, 1
    %p164 = scmp.eq.s32.totalorder %s21, 1
    %p165 = scmp.ne.s32.totalorder %s160, %s162
    %p166 = scmp.eq.s32.totalorder %s21, 0
    %p167 = por %p165, %p166
    %p168 = scmp.ne.s32.totalorder %s160, %s162
    %p169 = scmp.eq.s32.totalorder %s26, 1
    %p170 = por %p168, %p169
    %p171 = scmp.ne.s32.totalorder %s162, %s163
    %p172 = scmp.eq.s32.totalorder %s26, 0
    %p173 = por %p171, %p172
    %p174 = scmp.ne.s32.totalorder %s162, %s163
    %p175 = scmp.eq.s32.totalorder %s27, 1
    %p176 = por %p174, %p175
    %p178 = scmp.ne.s32.totalorder %s163, %s177
    %p179 = scmp.eq.s32.totalorder %s27, 0
    %p180 = por %p178, %p179
    %s182 = sadd.s32 %s181, 1
    %p185 = scmp.eq.s32.totalorder %s21, 1
    %p186 = scmp.ne.s32.totalorder %s181, %s183
    %p187 = scmp.eq.s32.totalorder %s21, 0
    %p188 = por %p186, %p187
    %p189 = scmp.ne.s32.totalorder %s181, %s183
    %p190 = scmp.eq.s32.totalorder %s26, 1
    %p191 = por %p189, %p190
    %p192 = scmp.ne.s32.totalorder %s183, %s184
    %p193 = scmp.eq.s32.totalorder %s26, 0
    %p194 = por %p192, %p193
    %p195 = scmp.ne.s32.totalorder %s183, %s184
    %p196 = scmp.eq.s32.totalorder %s27, 1
    %p197 = por %p195, %p196
    %p199 = scmp.ne.s32.totalorder %s184, %s198
    %p200 = scmp.eq.s32.totalorder %s27, 0
    %p201 = por %p199, %p200
    %s203 = sadd.s32 %s202, 1
    %p206 = scmp.eq.s32.totalorder %s21, 1
    %p207 = scmp.ne.s32.totalorder %s202, %s204
    %p208 = scmp.eq.s32.totalorder %s21, 0
    %p209 = por %p207, %p208
    %p210 = scmp.ne.s32.totalorder %s202, %s204
    %p211 = scmp.eq.s32.totalorder %s26, 1
    %p212 = por %p210, %p211
    %p213 = scmp.ne.s32.totalorder %s204, %s205
    %p214 = scmp.eq.s32.totalorder %s26, 0
    %p215 = por %p213, %p214
    %p216 = scmp.ne.s32.totalorder %s204, %s205
    %p217 = scmp.eq.s32.totalorder %s27, 1
    %p218 = por %p216, %p217
    %p220 = scmp.ne.s32.totalorder %s205, %s219
    %p221 = scmp.eq.s32.totalorder %s27, 0
    %p222 = por %p220, %p221
    %s224 = sadd.s32 %s223, 1
    %p227 = scmp.eq.s32.totalorder %s21, 1
    %p228 = scmp.ne.s32.totalorder %s223, %s225
    %p229 = scmp.eq.s32.totalorder %s21, 0
    %p230 = por %p228, %p229
    %p231 = scmp.ne.s32.totalorder %s223, %s225
    %p232 = scmp.eq.s32.totalorder %s26, 1
    %p233 = por %p231, %p232
    %p234 = scmp.ne.s32.totalorder %s225, %s226
    %p235 = scmp.eq.s32.totalorder %s26, 0
    %p236 = por %p234, %p235
    %p237 = scmp.ne.s32.totalorder %s225, %s226
    %p238 = scmp.eq.s32.totalorder %s27, 1
    %p239 = por %p237, %p238
    %p241 = scmp.ne.s32.totalorder %s226, %s240
    %p242 = scmp.eq.s32.totalorder %s27, 0
    %p243 = por %p241, %p242
    %s245 = sadd.s32 %s244, 1
    %p248 = scmp.eq.s32.totalorder %s21, 1
    %p249 = scmp.ne.s32.totalorder %s244, %s246
    %p250 = scmp.eq.s32.totalorder %s21, 0
    %p251 = por %p249, %p250
    %p252 = scmp.ne.s32.totalorder %s244, %s246
    %p253 = scmp.eq.s32.totalorder %s26, 1
    %p254 = por %p252, %p253
    %p255 = scmp.ne.s32.totalorder %s246, %s247
    %p256 = scmp.eq.s32.totalorder %s26, 0
    %p257 = por %p255, %p256
    %p258 = scmp.ne.s32.totalorder %s246, %s247
    %p259 = scmp.eq.s32.totalorder %s27, 1
    %p260 = por %p258, %p259
    %p262 = scmp.ne.s32.totalorder %s247, %s261
    %p263 = scmp.eq.s32.totalorder %s27, 0
    %p264 = por %p262, %p263
    %s266 = sadd.s32 %s265, 1
    %p269 = scmp.eq.s32.totalorder %s21, 1
    %p270 = scmp.ne.s32.totalorder %s265, %s267
    %p271 = scmp.eq.s32.totalorder %s21, 0
    %p272 = por %p270, %p271
    %p273 = scmp.ne.s32.totalorder %s265, %s267
    %p274 = scmp.eq.s32.totalorder %s26, 1
    %p275 = por %p273, %p274
    %p276 = scmp.ne.s32.totalorder %s267, %s268
    %p277 = scmp.eq.s32.totalorder %s26, 0
    %p278 = por %p276, %p277
    %p279 = scmp.ne.s32.totalorder %s267, %s268
    %p280 = scmp.eq.s32.totalorder %s27, 1
    %p281 = por %p279, %p280
    %p283 = scmp.ne.s32.totalorder %s268, %s282
    %p284 = scmp.eq.s32.totalorder %s27, 0
    %p285 = por %p283, %p284
    %s287 = sadd.s32 %s286, 1
    %p290 = scmp.eq.s32.totalorder %s21, 1
    %p291 = scmp.ne.s32.totalorder %s286, %s288
    %p292 = scmp.eq.s32.totalorder %s21, 0
    %p293 = por %p291, %p292
    %p294 = scmp.ne.s32.totalorder %s286, %s288
    %p295 = scmp.eq.s32.totalorder %s26, 1
    %p296 = por %p294, %p295
    %p297 = scmp.ne.s32.totalorder %s288, %s289
    %p298 = scmp.eq.s32.totalorder %s26, 0
    %p299 = por %p297, %p298
    %p300 = scmp.ne.s32.totalorder %s288, %s289
    %p301 = scmp.eq.s32.totalorder %s27, 1
    %p302 = por %p300, %p301
    %p304 = scmp.ne.s32.totalorder %s289, %s303
    %p305 = scmp.eq.s32.totalorder %s27, 0
    %p306 = por %p304, %p305
    %s308 = sadd.s32 %s307, 1
    %p311 = scmp.eq.s32.totalorder %s21, 1
    %p312 = scmp.ne.s32.totalorder %s307, %s309
    %p313 = scmp.eq.s32.totalorder %s21, 0
    %p314 = por %p312, %p313
    %p315 = scmp.ne.s32.totalorder %s307, %s309
    %p316 = scmp.eq.s32.totalorder %s26, 1
    %p317 = por %p315, %p316
    %p318 = scmp.ne.s32.totalorder %s309, %s310
    %p319 = scmp.eq.s32.totalorder %s26, 0
    %p320 = por %p318, %p319
    %p321 = scmp.ne.s32.totalorder %s309, %s310
    %p322 = scmp.eq.s32.totalorder %s27, 1
    %p323 = por %p321, %p322
    %p325 = scmp.ne.s32.totalorder %s310, %s324
    %p326 = scmp.eq.s32.totalorder %s27, 0
    %p327 = por %p325, %p326
    %s329 = sadd.s32 %s328, 1
    %p332 = scmp.eq.s32.totalorder %s21, 1
    %p333 = scmp.ne.s32.totalorder %s328, %s330
    %p334 = scmp.eq.s32.totalorder %s21, 0
    %p335 = por %p333, %p334
    %p336 = scmp.ne.s32.totalorder %s328, %s330
    %p337 = scmp.eq.s32.totalorder %s26, 1
    %p338 = por %p336, %p337
    %p339 = scmp.ne.s32.totalorder %s330, %s331
    %p340 = scmp.eq.s32.totalorder %s26, 0
    %p341 = por %p339, %p340
    %p342 = scmp.ne.s32.totalorder %s330, %s331
    %p343 = scmp.eq.s32.totalorder %s27, 1
    %p344 = por %p342, %p343
    %p346 = scmp.ne.s32.totalorder %s331, %s345
    %p347 = scmp.eq.s32.totalorder %s27, 0
    %p348 = por %p346, %p347
    %s349 = ssub.s32 %s21, %s28
    %p350 = scmp.eq.s32.totalorder %s349, 0
    %s352 = sadd.s32 %s351, 1
    %s353 = scalar_select %p350, %s351, %s352
    %p356 = pneg %p350
    %p357 = scmp.eq.s32.totalorder %s21, 1
    %p358 = por %p356, %p357
    %p359 = scmp.ne.s32.totalorder %s351, %s354
    %p360 = scmp.eq.s32.totalorder %s21, 0
    %p361 = por %p359, %p360
    %p362 = scmp.ne.s32.totalorder %s351, %s354
    %p363 = scmp.eq.s32.totalorder %s26, 1
    %p364 = por %p362, %p363
    %p365 = scmp.ne.s32.totalorder %s354, %s355
    %p366 = scmp.eq.s32.totalorder %s26, 0
    %p367 = por %p365, %p366
    %p368 = scmp.ne.s32.totalorder %s354, %s355
    %p369 = scmp.eq.s32.totalorder %s27, 1
    %p370 = por %p368, %p369
    %p372 = scmp.ne.s32.totalorder %s355, %s371
    %p373 = scmp.eq.s32.totalorder %s27, 0
    %p374 = por %p372, %p373
    %p375 = scmp.le.s32.totalorder 1, %s21
    %p376 = scmp.lt.s32.totalorder %s21, 3
    %p377 = pnand %p375, %p376
    %p378 = pneg %p377
    // Predicated region
    $region9: #{sequence_embedding_forward.5} parent=5 // pred_check
      _
    $region10: #{sequence_embedding_forward.5} parent=5 // pred_check_branch
      %380 = sbr.rel (%p377) target = $region12
    $region11: #{sequence_embedding_forward.5} parent=5 // pred_region
      %s381 = ssub.s32 %s21, 1
      // Predicated region
      $region13: #{sequence_embedding_forward.5} parent=11 // pred_check
        %p382 = pneg %p68
      $region14: #{sequence_embedding_forward.5} parent=11 // pred_check_branch
        %384 = sbr.rel (%p382) target = $region16
      $region15: #{sequence_embedding_forward.5} parent=11 // pred_region
        _
      $region16: #{sequence_embedding_forward.5} parent=11 // pred_fallthru
        _
      // Predicated region
      $region17: #{sequence_embedding_forward.5} parent=11 // pred_check
        %p385 = pneg %p89
      $region18: #{sequence_embedding_forward.5} parent=11 // pred_check_branch
        %387 = sbr.rel (%p385) target = $region20
      $region19: #{sequence_embedding_forward.5} parent=11 // pred_region
        _
      $region20: #{sequence_embedding_forward.5} parent=11 // pred_fallthru
        _
      // Predicated region
      $region21: #{sequence_embedding_forward.5} parent=11 // pred_check
        %p388 = pneg %p110
      $region22: #{sequence_embedding_forward.5} parent=11 // pred_check_branch
        %390 = sbr.rel (%p388) target = $region24
      $region23: #{sequence_embedding_forward.5} parent=11 // pred_region
        _
      $region24: #{sequence_embedding_forward.5} parent=11 // pred_fallthru
        _
      // Predicated region
      $region25: #{sequence_embedding_forward.5} parent=11 // pred_check
        %p391 = pneg %p131
      $region26: #{sequence_embedding_forward.5} parent=11 // pred_check_branch
        %393 = sbr.rel (%p391) target = $region28
      $region27: #{sequence_embedding_forward.5} parent=11 // pred_region
        _
      $region28: #{sequence_embedding_forward.5} parent=11 // pred_fallthru
        _
      // Predicated region
      $region29: #{sequence_embedding_forward.5} parent=11 // pred_check
        %p394 = pneg %p152
      $region30: #{sequence_embedding_forward.5} parent=11 // pred_check_branch
        %396 = sbr.rel (%p394) target = $region32
      $region31: #{sequence_embedding_forward.5} parent=11 // pred_region
        _
      $region32: #{sequence_embedding_forward.5} parent=11 // pred_fallthru
        _
      // Predicated region
      $region33: #{sequence_embedding_forward.5} parent=11 // pred_check
        %p397 = pneg %p173
      $region34: #{sequence_embedding_forward.5} parent=11 // pred_check_branch
        %399 = sbr.rel (%p397) target = $region36
      $region35: #{sequence_embedding_forward.5} parent=11 // pred_region
        _
      $region36: #{sequence_embedding_forward.5} parent=11 // pred_fallthru
        _
      // Predicated region
      $region37: #{sequence_embedding_forward.5} parent=11 // pred_check
        %p400 = pneg %p194
      $region38: #{sequence_embedding_forward.5} parent=11 // pred_check_branch
        %402 = sbr.rel (%p400) target = $region40
      $region39: #{sequence_embedding_forward.5} parent=11 // pred_region
        _
      $region40: #{sequence_embedding_forward.5} parent=11 // pred_fallthru
        _
      // Predicated region
      $region41: #{sequence_embedding_forward.5} parent=11 // pred_check
        %p403 = pneg %p215
      $region42: #{sequence_embedding_forward.5} parent=11 // pred_check_branch
        %405 = sbr.rel (%p403) target = $region44
      $region43: #{sequence_embedding_forward.5} parent=11 // pred_region
        _
      $region44: #{sequence_embedding_forward.5} parent=11 // pred_fallthru
        _
      // Predicated region
      $region45: #{sequence_embedding_forward.5} parent=11 // pred_check
        %p406 = pneg %p236
      $region46: #{sequence_embedding_forward.5} parent=11 // pred_check_branch
        %408 = sbr.rel (%p406) target = $region48
      $region47: #{sequence_embedding_forward.5} parent=11 // pred_region
        _
      $region48: #{sequence_embedding_forward.5} parent=11 // pred_fallthru
        _
      // Predicated region
      $region49: #{sequence_embedding_forward.5} parent=11 // pred_check
        %p409 = pneg %p257
      $region50: #{sequence_embedding_forward.5} parent=11 // pred_check_branch
        %411 = sbr.rel (%p409) target = $region52
      $region51: #{sequence_embedding_forward.5} parent=11 // pred_region
        _
      $region52: #{sequence_embedding_forward.5} parent=11 // pred_fallthru
        _
      // Predicated region
      $region53: #{sequence_embedding_forward.5} parent=11 // pred_check
        %p412 = pneg %p278
      $region54: #{sequence_embedding_forward.5} parent=11 // pred_check_branch
        %414 = sbr.rel (%p412) target = $region56
      $region55: #{sequence_embedding_forward.5} parent=11 // pred_region
        _
      $region56: #{sequence_embedding_forward.5} parent=11 // pred_fallthru
        _
      // Predicated region
      $region57: #{sequence_embedding_forward.5} parent=11 // pred_check
        %p415 = pneg %p299
      $region58: #{sequence_embedding_forward.5} parent=11 // pred_check_branch
        %417 = sbr.rel (%p415) target = $region60
      $region59: #{sequence_embedding_forward.5} parent=11 // pred_region
        _
      $region60: #{sequence_embedding_forward.5} parent=11 // pred_fallthru
        _
      // Predicated region
      $region61: #{sequence_embedding_forward.5} parent=11 // pred_check
        %p418 = pneg %p320
      $region62: #{sequence_embedding_forward.5} parent=11 // pred_check_branch
        %420 = sbr.rel (%p418) target = $region64
      $region63: #{sequence_embedding_forward.5} parent=11 // pred_region
        _
      $region64: #{sequence_embedding_forward.5} parent=11 // pred_fallthru
        _
      // Predicated region
      $region65: #{sequence_embedding_forward.5} parent=11 // pred_check
        %p421 = pneg %p341
      $region66: #{sequence_embedding_forward.5} parent=11 // pred_check_branch
        %423 = sbr.rel (%p421) target = $region68
      $region67: #{sequence_embedding_forward.5} parent=11 // pred_region
        _
      $region68: #{sequence_embedding_forward.5} parent=11 // pred_fallthru
        _
    $region12: #{sequence_embedding_forward.5} parent=5 // pred_fallthru
      _
    %p424 = scmp.lt.s32.totalorder %s21, 2
    // Predicated region
    $region69: #{sequence_embedding_forward.5} parent=5 // pred_check
      %p425 = pneg %p424
    $region70: #{sequence_embedding_forward.5} parent=5 // pred_check_branch
      %427 = sbr.rel (%p425) target = $region72
    $region71: #{sequence_embedding_forward.5} parent=5 // pred_region
      // Predicated region
      $region73: #{sequence_embedding_forward.5} parent=71 // pred_check
        %p428 = pneg %p41
      $region74: #{sequence_embedding_forward.5} parent=71 // pred_check_branch
        %430 = sbr.rel (%p428) target = $region76
      $region75: #{sequence_embedding_forward.5} parent=71 // pred_region
        %p431 = scmp.lt.s32.totalorder %s21, 1
        %s432 = scalar_select %p431, %s21, 1
        %s433 = smul.addr %s432, 4
        %s434 = scalar_lea.vmem %s0, %s433
      $region76: #{sequence_embedding_forward.5} parent=71 // pred_fallthru
        _
    $region72: #{sequence_embedding_forward.5} parent=5 // pred_fallthru
      _
    %p435 = scmp.le.s32.totalorder 1, %s21
    %p436 = scmp.lt.s32.totalorder %s21, 3
    %p437 = pnand %p435, %p436
    %p438 = pneg %p437
    // Predicated region
    $region77: #{sequence_embedding_forward.5} parent=5 // pred_check
      _
    $region78: #{sequence_embedding_forward.5} parent=5 // pred_check_branch
      %440 = sbr.rel (%p437) target = $region80
    $region79: #{sequence_embedding_forward.5} parent=5 // pred_region
      %s441 = ssub.s32 %s21, 1
      %p442 = scmp.lt.s32.totalorder %s26, 1
      %s443 = scalar_select %p442, %s26, 1
      %s444 = smul.addr %s443, 4
      %s445 = scalar_lea.vmem %s0, %s444
      %p446 = pneg %p47
      %p447 = pneg %p44
      %p448 = pneg %p68
      %p449 = pneg %p65
      %p450 = pneg %p89
      %p451 = pneg %p86
      %p452 = pneg %p110
      %p453 = pneg %p107
      %p454 = pneg %p131
      %p455 = pneg %p128
      %p456 = pneg %p152
      %p457 = pneg %p149
      %p458 = pneg %p173
      %p459 = pneg %p170
      %p460 = pneg %p194
      %p461 = pneg %p191
      %p462 = pneg %p215
      %p463 = pneg %p212
      %p464 = pneg %p236
      %p465 = pneg %p233
      %p466 = pneg %p257
      %p467 = pneg %p254
      %p468 = pneg %p278
      %p469 = pneg %p275
      %p470 = pneg %p299
      %p471 = pneg %p296
      %p472 = pneg %p320
      %p473 = pneg %p317
      %p474 = pneg %p341
      %p475 = pneg %p338
      %p476 = pneg %p367
      %p477 = pneg %p364
      %p478 = scmp.lt.s32.totalorder %s26, 1
      %s479 = scalar_select %p478, %s26, 1
      %s480 = smul.addr %s479, 4
      %s481 = scalar_lea.vmem %s15, %s480
      %p482 = scmp.lt.s32.totalorder %s26, 1
      %s483 = scalar_select %p482, %s26, 1
      %s484 = smul.addr %s483, 4
      %s485 = scalar_lea.vmem %s0, %s484
      %p486 = scmp.lt.s32.totalorder %s26, 1
      %s487 = scalar_select %p486, %s26, 1
      %s488 = smul.addr %s487, 4
      %s489 = scalar_lea.vmem %s15, %s488
      %v491 = vld [vmem:[%s485] sm:$0xf]
      %v492 = vunpack.c.l.bf16 %v491
      %v493 = vld [vmem:[%s1] sm:$0x1]
      %v494 = vld [vmem:[%s2] sm:$0x1]
      %vm495 = vcmask 261120
      %v496 = vsel %vm495, %v492, 0.0
      %497 = vadd.xlane.f32.xlu0 %v496
      %v498 = vpop.xlane.xlu0 %497
      %v499 = vrcp.pop 32.0
      %v500 = vmul.f32 32.0, %v499
      %v501 = vsub.f32 1.0, %v500
      %v502 = vmul.f32 %v499, %v501
      %v503 = vadd.f32 %v499, %v502
      %vm504 = vweird.f32 %v499
      %v505 = vsel %vm504, %v499, %v503
      %v506 = vmul.f32 %v498, %v505
      %v507 = vsub.f32 %v492, %v506
      %v508 = vmul.f32 %v507, %v507
      %v509 = vsel %vm495, %v508, 0.0
      %510 = vadd.xlane.f32.xlu0 %v509
      %v511 = vpop.xlane.xlu0 %510
      %v512 = vmul.f32 %v511, %v505
      %v513 = vadd.f32 %v512, 1e-05
      %v514 = vrsqrt.pop %v513
      %v515 = vmul.f32 %v514, %v513
      %v516 = vmul.f32 %v515, %v514
      %v517 = vmul.f32 0.5, %v516
      %v518 = vsub.f32 1.5, %v517
      %v519 = vmul.f32 %v514, %v518
      %vm520 = vweird.f32 %v513
      %vm521 = vweird.f32 %v514
      %vm522 = vmor %vm520, %vm521
      %v523 = vsel %vm522, %v514, %v519
      %v524 = vmul.f32 %v507, %v523
      %v526 = vperm.slane %v493, 0
      %v528 = vmul.f32 %v524, %v526
      %v530 = vperm.slane %v494, 0
      %v532 = vadd.f32 %v528, %v530
      %v533 = vpack.c.bf16 %v532, %v532
      %v534 = vld [vmem:[%s3] sm:$0xf]
      %v535 = vld [vmem:[%s3 + $0x4] sm:$0xf]
      %v536 = vld [vmem:[%s3 + $0x8] sm:$0xf]
      %v537 = vld [vmem:[%s3 + $0xc] sm:$0xf]
      %v538 = vld [vmem:[%s4] sm:$0x1]
      %v540 = vperm.slane %v538, 0
      %v546 = vunpack.c.l.b16 %v534
      %v547 = vunpack.c.l.b16 %v535
      %v548 = vunpack.c.l.b16 %v536
      %v549 = vunpack.c.l.b16 %v537
      %v550 = vpack.c.b16 %v547, %v546
      %v551 = vpack.c.b16 %v549, %v548
      %v555 = vsel %vm495, %v533, 0
      %557 = vmatpush.bf16.msra.mxu0 0
      %558 = vmatpush.bf16.msra.mxu0 0
      %559 = vmatpush.bf16.msra.mxu0 0
      %560 = vmatpush.bf16.msra.mxu0 0
      %561 = vmatpush.bf16.msra.mxu0 0
      %562 = vmatpush.bf16.msra.mxu0 0
      %563 = vmatpush.bf16.msra.mxu0 %v551
      %564 = vmatpush.bf16.msra.mxu0 %v550
      %565 = vmatmul.bf16.gmra.mxu0 %v555
      %v566 = vpop.f32.mrf.mxu0
      %v567 = vadd.f32 %v540, %v566
      %v568 = vpop.f32.mrf.mxu0
      %569 = vdwg.mxu0
      %v570 = vld [vmem:[%s5] sm:$0x7]
      %v571 = vlaneseq
      %v572 = vshrl.u32 %v571, 7
      %vm573 = vcmp.eq.s32.totalorder %v572, 0
      %v574 = vrot.slane %v567, 7
      %v575 = vsel %vm573, 0.0, %v574
      %vm576 = vcmp.eq.s32.totalorder %v572, 7
      %v577 = vrot.slane %v567, 1
      %v578 = vsel %vm576, 0.0, %v577
      %v579 = vperm.slane %v570, 0
      %v580 = vmul.f32 %v575, %v579
      %v581 = vperm.slane %v570, 1
      %v582 = vmul.f32 %v567, %v581
      %v583 = vadd.f32 %v580, %v582
      %v584 = vperm.slane %v570, 2
      %v585 = vmul.f32 %v578, %v584
      %v586 = vadd.f32 %v583, %v585
      %v587 = vld [vmem:[%s6] sm:$0x1]
      %v589 = vperm.slane %v587, 0
      %v591 = vadd.f32 %v586, %v589
      %v592 = vxor.u32 %v591, 2147483648
      %v593 = vmul.f32 %v592, 1.442695
      %v594 = vpow.pop %v593
      %v595 = vadd.f32 %v594, 1.0
      %v596 = vrcp.pop %v595
      %v597 = vmul.f32 %v595, %v596
      %v598 = vsub.f32 1.0, %v597
      %v599 = vmul.f32 %v596, %v598
      %v600 = vadd.f32 %v596, %v599
      %vm601 = vweird.f32 %v595
      %vm602 = vweird.f32 %v596
      %vm603 = vmor %vm601, %vm602
      %v604 = vsel %vm603, %v596, %v600
      %v605 = vand.u32 2147483647, %v595
      %vm606 = vcmp.eq.f32.partialorder %v605, 8.507059e+37
      %v607 = vand.u32 %v595, 2147483648
      %v608 = vor.u32 1.1754944e-38, %v607
      %v609 = vsel %vm606, %v608, %v604
      %v610 = vmul.f32 1.0, %v609
      %v611 = vmul.f32 %v591, %v610
      %612 = vst [vmem:[#allocation2] sm:$0xff] %v611
      %v613 = vpack.c.bf16 %v611, %v611
      %v614 = vld [vmem:[%s7] sm:$0xf]
      %v615 = vld [vmem:[%s7 + $0x4] sm:$0xf]
      %v616 = vld [vmem:[%s7 + $0x8] sm:$0xf]
      %v617 = vld [vmem:[%s7 + $0xc] sm:$0xf]
      %v618 = vld [vmem:[%s7 + $0x10] sm:$0xf]
      %v619 = vld [vmem:[%s7 + $0x14] sm:$0xf]
      %v620 = vld [vmem:[%s7 + $0x18] sm:$0xf]
      %v621 = vld [vmem:[%s7 + $0x1c] sm:$0xf]
      %v622 = vld [vmem:[%s7 + $0x20] sm:$0xf]
      %v623 = vld [vmem:[%s7 + $0x24] sm:$0xf]
      %v624 = vld [vmem:[%s7 + $0x28] sm:$0xf]
      %v625 = vld [vmem:[%s7 + $0x2c] sm:$0xf]
      %v626 = vld [vmem:[%s7 + $0x30] sm:$0xf]
      %v627 = vld [vmem:[%s7 + $0x34] sm:$0xf]
      %v628 = vld [vmem:[%s7 + $0x38] sm:$0xf]
      %v629 = vld [vmem:[%s7 + $0x3c] sm:$0xf]
      %v630 = vld [vmem:[%s8] sm:$0x1]
      %v632 = vperm.slane %v630, 0
      %v650 = vunpack.c.l.b16 %v614
      %v651 = vunpack.c.l.b16 %v615
      %v652 = vunpack.c.l.b16 %v616
      %v653 = vunpack.c.l.b16 %v617
      %v654 = vunpack.c.l.b16 %v618
      %v655 = vunpack.c.l.b16 %v619
      %v656 = vunpack.c.l.b16 %v620
      %v657 = vunpack.c.l.b16 %v621
      %v658 = vunpack.c.l.b16 %v622
      %v659 = vunpack.c.l.b16 %v623
      %v660 = vunpack.c.l.b16 %v624
      %v661 = vunpack.c.l.b16 %v625
      %v662 = vunpack.c.l.b16 %v626
      %v663 = vunpack.c.l.b16 %v627
      %v664 = vunpack.c.l.b16 %v628
      %v665 = vunpack.c.l.b16 %v629
      %v666 = vpack.c.b16 %v651, %v650
      %v667 = vpack.c.b16 %v653, %v652
      %v668 = vpack.c.b16 %v655, %v654
      %v669 = vpack.c.b16 %v657, %v656
      %v670 = vpack.c.b16 %v659, %v658
      %v671 = vpack.c.b16 %v661, %v660
      %v672 = vpack.c.b16 %v663, %v662
      %v673 = vpack.c.b16 %v665, %v664
      %682 = vmatpush.bf16.msra.mxu0 %v673
      %683 = vmatpush.bf16.msra.mxu0 %v672
      %684 = vmatpush.bf16.msra.mxu0 %v671
      %685 = vmatpush.bf16.msra.mxu0 %v670
      %686 = vmatpush.bf16.msra.mxu0 %v669
      %687 = vmatpush.bf16.msra.mxu0 %v668
      %688 = vmatpush.bf16.msra.mxu0 %v667
      %689 = vmatpush.bf16.msra.mxu0 %v666
      %690 = vmatmul.bf16.gmra.mxu0 %v613
      %v691 = vpop.f32.mrf.mxu0
      %v692 = vadd.f32 %v632, %v691
      %v693 = vpop.f32.mrf.mxu0
      %694 = vdwg.mxu0
      %v695 = vmax.f32 %v692, 0.0
      %v696 = vand.u32 2147483647, %v692
      %v697 = vsub.f32 0.0, %v696
      %v698 = vmul.f32 %v697, 1.442695
      %v699 = vpow.pop %v698
      %v700 = vadd.f32 %v699, 1.0
      %v701 = vlog2.pop %v700
      %v702 = vmul.f32 %v701, 0.6931472
      %v703 = vmul.f32 -0.5, %v699
      %v704 = vadd.f32 %v703, 1.0
      %v705 = vmul.f32 %v704, %v699
      %v706 = vand.u32 2147483647, %v699
      %vm707 = vcmp.lt.f32.partialorder %v706, 0.0004427343
      %v708 = vsel %vm707, %v705, %v702
      %v709 = vadd.f32 %v695, %v708
      %710 = vst [vmem:[#allocation3] sm:$0xff] %v709
      %v711 = vld [vmem:[%s11] sm:$0xff]
      %v712 = vld [vmem:[%s11 + $0x8] sm:$0xff]
      %v713 = vld [vmem:[%s12] sm:$0x1]
      %v714 = vld [vmem:[%s9] sm:$0xf]
      %v715 = vld [vmem:[%s9 + $0x4] sm:$0xf]
      %v716 = vld [vmem:[%s10] sm:$0xff]
      %v717 = vld [vmem:[%s10 + $0x8] sm:$0xff]
      %v718 = vadd.s32 %v572, 8
      %v719 = vlaneseq
      %v720 = vand.u32 %v719, 127
      %vm721 = vcmp.lt.s32.totalorder %v572, 8
      %vm722 = vcmp.lt.s32.totalorder %v718, 8
      %vm723 = vcmp.lt.s32.totalorder %v720, 64
      %vm724 = vmxor %vm721, %vm723
      %vm725 = vmxor %vm722, %vm723
      %vm726 = vmxor %vm724, 1
      %vm727 = vmxor %vm725, 1
      %v728 = vld [vmem:[#allocation3] sm:$0xff]
      %v729 = vld [vmem:[#allocation2] sm:$0xff]
      %v730 = vpack.c.bf16 %v729, %v729
      %732 = vset.pattern.permute.xlu0 0
      %733 = vperm.xlu0 %732, %v716
      %v734 = vpop.permute.xlu0 %733
      %737 = vset.pattern.permute.xlu0 0
      %738 = vperm.xlu0 %737, %v717
      %v739 = vpop.permute.xlu0 %738
      %v743 = vunpack.c.l.b16 %v714
      %v744 = vunpack.c.l.b16 %v715
      %v745 = vpack.c.b16 %v744, %v743
      %747 = vmatpush.bf16.xpose.msra.mxu0 0
      %748 = vmatpush.bf16.xpose.msra.mxu0 0
      %749 = vmatpush.bf16.xpose.msra.mxu0 0
      %750 = vmatpush.bf16.xpose.msra.mxu0 0
      %751 = vmatpush.bf16.xpose.msra.mxu0 0
      %752 = vmatpush.bf16.xpose.msra.mxu0 0
      %753 = vmatpush.bf16.xpose.msra.mxu0 0
      %754 = vmatpush.bf16.xpose.msra.mxu0 %v730
      %755 = vmatmul.bf16.gmra.mxu0 %v745
      %v756 = vpop.f32.mrf.mxu0
      %v757 = vadd.f32 %v734, %v756
      %v758 = vpop.f32.mrf.mxu0
      %v759 = vadd.f32 %v739, %v758
      %760 = vdwg.mxu0
      %v761 = vmul.f32 %v728, %v729
      %v762 = vperm.slane %v728, 0
      %v763 = vmul.f32 %v762, %v711
      %v764 = vmul.f32 %v762, %v712
      %v765 = vmul.f32 %v763, 1.442695
      %v766 = vpow.pop %v765
      %v767 = vmul.f32 %v764, 1.442695
      %v768 = vpow.pop %v767
      %v769 = vmul.f32 %v766, 0.0
      %v770 = vmul.f32 %v768, 0.0
      %v771 = vperm.slane %v761, 0
      %773 = vset.pattern.permute.xlu0 0
      %774 = vperm.xlu0 %773, %v757
      %v775 = vpop.permute.xlu0 %774
      %778 = vset.pattern.permute.xlu0 0
      %779 = vperm.xlu0 %778, %v759
      %v780 = vpop.permute.xlu0 %779
      %v782 = vmul.f32 %v771, %v775
      %v783 = vmul.f32 %v771, %v780
      %v784 = vsel %vm726, %v782, 0.0
      %v785 = vsel %vm727, %v783, 0.0
      %v786 = vadd.f32 %v769, %v784
      %v787 = vadd.f32 %v770, %v785
      %v788 = vadd.f32 %v786, %v787
      %v789 = vrot.slane %v788, 4
      %v790 = vadd.f32 %v788, %v789
      %v791 = vrot.slane %v790, 2
      %v792 = vadd.f32 %v790, %v791
      %v793 = vrot.slane %v792, 1
      %v794 = vadd.f32 %v792, %v793
      %v795 = vperm.slane %v728, 1
      %v796 = vmul.f32 %v795, %v711
      %v797 = vmul.f32 %v795, %v712
      %v798 = vmul.f32 %v796, 1.442695
      %v799 = vpow.pop %v798
      %v800 = vmul.f32 %v797, 1.442695
      %v801 = vpow.pop %v800
      %v802 = vmul.f32 %v799, %v786
      %v803 = vmul.f32 %v801, %v787
      %v804 = vperm.slane %v761, 1
      %805 = vset.pattern.permute.xlu0 1
      %806 = vperm.xlu0 %805, %v757
      %v807 = vpop.permute.xlu0 %806
      %809 = vset.pattern.permute.xlu0 1
      %810 = vperm.xlu0 %809, %v759
      %v811 = vpop.permute.xlu0 %810
      %v813 = vmul.f32 %v804, %v807
      %v814 = vmul.f32 %v804, %v811
      %v815 = vsel %vm726, %v813, 0.0
      %v816 = vsel %vm727, %v814, 0.0
      %v817 = vadd.f32 %v802, %v815
      %v818 = vadd.f32 %v803, %v816
      %v819 = vadd.f32 %v817, %v818
      %v820 = vrot.slane %v819, 4
      %v821 = vadd.f32 %v819, %v820
      %v822 = vrot.slane %v821, 2
      %v823 = vadd.f32 %v821, %v822
      %v824 = vrot.slane %v823, 1
      %v825 = vadd.f32 %v823, %v824
      %v826 = vperm.slane %v728, 2
      %v827 = vmul.f32 %v826, %v711
      %v828 = vmul.f32 %v826, %v712
      %v829 = vmul.f32 %v827, 1.442695
      %v830 = vpow.pop %v829
      %v831 = vmul.f32 %v828, 1.442695
      %v832 = vpow.pop %v831
      %v833 = vmul.f32 %v830, %v817
      %v834 = vmul.f32 %v832, %v818
      %v835 = vperm.slane %v761, 2
      %836 = vset.pattern.permute.xlu0 2
      %837 = vperm.xlu0 %836, %v757
      %v838 = vpop.permute.xlu0 %837
      %840 = vset.pattern.permute.xlu0 2
      %841 = vperm.xlu0 %840, %v759
      %v842 = vpop.permute.xlu0 %841
      %v844 = vmul.f32 %v835, %v838
      %v845 = vmul.f32 %v835, %v842
      %v846 = vsel %vm726, %v844, 0.0
      %v847 = vsel %vm727, %v845, 0.0
      %v848 = vadd.f32 %v833, %v846
      %v849 = vadd.f32 %v834, %v847
      %v850 = vadd.f32 %v848, %v849
      %v851 = vrot.slane %v850, 4
      %v852 = vadd.f32 %v850, %v851
      %v853 = vrot.slane %v852, 2
      %v854 = vadd.f32 %v852, %v853
      %v855 = vrot.slane %v854, 1
      %v856 = vadd.f32 %v854, %v855
      %v857 = vperm.slane %v728, 3
      %v858 = vmul.f32 %v857, %v711
      %v859 = vmul.f32 %v857, %v712
      %v860 = vmul.f32 %v858, 1.442695
      %v861 = vpow.pop %v860
      %v862 = vmul.f32 %v859, 1.442695
      %v863 = vpow.pop %v862
      %v864 = vmul.f32 %v861, %v848
      %v865 = vmul.f32 %v863, %v849
      %v866 = vperm.slane %v761, 3
      %867 = vset.pattern.permute.xlu0 3
      %868 = vperm.xlu0 %867, %v757
      %v869 = vpop.permute.xlu0 %868
      %871 = vset.pattern.permute.xlu0 3
      %872 = vperm.xlu0 %871, %v759
      %v873 = vpop.permute.xlu0 %872
      %v875 = vmul.f32 %v866, %v869
      %v876 = vmul.f32 %v866, %v873
      %v877 = vsel %vm726, %v875, 0.0
      %v878 = vsel %vm727, %v876, 0.0
      %v879 = vadd.f32 %v864, %v877
      %v880 = vadd.f32 %v865, %v878
      %v881 = vadd.f32 %v879, %v880
      %v882 = vrot.slane %v881, 4
      %v883 = vadd.f32 %v881, %v882
      %v884 = vrot.slane %v883, 2
      %v885 = vadd.f32 %v883, %v884
      %v886 = vrot.slane %v885, 1
      %v887 = vadd.f32 %v885, %v886
      %v888 = vperm.slane %v728, 4
      %v889 = vmul.f32 %v888, %v711
      %v890 = vmul.f32 %v888, %v712
      %v891 = vmul.f32 %v889, 1.442695
      %v892 = vpow.pop %v891
      %v893 = vmul.f32 %v890, 1.442695
      %v894 = vpow.pop %v893
      %v895 = vmul.f32 %v892, %v879
      %v896 = vmul.f32 %v894, %v880
      %v897 = vperm.slane %v761, 4
      %898 = vset.pattern.permute.xlu0 4
      %899 = vperm.xlu0 %898, %v757
      %v900 = vpop.permute.xlu0 %899
      %902 = vset.pattern.permute.xlu0 4
      %903 = vperm.xlu0 %902, %v759
      %v904 = vpop.permute.xlu0 %903
      %v906 = vmul.f32 %v897, %v900
      %v907 = vmul.f32 %v897, %v904
      %v908 = vsel %vm726, %v906, 0.0
      %v909 = vsel %vm727, %v907, 0.0
      %v910 = vadd.f32 %v895, %v908
      %v911 = vadd.f32 %v896, %v909
      %v912 = vadd.f32 %v910, %v911
      %v913 = vrot.slane %v912, 4
      %v914 = vadd.f32 %v912, %v913
      %v915 = vrot.slane %v914, 2
      %v916 = vadd.f32 %v914, %v915
      %v917 = vrot.slane %v916, 1
      %v918 = vadd.f32 %v916, %v917
      %v919 = vperm.slane %v728, 5
      %v920 = vmul.f32 %v919, %v711
      %v921 = vmul.f32 %v919, %v712
      %v922 = vmul.f32 %v920, 1.442695
      %v923 = vpow.pop %v922
      %v924 = vmul.f32 %v921, 1.442695
      %v925 = vpow.pop %v924
      %v926 = vmul.f32 %v923, %v910
      %v927 = vmul.f32 %v925, %v911
      %v928 = vperm.slane %v761, 5
      %929 = vset.pattern.permute.xlu0 5
      %930 = vperm.xlu0 %929, %v757
      %v931 = vpop.permute.xlu0 %930
      %933 = vset.pattern.permute.xlu0 5
      %934 = vperm.xlu0 %933, %v759
      %v935 = vpop.permute.xlu0 %934
      %v937 = vmul.f32 %v928, %v931
      %v938 = vmul.f32 %v928, %v935
      %v939 = vsel %vm726, %v937, 0.0
      %v940 = vsel %vm727, %v938, 0.0
      %v941 = vadd.f32 %v926, %v939
      %v942 = vadd.f32 %v927, %v940
      %v943 = vadd.f32 %v941, %v942
      %v944 = vrot.slane %v943, 4
      %v945 = vadd.f32 %v943, %v944
      %v946 = vrot.slane %v945, 2
      %v947 = vadd.f32 %v945, %v946
      %v948 = vrot.slane %v947, 1
      %v949 = vadd.f32 %v947, %v948
      %v950 = vperm.slane %v728, 6
      %v951 = vmul.f32 %v950, %v711
      %v952 = vmul.f32 %v950, %v712
      %v953 = vmul.f32 %v951, 1.442695
      %v954 = vpow.pop %v953
      %v955 = vmul.f32 %v952, 1.442695
      %v956 = vpow.pop %v955
      %v957 = vmul.f32 %v954, %v941
      %v958 = vmul.f32 %v956, %v942
      %v959 = vperm.slane %v761, 6
      %960 = vset.pattern.permute.xlu0 6
      %961 = vperm.xlu0 %960, %v757
      %v962 = vpop.permute.xlu0 %961
      %964 = vset.pattern.permute.xlu0 6
      %965 = vperm.xlu0 %964, %v759
      %v966 = vpop.permute.xlu0 %965
      %v968 = vmul.f32 %v959, %v962
      %v969 = vmul.f32 %v959, %v966
      %v970 = vsel %vm726, %v968, 0.0
      %v971 = vsel %vm727, %v969, 0.0
      %v972 = vadd.f32 %v957, %v970
      %v973 = vadd.f32 %v958, %v971
      %v974 = vadd.f32 %v972, %v973
      %v975 = vrot.slane %v974, 4
      %v976 = vadd.f32 %v974, %v975
      %v977 = vrot.slane %v976, 2
      %v978 = vadd.f32 %v976, %v977
      %v979 = vrot.slane %v978, 1
      %v980 = vadd.f32 %v978, %v979
      %v981 = vperm.slane %v728, 7
      %v982 = vmul.f32 %v981, %v711
      %v983 = vmul.f32 %v981, %v712
      %v984 = vmul.f32 %v982, 1.442695
      %v985 = vpow.pop %v984
      %v986 = vmul.f32 %v983, 1.442695
      %v987 = vpow.pop %v986
      %v988 = vmul.f32 %v985, %v972
      %v989 = vmul.f32 %v987, %v973
      %v990 = vperm.slane %v761, 7
      %991 = vset.pattern.permute.xlu0 7
      %992 = vperm.xlu0 %991, %v757
      %v993 = vpop.permute.xlu0 %992
      %995 = vset.pattern.permute.xlu0 7
      %996 = vperm.xlu0 %995, %v759
      %v997 = vpop.permute.xlu0 %996
      %v999 = vmul.f32 %v990, %v993
      %v1000 = vmul.f32 %v990, %v997
      %v1001 = vsel %vm726, %v999, 0.0
      %v1002 = vsel %vm727, %v1000, 0.0
      %v1003 = vadd.f32 %v988, %v1001
      %v1004 = vadd.f32 %v989, %v1002
      %v1005 = vadd.f32 %v1003, %v1004
      %v1006 = vrot.slane %v1005, 4
      %v1007 = vadd.f32 %v1005, %v1006
      %v1008 = vrot.slane %v1007, 2
      %v1009 = vadd.f32 %v1007, %v1008
      %v1010 = vrot.slane %v1009, 1
      %v1011 = vadd.f32 %v1009, %v1010
      %vm1012 = vcmask 1040384
      %v1013 = vsel %vm1012, %v794, %v825
      %vm1014 = vcmask 1041408
      %v1015 = vsel %vm1014, %v1013, %v856
      %vm1016 = vcmask 1042432
      %v1017 = vsel %vm1016, %v1015, %v887
      %vm1018 = vcmask 1043456
      %v1019 = vsel %vm1018, %v1017, %v918
      %vm1020 = vcmask 1044480
      %v1021 = vsel %vm1020, %v1019, %v949
      %vm1022 = vcmask 1045504
      %v1023 = vsel %vm1022, %v1021, %v980
      %vm1024 = vcmask 1046528
      %v1025 = vsel %vm1024, %v1023, %v1011
      %1026 = vst [vmem:[#allocation4] sm:$0xff] %v1025
      %v1027 = vld [vmem:[#allocation4] sm:$0xff]
      %v1028 = vld [vmem:[#allocation2] sm:$0xff]
      %v1030 = vperm.slane %v713, 0
      %v1032 = vmul.f32 %v1028, %v1030
      %v1033 = vadd.f32 %v1027, %v1032
      %v1034 = vpack.c.bf16 %v1033, %v1033
      %v1035 = vld [vmem:[%s13] sm:$0xf]
      %v1036 = vld [vmem:[%s13 + $0x4] sm:$0xf]
      %v1037 = vld [vmem:[%s13 + $0x8] sm:$0xf]
      %v1038 = vld [vmem:[%s13 + $0xc] sm:$0xf]
      %v1039 = vld [vmem:[%s13 + $0x10] sm:$0xf]
      %v1040 = vld [vmem:[%s13 + $0x14] sm:$0xf]
      %v1041 = vld [vmem:[%s13 + $0x18] sm:$0xf]
      %v1042 = vld [vmem:[%s13 + $0x1c] sm:$0xf]
      %v1043 = vld [vmem:[%s13 + $0x20] sm:$0xf]
      %v1044 = vld [vmem:[%s13 + $0x24] sm:$0xf]
      %v1045 = vld [vmem:[%s13 + $0x28] sm:$0xf]
      %v1046 = vld [vmem:[%s13 + $0x2c] sm:$0xf]
      %v1047 = vld [vmem:[%s13 + $0x30] sm:$0xf]
      %v1048 = vld [vmem:[%s13 + $0x34] sm:$0xf]
      %v1049 = vld [vmem:[%s13 + $0x38] sm:$0xf]
      %v1050 = vld [vmem:[%s13 + $0x3c] sm:$0xf]
      %v1051 = vld [vmem:[%s14] sm:$0x1]
      %v1053 = vperm.slane %v1051, 0
      %v1071 = vunpack.c.l.b16 %v1035
      %v1072 = vunpack.c.l.b16 %v1036
      %v1073 = vunpack.c.l.b16 %v1037
      %v1074 = vunpack.c.l.b16 %v1038
      %v1075 = vunpack.c.l.b16 %v1039
      %v1076 = vunpack.c.l.b16 %v1040
      %v1077 = vunpack.c.l.b16 %v1041
      %v1078 = vunpack.c.l.b16 %v1042
      %v1079 = vunpack.c.l.b16 %v1043
      %v1080 = vunpack.c.l.b16 %v1044
      %v1081 = vunpack.c.l.b16 %v1045
      %v1082 = vunpack.c.l.b16 %v1046
      %v1083 = vunpack.c.l.b16 %v1047
      %v1084 = vunpack.c.l.b16 %v1048
      %v1085 = vunpack.c.l.b16 %v1049
      %v1086 = vunpack.c.l.b16 %v1050
      %v1087 = vpack.c.b16 %v1072, %v1071
      %v1088 = vpack.c.b16 %v1074, %v1073
      %v1089 = vpack.c.b16 %v1076, %v1075
      %v1090 = vpack.c.b16 %v1078, %v1077
      %v1091 = vpack.c.b16 %v1080, %v1079
      %v1092 = vpack.c.b16 %v1082, %v1081
      %v1093 = vpack.c.b16 %v1084, %v1083
      %v1094 = vpack.c.b16 %v1086, %v1085
      %1103 = vmatpush.bf16.msra.mxu0 %v1094
      %1104 = vmatpush.bf16.msra.mxu0 %v1093
      %1105 = vmatpush.bf16.msra.mxu0 %v1092
      %1106 = vmatpush.bf16.msra.mxu0 %v1091
      %1107 = vmatpush.bf16.msra.mxu0 %v1090
      %1108 = vmatpush.bf16.msra.mxu0 %v1089
      %1109 = vmatpush.bf16.msra.mxu0 %v1088
      %1110 = vmatpush.bf16.msra.mxu0 %v1087
      %1111 = vmatmul.bf16.gmra.mxu0 %v1034
      %v1112 = vpop.f32.mrf.mxu0
      %v1113 = vadd.f32 %v1053, %v1112
      %v1114 = vpop.f32.mrf.mxu0
      %1115 = vdwg.mxu0
      %v1116 = vpack.c.bf16 %v1113, %v1113
      %vm1117 = vcmask 257024
      %1118 = vst.msk [vmem:[%s489] sm:$0xf] %vm1117, %v1116
      %p1119 = scmp.lt.s32.totalorder %s26, 1
      %s1120 = scalar_select %p1119, %s26, 1
      %s1121 = smul.addr %s1120, 4
      %s1122 = scalar_lea.vmem %s15, %s1121
      // Predicated region
      $region81: #{sequence_embedding_forward.5} parent=79 // pred_check
        %p1123 = pneg %p364
      $region82: #{sequence_embedding_forward.5} parent=79 // pred_check_branch
        %1125 = sbr.rel (%p1123) target = $region84
      $region83: #{sequence_embedding_forward.5} parent=79 // pred_region
        _
      $region84: #{sequence_embedding_forward.5} parent=79 // pred_fallthru
        _
    $region80: #{sequence_embedding_forward.5} parent=5 // pred_fallthru
      _
    %p1126 = scmp.le.s32.totalorder 2, %s21
    // Predicated region
    $region85: #{sequence_embedding_forward.5} parent=5 // pred_check
      %p1127 = pneg %p1126
    $region86: #{sequence_embedding_forward.5} parent=5 // pred_check_branch
      %1129 = sbr.rel (%p1127) target = $region88
    $region87: #{sequence_embedding_forward.5} parent=5 // pred_region
      %s1130 = ssub.s32 %s21, 2
      // Predicated region
      $region89: #{sequence_embedding_forward.5} parent=87 // pred_check
        %p1131 = pneg %p370
      $region90: #{sequence_embedding_forward.5} parent=87 // pred_check_branch
        %1133 = sbr.rel (%p1131) target = $region92
      $region91: #{sequence_embedding_forward.5} parent=87 // pred_region
        %p1134 = scmp.lt.s32.totalorder %s27, 1
        %s1135 = scalar_select %p1134, %s27, 1
        %s1136 = smul.addr %s1135, 4
        %s1137 = scalar_lea.vmem %s15, %s1136
      $region92: #{sequence_embedding_forward.5} parent=87 // pred_fallthru
        _
    $region88: #{sequence_embedding_forward.5} parent=5 // pred_fallthru
      _
  $region6: #{sequence_embedding_forward.5} parent=0 // loop_footer
    %s25 = sadd.s32 1, %s21
  $region7: #{sequence_embedding_forward.5} parent=0 // loop_footer_branch
    %20 = sbr.rel target = $region3
  $region8: #{sequence_embedding_forward.5} parent=0 // loop_exit
    _

// kernel: sequence_embedding_forward.9
$region0: #{sequence_embedding_forward.9}
  #allocation0 [shape = 'u32[]', space=smem, size = 0x4, offset = 0x4, fixed_abs, tag = 'smem constant byte address 0x4 - core index']
  #allocation1 [shape = 'u32[72,128]{1,0:T(1,128)}', space=vmem, size = 0x9000, scoped, tag = 'internal scratch']
  %s0 = inlined_call_operand.vmem [shape: bf16[2,8,32], index: 0, kind: input, shape index: {}]
  %s1 = inlined_call_operand.vmem [shape: f32[1,32], index: 1, kind: input, shape index: {}]
  %s2 = inlined_call_operand.hbm [shape: f32[1,32], index: 2, kind: input, shape index: {}]
  %s3 = inlined_call_operand.vmem [shape: bf16[32,32], index: 3, kind: input, shape index: {}]
  %s4 = inlined_call_operand.hbm [shape: f32[1,32], index: 4, kind: input, shape index: {}]
  %s5 = inlined_call_operand.hbm [shape: f32[2,32], index: 5, kind: output, shape index: {}]
  %s6 = sld [smem:[#allocation0]]
  $region38: #{sequence_embedding_forward.9} parent=0
    _
  %s8 = ssub.s32 1, %s6
  %s9 = scalar_select 0, %s8, %s6
  $region1: #{sequence_embedding_forward.9} parent=0
    #allocation2 [shape = 'u8[512]{0}', space=vmem, size = 0x400, scoped, tag = 'input window, operand 2, single buffered']
    #allocation3 [shape = 's32[1]{0}', space=sflag, size = 0x4, scoped, tag = 'scoped memory for sequence_embedding_forward.9']
    #allocation4 [shape = 's32[1]{0}', space=sflag, size = 0x4, scoped, tag = 'scoped memory for sequence_embedding_forward.9']
    #allocation5 [shape = 'u8[512]{0}', space=vmem, size = 0x400, scoped, tag = 'input window, operand 4, single buffered']
    #allocation6 [shape = 's32[1]{0}', space=sflag, size = 0x4, scoped, tag = 'scoped memory for sequence_embedding_forward.9']
    #allocation7 [shape = 'u8[1024]{0}', space=vmem, size = 0x400, scoped, tag = 'output window, operand 0, single buffered']
    %10 = vsyncpa [#allocation3], 0
    %11 = vsyncpa [#allocation6], 0
    %12 = vsyncpa [#allocation4], 0
    // Predicated region
    $region2: #{sequence_embedding_forward.9} parent=1 // pred_check
      _
    $region3: #{sequence_embedding_forward.9} parent=1 // pred_check_branch
      %14 = sbr.rel (0) target = $region5
    $region4: #{sequence_embedding_forward.9} parent=1 // pred_region
      _
    $region5: #{sequence_embedding_forward.9} parent=1 // pred_fallthru
      _
    // Predicated region
    $region6: #{sequence_embedding_forward.9} parent=1 // pred_check
      _
    $region7: #{sequence_embedding_forward.9} parent=1 // pred_check_branch
      %16 = sbr.rel (0) target = $region9
    $region8: #{sequence_embedding_forward.9} parent=1 // pred_region
      _
    $region9: #{sequence_embedding_forward.9} parent=1 // pred_fallthru
      _
    // Predicated region
    $region10: #{sequence_embedding_forward.9} parent=1 // pred_check
      _
    $region11: #{sequence_embedding_forward.9} parent=1 // pred_check_branch
      %18 = sbr.rel (0) target = $region13
    $region12: #{sequence_embedding_forward.9} parent=1 // pred_region
      %20 = vsyncadd [#allocation3], 0
      %s22 = sshll.u32 %s2, 4
      %s23 = int_to_ptr.hbm [resolvable:$true] %s22
      %s24 = sshll.u32 [#allocation2], 4
      %s25 = int_to_ptr.vmem [resolvable:$true] %s24
      %27 = dma.hbm_to_vmem [thread:$0]  %s23, 16, %s25, [#allocation3]
    $region13: #{sequence_embedding_forward.9} parent=1 // pred_fallthru
      _
    // Predicated region
    $region14: #{sequence_embedding_forward.9} parent=1 // pred_check
      _
    $region15: #{sequence_embedding_forward.9} parent=1 // pred_check_branch
      %29 = sbr.rel (0) target = $region17
    $region16: #{sequence_embedding_forward.9} parent=1 // pred_region
      _
    $region17: #{sequence_embedding_forward.9} parent=1 // pred_fallthru
      _
    // Predicated region
    $region18: #{sequence_embedding_forward.9} parent=1 // pred_check
      _
    $region19: #{sequence_embedding_forward.9} parent=1 // pred_check_branch
      %31 = sbr.rel (0) target = $region21
    $region20: #{sequence_embedding_forward.9} parent=1 // pred_region
      %33 = vsyncadd [#allocation6], 0
      %s35 = sshll.u32 %s4, 4
      %s36 = int_to_ptr.hbm [resolvable:$true] %s35
      %s37 = sshll.u32 [#allocation5], 4
      %s38 = int_to_ptr.vmem [resolvable:$true] %s37
      %40 = dma.hbm_to_vmem [thread:$0]  %s36, 16, %s38, [#allocation6]
    $region21: #{sequence_embedding_forward.9} parent=1 // pred_fallthru
      _
    // Predicated region
    $region22: #{sequence_embedding_forward.9} parent=1 // pred_check
      _
    $region23: #{sequence_embedding_forward.9} parent=1 // pred_check_branch
      %42 = sbr.rel (0) target = $region25
    $region24: #{sequence_embedding_forward.9} parent=1 // pred_region
      %44 = dma.done [#allocation3], 16
    $region25: #{sequence_embedding_forward.9} parent=1 // pred_fallthru
      _
    // Predicated region
    $region26: #{sequence_embedding_forward.9} parent=1 // pred_check
      _
    $region27: #{sequence_embedding_forward.9} parent=1 // pred_check_branch
      %46 = sbr.rel (0) target = $region29
    $region28: #{sequence_embedding_forward.9} parent=1 // pred_region
      %48 = dma.done [#allocation6], 16
    $region29: #{sequence_embedding_forward.9} parent=1 // pred_fallthru
      _
    %v50 = vld [vmem:[%s0] sm:$0xf]
    %v51 = vld [vmem:[%s0 + $0x4] sm:$0xf]
    %v52 = vunpack.c.l.bf16 %v50
    %v53 = vunpack.c.l.bf16 %v51
    %v54 = vld [vmem:[%s1] sm:$0x1]
    %v55 = vld [vmem:[#allocation2] sm:$0x1]
    %vm56 = vcmask 261120
    %v57 = vsel %vm56, %v52, 0.0
    %58 = vadd.xlane.f32.xlu0 %v57
    %v59 = vpop.xlane.xlu0 %58
    %v60 = vsel %vm56, %v53, 0.0
    %61 = vadd.xlane.f32.xlu0 %v60
    %v62 = vpop.xlane.xlu0 %61
    %v63 = vrcp.pop 32.0
    %v64 = vmul.f32 32.0, %v63
    %v65 = vsub.f32 1.0, %v64
    %v66 = vmul.f32 %v63, %v65
    %v67 = vadd.f32 %v63, %v66
    %vm68 = vweird.f32 %v63
    %v69 = vsel %vm68, %v63, %v67
    %v70 = vmul.f32 %v59, %v69
    %v71 = vmul.f32 %v62, %v69
    %v72 = vsub.f32 %v52, %v70
    %v73 = vsub.f32 %v53, %v71
    %v74 = vmul.f32 %v72, %v72
    %v75 = vmul.f32 %v73, %v73
    %v76 = vsel %vm56, %v74, 0.0
    %77 = vadd.xlane.f32.xlu0 %v76
    %v78 = vpop.xlane.xlu0 %77
    %v79 = vsel %vm56, %v75, 0.0
    %80 = vadd.xlane.f32.xlu0 %v79
    %v81 = vpop.xlane.xlu0 %80
    %v82 = vmul.f32 %v78, %v69
    %v83 = vmul.f32 %v81, %v69
    %v84 = vadd.f32 %v82, 1e-05
    %v85 = vadd.f32 %v83, 1e-05
    %v86 = vrsqrt.pop %v84
    %v87 = vmul.f32 %v86, %v84
    %v88 = vmul.f32 %v87, %v86
    %v89 = vmul.f32 0.5, %v88
    %v90 = vsub.f32 1.5, %v89
    %v91 = vmul.f32 %v86, %v90
    %vm92 = vweird.f32 %v84
    %vm93 = vweird.f32 %v86
    %vm94 = vmor %vm92, %vm93
    %v95 = vsel %vm94, %v86, %v91
    %v96 = vrsqrt.pop %v85
    %v97 = vmul.f32 %v96, %v85
    %v98 = vmul.f32 %v97, %v96
    %v99 = vmul.f32 0.5, %v98
    %v100 = vsub.f32 1.5, %v99
    %v101 = vmul.f32 %v96, %v100
    %vm102 = vweird.f32 %v85
    %vm103 = vweird.f32 %v96
    %vm104 = vmor %vm102, %vm103
    %v105 = vsel %vm104, %v96, %v101
    %v106 = vmul.f32 %v72, %v95
    %v107 = vmul.f32 %v73, %v105
    %v109 = vperm.slane %v54, 0
    %v111 = vmul.f32 %v106, %v109
    %v112 = vmul.f32 %v107, %v109
    %v114 = vperm.slane %v55, 0
    %v116 = vadd.f32 %v111, %v114
    %v117 = vadd.f32 %v112, %v114
    %v118 = vsel %vm56, %v116, 0.0
    %v119 = vrot.slane %v118, 4
    %v120 = vadd.f32 %v118, %v119
    %v121 = vrot.slane %v120, 2
    %v122 = vadd.f32 %v120, %v121
    %v123 = vrot.slane %v122, 1
    %v124 = vadd.f32 %v122, %v123
    %v125 = vsel %vm56, %v117, 0.0
    %v126 = vrot.slane %v125, 4
    %v127 = vadd.f32 %v125, %v126
    %v128 = vrot.slane %v127, 2
    %v129 = vadd.f32 %v127, %v128
    %v130 = vrot.slane %v129, 1
    %v131 = vadd.f32 %v129, %v130
    %v132 = vrcp.pop 8.0
    %v133 = vmul.f32 8.0, %v132
    %v134 = vsub.f32 1.0, %v133
    %v135 = vmul.f32 %v132, %v134
    %v136 = vadd.f32 %v132, %v135
    %vm137 = vweird.f32 %v132
    %v138 = vsel %vm137, %v132, %v136
    %v139 = vmul.f32 %v124, %v138
    %v140 = vmul.f32 %v131, %v138
    %v141 = vpack.c.bf16 %v139, %v139
    %v142 = vpack.c.bf16 %v140, %v140
    %v143 = vld [vmem:[%s3] sm:$0xf]
    %v144 = vld [vmem:[%s3 + $0x4] sm:$0xf]
    %v145 = vld [vmem:[%s3 + $0x8] sm:$0xf]
    %v146 = vld [vmem:[%s3 + $0xc] sm:$0xf]
    %v147 = vld [vmem:[#allocation5] sm:$0x1]
    %v149 = vperm.slane %v147, 0
    %v153 = vunpack.c.l.b16 %v141
    %v154 = vunpack.c.l.b16 %v142
    %vm155 = vcmask 1041409
    %v156 = vsel %vm155, %v154, %v153
    %v157 = vpack.c.b16 %v156, %v156
    %v162 = vunpack.c.l.b16 %v143
    %v163 = vunpack.c.l.b16 %v144
    %v164 = vunpack.c.l.b16 %v145
    %v165 = vunpack.c.l.b16 %v146
    %v166 = vpack.c.b16 %v163, %v162
    %v167 = vpack.c.b16 %v165, %v164
    %v171 = vsel %vm56, %v157, 0
    %173 = vmatpush.bf16.msra.mxu0 0
    %174 = vmatpush.bf16.msra.mxu0 0
    %175 = vmatpush.bf16.msra.mxu0 0
    %176 = vmatpush.bf16.msra.mxu0 0
    %177 = vmatpush.bf16.msra.mxu0 0
    %178 = vmatpush.bf16.msra.mxu0 0
    %179 = vmatpush.bf16.msra.mxu0 %v167
    %180 = vmatpush.bf16.msra.mxu0 %v166
    %181 = vmatmul.bf16.gmra.mxu0 %v171
    %v182 = vpop.f32.mrf.mxu0
    %v183 = vadd.f32 %v149, %v182
    %v184 = vpop.f32.mrf.mxu0
    %185 = vdwg.mxu0
    %vm186 = vcmask 254976
    %187 = vst.msk [vmem:[#allocation7] sm:$0x3] %vm186, %v183
    // Predicated region
    $region30: #{sequence_embedding_forward.9} parent=1 // pred_check
      _
    $region31: #{sequence_embedding_forward.9} parent=1 // pred_check_branch
      %189 = sbr.rel (0) target = $region33
    $region32: #{sequence_embedding_forward.9} parent=1 // pred_region
      %191 = vsyncadd [#allocation4], 0
      %s193 = sshll.u32 [#allocation7], 4
      %s194 = int_to_ptr.vmem [resolvable:$true] %s193
      %s195 = sshll.u32 %s5, 4
      %s196 = int_to_ptr.hbm [resolvable:$true] %s195
      %198 = dma.vmem_to_hbm [thread:$0]  %s194, 32, %s196, [#allocation4]
    $region33: #{sequence_embedding_forward.9} parent=1 // pred_fallthru
      _
    // Predicated region
    $region34: #{sequence_embedding_forward.9} parent=1 // pred_check
      _
    $region35: #{sequence_embedding_forward.9} parent=1 // pred_check_branch
      %200 = sbr.rel (0) target = $region37
    $region36: #{sequence_embedding_forward.9} parent=1 // pred_region
      %202 = dma.done [#allocation4], 32
    $region37: #{sequence_embedding_forward.9} parent=1 // pred_fallthru
      _
    %203 = vsyncpa [#allocation3], 1
    %204 = vsyncpa [#allocation6], 1
    %205 = vsyncpa [#allocation4], 1

</llo_original>
